<compile_context>
chip_gen: v6e
topology: v6e:2x2x1
jax: 0.10.0
libtpu: 0.0.40
codegen_flags: <defaults>
</compile_context>

<pallas_src>
import functools
import math

import jax
import jax.numpy as jnp
from jax.experimental import pallas as pl
from jax.experimental.pallas import tpu as pltpu


# ----------------------------------------------------------------------------
# Pallas kernels
# ----------------------------------------------------------------------------

def _conv3x3_kernel(x_ref, w_ref, s_ref, b_ref, o_ref, *, hw, ww):
    """Fused 3x3 conv (+BN scale/bias +ReLU) for one batch element / one Co tile.

    x_ref: (1, (H+2)*W, Kp)  width-taps folded into channels, H padded, flattened
    w_ref: (3, Kp, co_t)     one (Kp, co_t) weight slab per ky tap
    s_ref, b_ref: (1, co_t)  folded BatchNorm scale / bias (f32)
    o_ref: (1, H*W, co_t)    bf16 output
    """
    acc = jnp.dot(x_ref[0, 0:hw, :], w_ref[0],
                  preferred_element_type=jnp.float32)
    for ky in (1, 2):
        acc = acc + jnp.dot(x_ref[0, ky * ww:ky * ww + hw, :], w_ref[ky],
                            preferred_element_type=jnp.float32)
    y = acc * s_ref[...] + b_ref[...]
    y = jnp.maximum(y, 0.0)
    o_ref[0] = y.astype(o_ref.dtype)


def _mm_affine_kernel(x_ref, w_ref, s_ref, b_ref, o_ref, acc_ref, *, relu):
    """out = act((x @ w) * scale + bias); reduction over the k grid axis."""
    @pl.when(pl.program_id(2) == 0)
    def _():
        acc_ref[...] = jnp.zeros_like(acc_ref)

    acc_ref[...] += jnp.dot(x_ref[...], w_ref[...],
                            preferred_element_type=jnp.float32)

    @pl.when(pl.program_id(2) == pl.num_programs(2) - 1)
    def _():
        y = acc_ref[...] * s_ref[...] + b_ref[...]
        if relu:
            y = jnp.maximum(y, 0.0)
        o_ref[...] = y.astype(o_ref.dtype)


def _maxpool_kernel(x_ref, o_ref):
    """2x2/2 max pool.  x_ref: (1, H2, 2, W2, 2C) ; o_ref: (1, H2, W2, C)."""
    c = o_ref.shape[-1]
    x = x_ref[0]                                  # (H2, 2, W2, 2C)
    m = jnp.maximum(x[:, 0], x[:, 1])             # collapse the row pair
    o_ref[0] = jnp.maximum(m[..., :c], m[..., c:])  # collapse the column pair


def _spatial_attn_kernel(l_ref, g_ref, phi_ref, c_ref, gout_ref):
    """SpatialAttentionBlock (normalize_attn=True) for one batch element.

    l_ref:   (1, HW, C) bf16 local features
    g_ref:   (1, 1, C)  f32 global feature
    phi_ref: (C, 1)     f32 1x1 attention-conv weight
    c_ref:   (1, HW, 1) pre-softmax attention logits
    gout_ref:(1, 1, C)  attention-pooled feature
    """
    x = l_ref[0].astype(jnp.float32)                              # (HW, C)
    s = x + g_ref[0].astype(jnp.float32)                          # (HW, C)
    c = jnp.dot(s, phi_ref[...], preferred_element_type=jnp.float32)  # MXU matvec
    m = jnp.max(c, axis=0, keepdims=True)
    e = jnp.exp(c - m)
    a = e / jnp.sum(e, axis=0, keepdims=True)                     # spatial softmax
    c_ref[...] = c[None]
    gout_ref[...] = jnp.sum(a * x, axis=0, keepdims=True)[None]


# ----------------------------------------------------------------------------
# Pallas wrappers
# ----------------------------------------------------------------------------

def _round_up(x, m):
    return (x + m - 1) // m * m


def conv3x3_bn_relu(x, w_oihw, scale, bias):
    """3x3 conv, pad=1, fused folded-BN + ReLU.  x: (N,H,W,C) bf16 -> (N,H,W,Co) bf16."""
    N, H, W, C = x.shape
    Co = w_oihw.shape[0]
    x = x.astype(jnp.bfloat16)

    # Fold kx taps into channels (3x materialization in bf16, vs 9x f32 im2col).
    xp = jnp.pad(x, ((0, 0), (1, 1), (1, 1), (0, 0)))                   # (N,H+2,W+2,C)
    xk = jnp.concatenate([xp[:, :, kx:kx + W, :] for kx in range(3)], axis=-1)
    xf = xk.reshape(N, (H + 2) * W, 3 * C)                              # free reshape

    # Weight: (Co,Ci,3,3) -> (ky, kx*C+ci, co), lane-ordering matches xf.
    w9 = jnp.transpose(w_oihw, (2, 3, 1, 0)).reshape(3, 3 * C, Co).astype(jnp.bfloat16)

    K = 3 * C
    Kp = _round_up(K, 128)
    if Kp != K:                                   # only the narrow early layers
        xf = jnp.pad(xf, ((0, 0), (0, 0), (0, Kp - K)))
        w9 = jnp.pad(w9, ((0, 0), (0, Kp - K), (0, 0)))

    s = scale.reshape(1, Co).astype(jnp.float32)
    b = bias.reshape(1, Co).astype(jnp.float32)

    co_t = min(Co, 256)
    hw = H * W
    # TODO(synk): for much larger sample_size, also tile the H*W axis to bound VMEM.
    out = pl.pallas_call(
        functools.partial(_conv3x3_kernel, hw=hw, ww=W),
        out_shape=jax.ShapeDtypeStruct((N, hw, Co), jnp.bfloat16),
        grid=(N, Co // co_t),
        in_specs=[
            pl.BlockSpec((1, (H + 2) * W, Kp), lambda n, j: (n, 0, 0)),
            pl.BlockSpec((3, Kp, co_t), lambda n, j: (0, 0, j)),
            pl.BlockSpec((1, co_t), lambda n, j: (0, j)),
            pl.BlockSpec((1, co_t), lambda n, j: (0, j)),
        ],
        out_specs=pl.BlockSpec((1, hw, co_t), lambda n, j: (n, 0, j)),
        compiler_params=pltpu.CompilerParams(
            dimension_semantics=("parallel", "parallel"),
            vmem_limit_bytes=32 * 1024 * 1024),
    )(xf, w9, s, b)
    return out.reshape(N, H, W, Co)


def matmul_affine(x, w, scale, bias, relu, out_dtype=jnp.float32):
    """(M,K) @ (K,N) in bf16 on the MXU, f32 accum, fused scale/bias (+ReLU)."""
    M, K = x.shape
    _, N = w.shape
    tm = min(256, _round_up(M, 8))
    tn = min(256, _round_up(N, 128))
    tk = min(512, _round_up(K, 128))
    Mp, Kp, Np = _round_up(M, tm), _round_up(K, tk), _round_up(N, tn)

    xb = x.astype(jnp.bfloat16)
    wb = w.astype(jnp.bfloat16)
    if (Mp, Kp) != (M, K):
        xb = jnp.pad(xb, ((0, Mp - M), (0, Kp - K)))
    if (Kp, Np) != (K, N):
        wb = jnp.pad(wb, ((0, Kp - K), (0, Np - N)))
    s = scale.reshape(1, N).astype(jnp.float32)
    b = bias.reshape(1, N).astype(jnp.float32)
    if Np != N:
        s = jnp.pad(s, ((0, 0), (0, Np - N)))
        b = jnp.pad(b, ((0, 0), (0, Np - N)))

    out = pl.pallas_call(
        functools.partial(_mm_affine_kernel, relu=relu),
        out_shape=jax.ShapeDtypeStruct((Mp, Np), out_dtype),
        grid_spec=pltpu.PrefetchScalarGridSpec(
            num_scalar_prefetch=0,
            grid=(Mp // tm, Np // tn, Kp // tk),
            in_specs=[
                pl.BlockSpec((tm, tk), lambda i, j, k: (i, k)),
                pl.BlockSpec((tk, tn), lambda i, j, k: (k, j)),
                pl.BlockSpec((1, tn), lambda i, j, k: (0, j)),
                pl.BlockSpec((1, tn), lambda i, j, k: (0, j)),
            ],
            out_specs=pl.BlockSpec((tm, tn), lambda i, j, k: (i, j)),
            scratch_shapes=[pltpu.VMEM((tm, tn), jnp.float32)],
        ),
        compiler_params=pltpu.CompilerParams(
            dimension_semantics=("parallel", "parallel", "arbitrary")),
    )(xb, wb, s, b)
    if (Mp, Np) != (M, N):
        out = out[:M, :N]
    return out


def maxpool2x2(x):
    """2x2 / stride-2 max pool, NHWC (H, W even, C multiple of 128)."""
    N, H, W, C = x.shape
    H2, W2 = H // 2, W // 2
    xr = x.reshape(N, H2, 2, W2, 2 * C)           # free, layout-compatible reshape
    out = pl.pallas_call(
        _maxpool_kernel,
        out_shape=jax.ShapeDtypeStruct((N, H2, W2, C), x.dtype),
        grid=(N,),
        in_specs=[pl.BlockSpec((1, H2, 2, W2, 2 * C), lambda n: (n, 0, 0, 0, 0))],
        out_specs=pl.BlockSpec((1, H2, W2, C), lambda n: (n, 0, 0, 0)),
        compiler_params=pltpu.CompilerParams(dimension_semantics=("parallel",)),
    )(xr)
    return out


def spatial_attention(l_nhwc, g_nc, phi_oihw):
    """SpatialAttentionBlock (normalize_attn=True). Returns (c NCHW, g (N,C))."""
    N, H, W, C = l_nhwc.shape
    HW = H * W
    l = l_nhwc.reshape(N, HW, C).astype(jnp.bfloat16)
    g = g_nc.reshape(N, 1, C).astype(jnp.float32)
    phi = phi_oihw.reshape(C, 1).astype(jnp.float32)
    # TODO(synk): for resolutions where HW*C no longer fits VMEM (v7x 64 MiB),
    #             tile HW with an online softmax instead of a whole-image block.
    c, gout = pl.pallas_call(
        _spatial_attn_kernel,
        out_shape=(jax.ShapeDtypeStruct((N, HW, 1), jnp.float32),
                   jax.ShapeDtypeStruct((N, 1, C), jnp.float32)),
        grid=(N,),
        in_specs=[pl.BlockSpec((1, HW, C), lambda n: (n, 0, 0)),
                  pl.BlockSpec((1, 1, C), lambda n: (n, 0, 0)),
                  pl.BlockSpec((C, 1), lambda n: (0, 0))],
        out_specs=(pl.BlockSpec((1, HW, 1), lambda n: (n, 0, 0)),
                   pl.BlockSpec((1, 1, C), lambda n: (n, 0, 0))),
        compiler_params=pltpu.CompilerParams(dimension_semantics=("parallel",)),
    )(l, g, phi)
    c_map = jnp.transpose(c.reshape(N, H, W, 1), (0, 3, 1, 2))   # (N, 1, H, W)
    return c_map, gout.reshape(N, C)


# ----------------------------------------------------------------------------
# Conv helpers built on the generic matmul kernel
# ----------------------------------------------------------------------------

def conv1x1(x, w_oihw):
    N, H, W, C = x.shape
    co = w_oihw.shape[0]
    wmat = jnp.transpose(w_oihw[:, :, 0, 0], (1, 0))
    y = matmul_affine(x.reshape(N * H * W, C), wmat,
                      jnp.ones((co,), jnp.float32), jnp.zeros((co,), jnp.float32),
                      relu=False, out_dtype=jnp.bfloat16)
    return y.reshape(N, H, W, co)


def dense_conv(x, w_oihw, bias):
    # `dense` conv: kernel_size == spatial size -> 1x1 output, i.e. a matmul.
    N, H, W, C = x.shape
    co = w_oihw.shape[0]
    wmat = jnp.transpose(w_oihw, (2, 3, 1, 0)).reshape(H * W * C, co)
    return matmul_affine(x.reshape(N, H * W * C), wmat,
                         jnp.ones((co,), jnp.float32), bias, relu=False,
                         out_dtype=jnp.float32)


# ----------------------------------------------------------------------------
# Parameters (deterministic synthetic init, PyTorch weight layouts)
# ----------------------------------------------------------------------------

def init_params(key, sample_size, num_classes):
    counter = [0]

    def nk():
        counter[0] += 1
        return jax.random.fold_in(key, counter[0])

    def conv_block(cin, cout):
        w = jax.random.normal(nk(), (cout, cin, 3, 3), jnp.float32) * math.sqrt(2.0 / (cin * 9))
        gamma = 1.0 + 0.1 * jax.random.normal(nk(), (cout,), jnp.float32)
        beta = 0.1 * jax.random.normal(nk(), (cout,), jnp.float32)
        rmean = 0.1 * jax.random.normal(nk(), (cout,), jnp.float32)
        rvar = 1.0 + 0.1 * jnp.abs(jax.random.normal(nk(), (cout,), jnp.float32))
        eps = 1e-5
        scale = gamma / jnp.sqrt(rvar + eps)       # eval-mode BatchNorm folded in
        bias = beta - rmean * scale
        return (w, scale, bias)

    def layer(cin, cout, blocks):
        out = []
        for _ in range(blocks):
            out.append(conv_block(cin, cout))
            cin = cout
        return out

    k = sample_size // 32
    p = {
        'conv1': layer(3, 64, 2),
        'conv2': layer(64, 128, 2),
        'conv3': layer(128, 256, 3),
        'conv4': layer(256, 512, 3),
        'conv5': layer(512, 512, 3),
        'conv6': layer(512, 512, 2),
        'dense_w': jax.random.normal(nk(), (512, 512, k, k), jnp.float32) * math.sqrt(1.0 / (512 * k * k)),
        'dense_b': 0.1 * jax.random.normal(nk(), (512,), jnp.float32),
        'proj_w': jax.random.normal(nk(), (512, 256, 1, 1), jnp.float32) * math.sqrt(1.0 / 256),
        'phi1': jax.random.normal(nk(), (1, 512, 1, 1), jnp.float32) * math.sqrt(1.0 / 512),
        'phi2': jax.random.normal(nk(), (1, 512, 1, 1), jnp.float32) * math.sqrt(1.0 / 512),
        'phi3': jax.random.normal(nk(), (1, 512, 1, 1), jnp.float32) * math.sqrt(1.0 / 512),
        'cls_w': jax.random.normal(nk(), (num_classes, 512 * 3), jnp.float32) * math.sqrt(1.0 / (512 * 3)),
        'cls_b': 0.1 * jax.random.normal(nk(), (num_classes,), jnp.float32),
    }
    return p


# ----------------------------------------------------------------------------
# Forward pass (matches VGGAttention.forward with attention=True, normalize_attn=True)
# ----------------------------------------------------------------------------

def vgg_attention_forward(x_nchw, params):
    x = jnp.transpose(x_nchw, (0, 2, 3, 1)).astype(jnp.bfloat16)   # NCHW -> NHWC

    def run(x, blocks, pool=False):
        for (w, scale, bias) in blocks:
            x = conv3x3_bn_relu(x, w, scale, bias)
            if pool:
                x = maxpool2x2(x)
        return x

    x = run(x, params['conv1'])
    x = run(x, params['conv2'])
    l1 = run(x, params['conv3'])
    x = maxpool2x2(l1)
    l2 = run(x, params['conv4'])
    x = maxpool2x2(l2)
    l3 = run(x, params['conv5'])
    x = maxpool2x2(l3)
    x = run(x, params['conv6'], pool=True)
    g = dense_conv(x, params['dense_w'], params['dense_b'])        # (N, 512) f32

    proj_l1 = conv1x1(l1, params['proj_w'])                        # (N, H, W, 512)
    c1, g1 = spatial_attention(proj_l1, g, params['phi1'])
    c2, g2 = spatial_attention(l2, g, params['phi2'])
    c3, g3 = spatial_attention(l3, g, params['phi3'])
    gcat = jnp.concatenate([g1, g2, g3], axis=1)                   # (N, 1536)

    nc = params['cls_b'].shape[0]
    logits = matmul_affine(gcat, params['cls_w'].T,
                           jnp.ones((nc,), jnp.float32), params['cls_b'],
                           relu=False, out_dtype=jnp.float32)
    return [logits, c1, c2, c3]


# ----------------------------------------------------------------------------

if __name__ == "__main__":
    sample_size = 32        # smallest spatial size compatible with the 5 downsamplings
    num_classes = 10
    batch = 2

    key = jax.random.PRNGKey(0)
    params = init_params(key, sample_size, num_classes)
    x = jax.random.normal(key, (batch, 3, sample_size, sample_size), jnp.float32)

    out = vgg_attention_forward(x, params)
    out = jax.block_until_ready(out)
    logits, c1, c2, c3 = out

    assert logits.shape == (batch, num_classes)
    assert c1.shape == (batch, 1, sample_size, sample_size)
    assert c2.shape == (batch, 1, sample_size // 2, sample_size // 2)
    assert c3.shape == (batch, 1, sample_size // 4, sample_size // 4)
    assert bool(jnp.all(jnp.isfinite(logits)))
    print("KERNEL_OK")
</pallas_src>

<mosaic_0001>
module attributes {stable_mosaic.version = 11 : i64} {
  func.func @_conv3x3_kernel(%arg0: i32, %arg1: i32, %arg2: memref<1x1088x128xbf16, #tpu.memory_space<vmem>>, %arg3: memref<3x128x64xbf16, #tpu.memory_space<vmem>>, %arg4: memref<1x64xf32, #tpu.memory_space<vmem>>, %arg5: memref<1x64xf32, #tpu.memory_space<vmem>>, %arg6: memref<1x1024x64xbf16, #tpu.memory_space<vmem>>) attributes {dimension_semantics = [#tpu.dimension_semantics<parallel>, #tpu.dimension_semantics<parallel>], iteration_bounds = array<i64: 2, 1>, scalar_prefetch = 0 : i64, scratch_operands = 0 : i64, tpu.core_type = #tpu.core_type<tc>, window_params = [{transform_indices = @transform_0, window_bounds = array<i64: 1, 1088, 128>}, {transform_indices = @transform_1, window_bounds = array<i64: 3, 128, 64>}, {transform_indices = @transform_2, window_bounds = array<i64: 1, 64>}, {transform_indices = @transform_3, window_bounds = array<i64: 1, 64>}, {transform_indices = @transform_4, window_bounds = array<i64: 1, 1024, 64>}]} {
    %c0 = arith.constant 0 : index
    %c0_0 = arith.constant 0 : index
    %c0_1 = arith.constant 0 : index
    %0 = vector.load %arg2[%c0, %c0_0, %c0_1] : memref<1x1088x128xbf16, #tpu.memory_space<vmem>>, vector<1x1024x128xbf16>
    %1 = vector.shape_cast %0 : vector<1x1024x128xbf16> to vector<1024x128xbf16>
    %c0_2 = arith.constant 0 : index
    %c0_3 = arith.constant 0 : index
    %c0_4 = arith.constant 0 : index
    %2 = vector.load %arg3[%c0_2, %c0_3, %c0_4] : memref<3x128x64xbf16, #tpu.memory_space<vmem>>, vector<1x128x64xbf16>
    %3 = vector.shape_cast %2 : vector<1x128x64xbf16> to vector<128x64xbf16>
    %cst = arith.constant dense<0.000000e+00> : vector<1024x64xf32>
    %4 = tpu.matmul %1, %3, %cst {dimension_numbers = #tpu.dot_dimension_numbers<[1], [0], [0], [1], [0, 0, 1, 1], [], []>} : vector<1024x128xbf16>, vector<128x64xbf16>, vector<1024x64xf32> -> vector<1024x64xf32>
    %c0_5 = arith.constant 0 : index
    %c32 = arith.constant 32 : index
    %c0_6 = arith.constant 0 : index
    %5 = vector.load %arg2[%c0_5, %c32, %c0_6] : memref<1x1088x128xbf16, #tpu.memory_space<vmem>>, vector<1x1024x128xbf16>
    %6 = vector.shape_cast %5 : vector<1x1024x128xbf16> to vector<1024x128xbf16>
    %c1 = arith.constant 1 : index
    %c0_7 = arith.constant 0 : index
    %c0_8 = arith.constant 0 : index
    %7 = vector.load %arg3[%c1, %c0_7, %c0_8] : memref<3x128x64xbf16, #tpu.memory_space<vmem>>, vector<1x128x64xbf16>
    %8 = vector.shape_cast %7 : vector<1x128x64xbf16> to vector<128x64xbf16>
    %cst_9 = arith.constant dense<0.000000e+00> : vector<1024x64xf32>
    %9 = tpu.matmul %6, %8, %cst_9 {dimension_numbers = #tpu.dot_dimension_numbers<[1], [0], [0], [1], [0, 0, 1, 1], [], []>} : vector<1024x128xbf16>, vector<128x64xbf16>, vector<1024x64xf32> -> vector<1024x64xf32>
    %10 = arith.addf %4, %9 : vector<1024x64xf32>
    %c0_10 = arith.constant 0 : index
    %c64 = arith.constant 64 : index
    %c0_11 = arith.constant 0 : index
    %11 = vector.load %arg2[%c0_10, %c64, %c0_11] : memref<1x1088x128xbf16, #tpu.memory_space<vmem>>, vector<1x1024x128xbf16>
    %12 = vector.shape_cast %11 : vector<1x1024x128xbf16> to vector<1024x128xbf16>
    %c2 = arith.constant 2 : index
    %c0_12 = arith.constant 0 : index
    %c0_13 = arith.constant 0 : index
    %13 = vector.load %arg3[%c2, %c0_12, %c0_13] : memref<3x128x64xbf16, #tpu.memory_space<vmem>>, vector<1x128x64xbf16>
    %14 = vector.shape_cast %13 : vector<1x128x64xbf16> to vector<128x64xbf16>
    %cst_14 = arith.constant dense<0.000000e+00> : vector<1024x64xf32>
    %15 = tpu.matmul %12, %14, %cst_14 {dimension_numbers = #tpu.dot_dimension_numbers<[1], [0], [0], [1], [0, 0, 1, 1], [], []>} : vector<1024x128xbf16>, vector<128x64xbf16>, vector<1024x64xf32> -> vector<1024x64xf32>
    %16 = arith.addf %10, %15 : vector<1024x64xf32>
    %c0_15 = arith.constant 0 : index
    %c0_16 = arith.constant 0 : index
    %17 = vector.load %arg4[%c0_15, %c0_16] : memref<1x64xf32, #tpu.memory_space<vmem>>, vector<1x64xf32>
    %18 = vector.broadcast %17 : vector<1x64xf32> to vector<1024x64xf32>
    %19 = arith.mulf %16, %18 : vector<1024x64xf32>
    %c0_17 = arith.constant 0 : index
    %c0_18 = arith.constant 0 : index
    %20 = vector.load %arg5[%c0_17, %c0_18] : memref<1x64xf32, #tpu.memory_space<vmem>>, vector<1x64xf32>
    %21 = vector.broadcast %20 : vector<1x64xf32> to vector<1024x64xf32>
    %22 = arith.addf %19, %21 : vector<1024x64xf32>
    %cst_19 = arith.constant 0.000000e+00 : f32
    %23 = vector.broadcast %cst_19 : f32 to vector<1024x64xf32>
    %24 = arith.maximumf %22, %23 : vector<1024x64xf32>
    %25 = arith.truncf %24 : vector<1024x64xf32> to vector<1024x64xbf16>
    %c0_20 = arith.constant 0 : index
    %c0_21 = arith.constant 0 : index
    %c0_22 = arith.constant 0 : index
    %26 = vector.load %arg6[%c0_20, %c0_21, %c0_22] : memref<1x1024x64xbf16, #tpu.memory_space<vmem>>, vector<1x1024x64xbf16>
    %27 = vector.shape_cast %26 : vector<1x1024x64xbf16> to vector<1024x64xbf16>
    %28 = vector.shape_cast %25 : vector<1024x64xbf16> to vector<1x1024x64xbf16>
    tpu.vector_store %arg6[%c0_20, %c0_21, %c0_22], %28 {strides = array<i32>} : memref<1x1024x64xbf16, #tpu.memory_space<vmem>>, vector<1x1024x64xbf16>,
    return
  }
  func.func @transform_0(%arg0: i32, %arg1: i32) -> (i32, i32, i32) {
    %c0_i32 = arith.constant 0 : i32
    %c0_i32_0 = arith.constant 0 : i32
    %c0_i32_1 = arith.constant 0 : i32
    return %arg0, %c0_i32, %c0_i32_0 : i32, i32, i32
  }
  func.func @transform_1(%arg0: i32, %arg1: i32) -> (i32, i32, i32) {
    %c0_i32 = arith.constant 0 : i32
    %c0_i32_0 = arith.constant 0 : i32
    %c0_i32_1 = arith.constant 0 : i32
    return %c0_i32, %c0_i32_0, %arg1 : i32, i32, i32
  }
  func.func @transform_2(%arg0: i32, %arg1: i32) -> (i32, i32) {
    %c0_i32 = arith.constant 0 : i32
    %c0_i32_0 = arith.constant 0 : i32
    return %c0_i32, %arg1 : i32, i32
  }
  func.func @transform_3(%arg0: i32, %arg1: i32) -> (i32, i32) {
    %c0_i32 = arith.constant 0 : i32
    %c0_i32_0 = arith.constant 0 : i32
    return %c0_i32, %arg1 : i32, i32
  }
  func.func @transform_4(%arg0: i32, %arg1: i32) -> (i32, i32, i32) {
    %c0_i32 = arith.constant 0 : i32
    %c0_i32_0 = arith.constant 0 : i32
    return %arg0, %c0_i32, %arg1 : i32, i32, i32
  }
}

</mosaic_0001>

<llo_original>
// kernel: tpu_custom_call.1
$region0: #{tpu_custom_call.1}
  #allocation0 [shape = 'u32[]', space=smem, size = 0x4, offset = 0x4, fixed_abs, tag = 'smem constant byte address 0x4 - core index']
  #allocation1 [shape = 'u32[144,128]{1,0:T(1,128)}', space=vmem, size = 0x12000, scoped, tag = 'internal scratch']
  %s0 = inlined_call_operand.hbm [shape: bf16[2,1088,128], index: 0, kind: input, shape index: {}]
  %s1 = inlined_call_operand.vmem [shape: bf16[3,128,64], index: 1, kind: input, shape index: {}]
  %s2 = inlined_call_operand.vmem [shape: f32[1,64], index: 2, kind: input, shape index: {}]
  %s3 = inlined_call_operand.vmem [shape: f32[1,64], index: 3, kind: input, shape index: {}]
  %s4 = inlined_call_operand.vmem [shape: bf16[2,1024,64], index: 4, kind: output, shape index: {}]
  %s5 = sld [smem:[#allocation0]]
  $region53: #{tpu_custom_call.1} parent=0
    _
  %s7 = ssub.s32 1, %s5
  %s8 = scalar_select 0, %s7, %s5
  $region1: #{tpu_custom_call.1} parent=0
    #allocation2 [shape = 'u8[557056]{0}', space=vmem, size = 0x88000, scoped, tag = 'input window, operand 0']
    #allocation3 [shape = 's32[2]{0}', space=sflag, size = 0x8, scoped, tag = 'scoped memory for tpu_custom_call.1']
    %9 = vsyncpa [#allocation3], 0
    %s10 = scalar_lea.sflag [#allocation3], 1
    %11 = vsyncpa %s10, 0
    loop: start=0, step=1, limit=4
    $region2: #{tpu_custom_call.1} parent=1 // loop_pre_header
      _
    $region3: #{tpu_custom_call.1} parent=1 // loop_header
      %s13 = sphi 0, %s17
      %p14 = scmp.ge.s32.totalorder %s13, 4
      %s20 = sphi 0, %s32
      %s21 = sphi 0, %s28
      %s22 = sphi 0, %s20
      %s23 = sphi 0, %s21
      %s24 = sphi 0, %s22
      %s25 = sphi 0, %s23
      %s35 = sphi 0, %s37
      %s38 = sphi 0, %s35
      %s39 = sphi 0, %s38
      %s55 = sphi 0, %s39
      %s61 = sphi 0, %s63
      %s64 = sphi 0, %s61
      %s65 = sphi 0, %s64
      %s81 = sphi 0, %s65
      %s87 = sphi 0, %s89
      %s90 = sphi 0, %s87
      %s91 = sphi 0, %s90
      %s107 = sphi 0, %s91
      %s113 = sphi 0, %s115
      %s116 = sphi 0, %s113
      %s117 = sphi 0, %s116
      %s133 = sphi 0, %s117
      %s141 = sphi 0, %s143
      %s144 = sphi 0, %s141
      %s145 = sphi 0, %s144
      %s161 = sphi 0, %s145
    $region4: #{tpu_custom_call.1} parent=1 // loop_header_branch
      %16 = sbr.rel (%p14) target = $region8
    $region5: #{tpu_custom_call.1} parent=1 // loop_body
      %s18 = ssub.s32 %s13, 1
      %s19 = ssub.s32 %s13, 2
      %s26 = sadd.s32 1, %s21
      %p27 = scmp.ge.s32.totalorder %s26, 1
      %s28 = scalar_select %p27, 0, %s26
      %s29 = sadd.s32 1, %s20
      %s30 = scalar_select %p27, %s29, %s20
      %p31 = scmp.ge.s32.totalorder %s30, 2
      %s32 = scalar_select %p31, 0, %s30
      %s33 = ssub.s32 %s20, %s32
      %p34 = scmp.eq.s32.totalorder %s33, 0
      %s36 = sadd.s32 %s35, 1
      %s37 = scalar_select %p34, %s35, %s36
      %p40 = pneg %p34
      %p41 = scmp.eq.s32.totalorder %s13, 1
      %p42 = por %p40, %p41
      %p43 = scmp.ne.s32.totalorder %s35, %s38
      %p44 = scmp.eq.s32.totalorder %s13, 0
      %p45 = por %p43, %p44
      %p46 = scmp.ne.s32.totalorder %s35, %s38
      %p47 = scmp.eq.s32.totalorder %s18, 1
      %p48 = por %p46, %p47
      %p49 = scmp.ne.s32.totalorder %s38, %s39
      %p50 = scmp.eq.s32.totalorder %s18, 0
      %p51 = por %p49, %p50
      %p52 = scmp.ne.s32.totalorder %s38, %s39
      %p53 = scmp.eq.s32.totalorder %s19, 1
      %p54 = por %p52, %p53
      %p56 = scmp.ne.s32.totalorder %s39, %s55
      %p57 = scmp.eq.s32.totalorder %s19, 0
      %p58 = por %p56, %p57
      %s59 = ssub.s32 %s21, %s28
      %p60 = scmp.eq.s32.totalorder %s59, 0
      %s62 = sadd.s32 %s61, 1
      %s63 = scalar_select %p60, %s61, %s62
      %p66 = pneg %p60
      %p67 = scmp.eq.s32.totalorder %s13, 1
      %p68 = por %p66, %p67
      %p69 = scmp.ne.s32.totalorder %s61, %s64
      %p70 = scmp.eq.s32.totalorder %s13, 0
      %p71 = por %p69, %p70
      %p72 = scmp.ne.s32.totalorder %s61, %s64
      %p73 = scmp.eq.s32.totalorder %s18, 1
      %p74 = por %p72, %p73
      %p75 = scmp.ne.s32.totalorder %s64, %s65
      %p76 = scmp.eq.s32.totalorder %s18, 0
      %p77 = por %p75, %p76
      %p78 = scmp.ne.s32.totalorder %s64, %s65
      %p79 = scmp.eq.s32.totalorder %s19, 1
      %p80 = por %p78, %p79
      %p82 = scmp.ne.s32.totalorder %s65, %s81
      %p83 = scmp.eq.s32.totalorder %s19, 0
      %p84 = por %p82, %p83
      %s85 = ssub.s32 %s21, %s28
      %p86 = scmp.eq.s32.totalorder %s85, 0
      %s88 = sadd.s32 %s87, 1
      %s89 = scalar_select %p86, %s87, %s88
      %p92 = pneg %p86
      %p93 = scmp.eq.s32.totalorder %s13, 1
      %p94 = por %p92, %p93
      %p95 = scmp.ne.s32.totalorder %s87, %s90
      %p96 = scmp.eq.s32.totalorder %s13, 0
      %p97 = por %p95, %p96
      %p98 = scmp.ne.s32.totalorder %s87, %s90
      %p99 = scmp.eq.s32.totalorder %s18, 1
      %p100 = por %p98, %p99
      %p101 = scmp.ne.s32.totalorder %s90, %s91
      %p102 = scmp.eq.s32.totalorder %s18, 0
      %p103 = por %p101, %p102
      %p104 = scmp.ne.s32.totalorder %s90, %s91
      %p105 = scmp.eq.s32.totalorder %s19, 1
      %p106 = por %p104, %p105
      %p108 = scmp.ne.s32.totalorder %s91, %s107
      %p109 = scmp.eq.s32.totalorder %s19, 0
      %p110 = por %p108, %p109
      %s111 = ssub.s32 %s21, %s28
      %p112 = scmp.eq.s32.totalorder %s111, 0
      %s114 = sadd.s32 %s113, 1
      %s115 = scalar_select %p112, %s113, %s114
      %p118 = pneg %p112
      %p119 = scmp.eq.s32.totalorder %s13, 1
      %p120 = por %p118, %p119
      %p121 = scmp.ne.s32.totalorder %s113, %s116
      %p122 = scmp.eq.s32.totalorder %s13, 0
      %p123 = por %p121, %p122
      %p124 = scmp.ne.s32.totalorder %s113, %s116
      %p125 = scmp.eq.s32.totalorder %s18, 1
      %p126 = por %p124, %p125
      %p127 = scmp.ne.s32.totalorder %s116, %s117
      %p128 = scmp.eq.s32.totalorder %s18, 0
      %p129 = por %p127, %p128
      %p130 = scmp.ne.s32.totalorder %s116, %s117
      %p131 = scmp.eq.s32.totalorder %s19, 1
      %p132 = por %p130, %p131
      %p134 = scmp.ne.s32.totalorder %s117, %s133
      %p135 = scmp.eq.s32.totalorder %s19, 0
      %p136 = por %p134, %p135
      %s137 = ssub.s32 %s20, %s32
      %s138 = ssub.s32 %s21, %s28
      %s139 = sor.u32 %s137, %s138
      %p140 = scmp.eq.s32.totalorder %s139, 0
      %s142 = sadd.s32 %s141, 1
      %s143 = scalar_select %p140, %s141, %s142
      %p146 = pneg %p140
      %p147 = scmp.eq.s32.totalorder %s13, 1
      %p148 = por %p146, %p147
      %p149 = scmp.ne.s32.totalorder %s141, %s144
      %p150 = scmp.eq.s32.totalorder %s13, 0
      %p151 = por %p149, %p150
      %p152 = scmp.ne.s32.totalorder %s141, %s144
      %p153 = scmp.eq.s32.totalorder %s18, 1
      %p154 = por %p152, %p153
      %p155 = scmp.ne.s32.totalorder %s144, %s145
      %p156 = scmp.eq.s32.totalorder %s18, 0
      %p157 = por %p155, %p156
      %p158 = scmp.ne.s32.totalorder %s144, %s145
      %p159 = scmp.eq.s32.totalorder %s19, 1
      %p160 = por %p158, %p159
      %p162 = scmp.ne.s32.totalorder %s145, %s161
      %p163 = scmp.eq.s32.totalorder %s19, 0
      %p164 = por %p162, %p163
      %p165 = scmp.le.s32.totalorder 1, %s13
      %p166 = scmp.lt.s32.totalorder %s13, 3
      %p167 = pnand %p165, %p166
      %p168 = pneg %p167
      // Predicated region
      $region9: #{tpu_custom_call.1} parent=5 // pred_check
        _
      $region10: #{tpu_custom_call.1} parent=5 // pred_check_branch
        %170 = sbr.rel (%p167) target = $region12
      $region11: #{tpu_custom_call.1} parent=5 // pred_region
        %s171 = ssub.s32 %s13, 1
        // Predicated region
        $region13: #{tpu_custom_call.1} parent=11 // pred_check
          %p172 = pneg %p77
        $region14: #{tpu_custom_call.1} parent=11 // pred_check_branch
          %174 = sbr.rel (%p172) target = $region16
        $region15: #{tpu_custom_call.1} parent=11 // pred_region
          %p175 = scmp.lt.s32.totalorder %s23, 0
          %s176 = scalar_select %p175, %s23, 0
          %s177 = smul.addr %s176, 4
          %s178 = scalar_lea.vmem %s1, %s177
        $region16: #{tpu_custom_call.1} parent=11 // pred_fallthru
          _
        // Predicated region
        $region17: #{tpu_custom_call.1} parent=11 // pred_check
          %p179 = pneg %p103
        $region18: #{tpu_custom_call.1} parent=11 // pred_check_branch
          %181 = sbr.rel (%p179) target = $region20
        $region19: #{tpu_custom_call.1} parent=11 // pred_region
          %p182 = scmp.lt.s32.totalorder %s23, 0
          %s183 = scalar_select %p182, %s23, 0
          %s184 = scalar_lea.vmem %s2, %s183
        $region20: #{tpu_custom_call.1} parent=11 // pred_fallthru
          _
        // Predicated region
        $region21: #{tpu_custom_call.1} parent=11 // pred_check
          %p185 = pneg %p129
        $region22: #{tpu_custom_call.1} parent=11 // pred_check_branch
          %187 = sbr.rel (%p185) target = $region24
        $region23: #{tpu_custom_call.1} parent=11 // pred_region
          %p188 = scmp.lt.s32.totalorder %s23, 0
          %s189 = scalar_select %p188, %s23, 0
          %s190 = scalar_lea.vmem %s3, %s189
        $region24: #{tpu_custom_call.1} parent=11 // pred_fallthru
          _
      $region12: #{tpu_custom_call.1} parent=5 // pred_fallthru
        _
      %p191 = scmp.lt.s32.totalorder %s13, 2
      // Predicated region
      $region25: #{tpu_custom_call.1} parent=5 // pred_check
        %p192 = pneg %p191
      $region26: #{tpu_custom_call.1} parent=5 // pred_check_branch
        %194 = sbr.rel (%p192) target = $region28
      $region27: #{tpu_custom_call.1} parent=5 // pred_region
        // Predicated region
        $region29: #{tpu_custom_call.1} parent=27 // pred_check
          %p195 = pneg %p45
        $region30: #{tpu_custom_call.1} parent=27 // pred_check_branch
          %197 = sbr.rel (%p195) target = $region32
        $region31: #{tpu_custom_call.1} parent=27 // pred_region
          %s198 = sand.u32 %s35, 1
          %s199 = scalar_lea.sflag [#allocation3], %s198
          %s200 = sand.u32 %s35, 1
          %s201 = smul.addr %s200, 544
          %s202 = scalar_lea.vmem [#allocation2], %s201
          %s204 = ssub.s32 8704, 8704
          %205 = vsyncadd %s199, %s204
          %s206 = smul.addr %s20, 136
          %s207 = smul.addr %s206, 64
          %s208 = scalar_lea.hbm %s0, %s207
          %s209 = sshll.u32 %s202, 4
          %s210 = int_to_ptr.vmem [resolvable:$true] %s209
          %215 = dma.hbm_to_vmem [thread:$0]  %s208, 8704, %s210, %s199, 64, 64, 4
        $region32: #{tpu_custom_call.1} parent=27 // pred_fallthru
          _
      $region28: #{tpu_custom_call.1} parent=5 // pred_fallthru
        _
      %p216 = scmp.le.s32.totalorder 1, %s13
      %p217 = scmp.lt.s32.totalorder %s13, 3
      %p218 = pnand %p216, %p217
      %p219 = pneg %p218
      // Predicated region
      $region33: #{tpu_custom_call.1} parent=5 // pred_check
        _
      $region34: #{tpu_custom_call.1} parent=5 // pred_check_branch
        %221 = sbr.rel (%p218) target = $region36
      $region35: #{tpu_custom_call.1} parent=5 // pred_region
        %s222 = ssub.s32 %s13, 1
        %s223 = sand.u32 %s38, 1
        %s224 = scalar_lea.sflag [#allocation3], %s223
        %s225 = sand.u32 %s38, 1
        %s226 = smul.addr %s225, 544
        %s227 = scalar_lea.vmem [#allocation2], %s226
        // Predicated region
        $region37: #{tpu_custom_call.1} parent=35 // pred_check
          %p228 = pneg %p51
        $region38: #{tpu_custom_call.1} parent=35 // pred_check_branch
          %230 = sbr.rel (%p228) target = $region40
        $region39: #{tpu_custom_call.1} parent=35 // pred_region
          %231 = dma.done %s224, 8704
        $region40: #{tpu_custom_call.1} parent=35 // pred_fallthru
          _
        %s232 = sand.u32 %s38, 1
        %s233 = scalar_lea.sflag [#allocation3], %s232
        %s234 = sand.u32 %s38, 1
        %s235 = smul.addr %s234, 544
        %s236 = scalar_lea.vmem [#allocation2], %s235
        %p237 = pneg %p51
        %p238 = pneg %p48
        %p239 = scmp.lt.s32.totalorder %s23, 0
        %s240 = scalar_select %p239, %s23, 0
        %s241 = smul.addr %s240, 4
        %s242 = scalar_lea.vmem %s1, %s241
        %p243 = pneg %p77
        %p244 = pneg %p74
        %p245 = scmp.lt.s32.totalorder %s23, 0
        %s246 = scalar_select %p245, %s23, 0
        %s247 = scalar_lea.vmem %s2, %s246
        %p248 = pneg %p103
        %p249 = pneg %p100
        %p250 = scmp.lt.s32.totalorder %s23, 0
        %s251 = scalar_select %p250, %s23, 0
        %s252 = scalar_lea.vmem %s3, %s251
        %p253 = pneg %p129
        %p254 = pneg %p126
        %p255 = pneg %p157
        %p256 = pneg %p154
        %p257 = scmp.lt.s32.totalorder %s22, 1
        %s258 = scalar_select %p257, %s22, 1
        %p259 = scmp.lt.s32.totalorder %s23, 0
        %s260 = scalar_select %p259, %s23, 0
        %s261 = smul.addr %s258, 128
        %s262 = sadd.s32 %s260, %s261
        %s263 = smul.addr %s262, 4
        %s264 = scalar_lea.vmem %s4, %s263
        %p265 = scmp.lt.s32.totalorder %s23, 0
        %s266 = scalar_select %p265, %s23, 0
        %s267 = smul.addr %s266, 4
        %s268 = scalar_lea.vmem %s1, %s267
        %p269 = scmp.lt.s32.totalorder %s23, 0
        %s270 = scalar_select %p269, %s23, 0
        %s271 = scalar_lea.vmem %s2, %s270
        %p272 = scmp.lt.s32.totalorder %s23, 0
        %s273 = scalar_select %p272, %s23, 0
        %s274 = scalar_lea.vmem %s3, %s273
        %p275 = scmp.lt.s32.totalorder %s22, 1
        %s276 = scalar_select %p275, %s22, 1
        %p277 = scmp.lt.s32.totalorder %s23, 0
        %s278 = scalar_select %p277, %s23, 0
        %s279 = smul.addr %s276, 128
        %s280 = sadd.s32 %s278, %s279
        %s281 = smul.addr %s280, 4
        %s282 = scalar_lea.vmem %s4, %s281
        %v284 = vld [vmem:[%s227] sm:$0xf]
        %v285 = vld [vmem:[%s227 + $0x4] sm:$0xf]
        %v286 = vld [vmem:[%s227 + $0x8] sm:$0xf]
        %v287 = vld [vmem:[%s227 + $0xc] sm:$0xf]
        %v288 = vld [vmem:[%s227 + $0x10] sm:$0xf]
        %v289 = vld [vmem:[%s227 + $0x14] sm:$0xf]
        %v290 = vld [vmem:[%s227 + $0x18] sm:$0xf]
        %v291 = vld [vmem:[%s227 + $0x1c] sm:$0xf]
        %v292 = vld [vmem:[%s227 + $0x20] sm:$0xf]
        %v293 = vld [vmem:[%s227 + $0x24] sm:$0xf]
        %v294 = vld [vmem:[%s227 + $0x28] sm:$0xf]
        %v295 = vld [vmem:[%s227 + $0x2c] sm:$0xf]
        %v296 = vld [vmem:[%s227 + $0x30] sm:$0xf]
        %v297 = vld [vmem:[%s227 + $0x34] sm:$0xf]
        %v298 = vld [vmem:[%s227 + $0x38] sm:$0xf]
        %v299 = vld [vmem:[%s227 + $0x3c] sm:$0xf]
        %v300 = vld [vmem:[%s227 + $0x40] sm:$0xf]
        %v301 = vld [vmem:[%s227 + $0x44] sm:$0xf]
        %v302 = vld [vmem:[%s227 + $0x48] sm:$0xf]
        %v303 = vld [vmem:[%s227 + $0x4c] sm:$0xf]
        %v304 = vld [vmem:[%s227 + $0x50] sm:$0xf]
        %v305 = vld [vmem:[%s227 + $0x54] sm:$0xf]
        %v306 = vld [vmem:[%s227 + $0x58] sm:$0xf]
        %v307 = vld [vmem:[%s227 + $0x5c] sm:$0xf]
        %v308 = vld [vmem:[%s227 + $0x60] sm:$0xf]
        %v309 = vld [vmem:[%s227 + $0x64] sm:$0xf]
        %v310 = vld [vmem:[%s227 + $0x68] sm:$0xf]
        %v311 = vld [vmem:[%s227 + $0x6c] sm:$0xf]
        %v312 = vld [vmem:[%s227 + $0x70] sm:$0xf]
        %v313 = vld [vmem:[%s227 + $0x74] sm:$0xf]
        %v314 = vld [vmem:[%s227 + $0x78] sm:$0xf]
        %v315 = vld [vmem:[%s227 + $0x7c] sm:$0xf]
        %v316 = vld [vmem:[%s227 + $0x80] sm:$0xf]
        %v317 = vld [vmem:[%s227 + $0x84] sm:$0xf]
        %v318 = vld [vmem:[%s227 + $0x88] sm:$0xf]
        %v319 = vld [vmem:[%s227 + $0x8c] sm:$0xf]
        %v320 = vld [vmem:[%s227 + $0x90] sm:$0xf]
        %v321 = vld [vmem:[%s227 + $0x94] sm:$0xf]
        %v322 = vld [vmem:[%s227 + $0x98] sm:$0xf]
        %v323 = vld [vmem:[%s227 + $0x9c] sm:$0xf]
        %v324 = vld [vmem:[%s227 + $0xa0] sm:$0xf]
        %v325 = vld [vmem:[%s227 + $0xa4] sm:$0xf]
        %v326 = vld [vmem:[%s227 + $0xa8] sm:$0xf]
        %v327 = vld [vmem:[%s227 + $0xac] sm:$0xf]
        %v328 = vld [vmem:[%s227 + $0xb0] sm:$0xf]
        %v329 = vld [vmem:[%s227 + $0xb4] sm:$0xf]
        %v330 = vld [vmem:[%s227 + $0xb8] sm:$0xf]
        %v331 = vld [vmem:[%s227 + $0xbc] sm:$0xf]
        %v332 = vld [vmem:[%s227 + $0xc0] sm:$0xf]
        %v333 = vld [vmem:[%s227 + $0xc4] sm:$0xf]
        %v334 = vld [vmem:[%s227 + $0xc8] sm:$0xf]
        %v335 = vld [vmem:[%s227 + $0xcc] sm:$0xf]
        %v336 = vld [vmem:[%s227 + $0xd0] sm:$0xf]
        %v337 = vld [vmem:[%s227 + $0xd4] sm:$0xf]
        %v338 = vld [vmem:[%s227 + $0xd8] sm:$0xf]
        %v339 = vld [vmem:[%s227 + $0xdc] sm:$0xf]
        %v340 = vld [vmem:[%s227 + $0xe0] sm:$0xf]
        %v341 = vld [vmem:[%s227 + $0xe4] sm:$0xf]
        %v342 = vld [vmem:[%s227 + $0xe8] sm:$0xf]
        %v343 = vld [vmem:[%s227 + $0xec] sm:$0xf]
        %v344 = vld [vmem:[%s227 + $0xf0] sm:$0xf]
        %v345 = vld [vmem:[%s227 + $0xf4] sm:$0xf]
        %v346 = vld [vmem:[%s227 + $0xf8] sm:$0xf]
        %v347 = vld [vmem:[%s227 + $0xfc] sm:$0xf]
        %v348 = vld [vmem:[%s227 + $0x100] sm:$0xf]
        %v349 = vld [vmem:[%s227 + $0x104] sm:$0xf]
        %v350 = vld [vmem:[%s227 + $0x108] sm:$0xf]
        %v351 = vld [vmem:[%s227 + $0x10c] sm:$0xf]
        %v352 = vld [vmem:[%s227 + $0x110] sm:$0xf]
        %v353 = vld [vmem:[%s227 + $0x114] sm:$0xf]
        %v354 = vld [vmem:[%s227 + $0x118] sm:$0xf]
        %v355 = vld [vmem:[%s227 + $0x11c] sm:$0xf]
        %v356 = vld [vmem:[%s227 + $0x120] sm:$0xf]
        %v357 = vld [vmem:[%s227 + $0x124] sm:$0xf]
        %v358 = vld [vmem:[%s227 + $0x128] sm:$0xf]
        %v359 = vld [vmem:[%s227 + $0x12c] sm:$0xf]
        %v360 = vld [vmem:[%s227 + $0x130] sm:$0xf]
        %v361 = vld [vmem:[%s227 + $0x134] sm:$0xf]
        %v362 = vld [vmem:[%s227 + $0x138] sm:$0xf]
        %v363 = vld [vmem:[%s227 + $0x13c] sm:$0xf]
        %v364 = vld [vmem:[%s227 + $0x140] sm:$0xf]
        %v365 = vld [vmem:[%s227 + $0x144] sm:$0xf]
        %v366 = vld [vmem:[%s227 + $0x148] sm:$0xf]
        %v367 = vld [vmem:[%s227 + $0x14c] sm:$0xf]
        %v368 = vld [vmem:[%s227 + $0x150] sm:$0xf]
        %v369 = vld [vmem:[%s227 + $0x154] sm:$0xf]
        %v370 = vld [vmem:[%s227 + $0x158] sm:$0xf]
        %v371 = vld [vmem:[%s227 + $0x15c] sm:$0xf]
        %v372 = vld [vmem:[%s227 + $0x160] sm:$0xf]
        %v373 = vld [vmem:[%s227 + $0x164] sm:$0xf]
        %v374 = vld [vmem:[%s227 + $0x168] sm:$0xf]
        %v375 = vld [vmem:[%s227 + $0x16c] sm:$0xf]
        %v376 = vld [vmem:[%s227 + $0x170] sm:$0xf]
        %v377 = vld [vmem:[%s227 + $0x174] sm:$0xf]
        %v378 = vld [vmem:[%s227 + $0x178] sm:$0xf]
        %v379 = vld [vmem:[%s227 + $0x17c] sm:$0xf]
        %v380 = vld [vmem:[%s227 + $0x180] sm:$0xf]
        %v381 = vld [vmem:[%s227 + $0x184] sm:$0xf]
        %v382 = vld [vmem:[%s227 + $0x188] sm:$0xf]
        %v383 = vld [vmem:[%s227 + $0x18c] sm:$0xf]
        %v384 = vld [vmem:[%s227 + $0x190] sm:$0xf]
        %v385 = vld [vmem:[%s227 + $0x194] sm:$0xf]
        %v386 = vld [vmem:[%s227 + $0x198] sm:$0xf]
        %v387 = vld [vmem:[%s227 + $0x19c] sm:$0xf]
        %v388 = vld [vmem:[%s227 + $0x1a0] sm:$0xf]
        %v389 = vld [vmem:[%s227 + $0x1a4] sm:$0xf]
        %v390 = vld [vmem:[%s227 + $0x1a8] sm:$0xf]
        %v391 = vld [vmem:[%s227 + $0x1ac] sm:$0xf]
        %v392 = vld [vmem:[%s227 + $0x1b0] sm:$0xf]
        %v393 = vld [vmem:[%s227 + $0x1b4] sm:$0xf]
        %v394 = vld [vmem:[%s227 + $0x1b8] sm:$0xf]
        %v395 = vld [vmem:[%s227 + $0x1bc] sm:$0xf]
        %v396 = vld [vmem:[%s227 + $0x1c0] sm:$0xf]
        %v397 = vld [vmem:[%s227 + $0x1c4] sm:$0xf]
        %v398 = vld [vmem:[%s227 + $0x1c8] sm:$0xf]
        %v399 = vld [vmem:[%s227 + $0x1cc] sm:$0xf]
        %v400 = vld [vmem:[%s227 + $0x1d0] sm:$0xf]
        %v401 = vld [vmem:[%s227 + $0x1d4] sm:$0xf]
        %v402 = vld [vmem:[%s227 + $0x1d8] sm:$0xf]
        %v403 = vld [vmem:[%s227 + $0x1dc] sm:$0xf]
        %v404 = vld [vmem:[%s227 + $0x1e0] sm:$0xf]
        %v405 = vld [vmem:[%s227 + $0x1e4] sm:$0xf]
        %v406 = vld [vmem:[%s227 + $0x1e8] sm:$0xf]
        %v407 = vld [vmem:[%s227 + $0x1ec] sm:$0xf]
        %v408 = vld [vmem:[%s227 + $0x1f0] sm:$0xf]
        %v409 = vld [vmem:[%s227 + $0x1f4] sm:$0xf]
        %v410 = vld [vmem:[%s227 + $0x1f8] sm:$0xf]
        %v411 = vld [vmem:[%s227 + $0x1fc] sm:$0xf]
        %v412 = vld [vmem:[%s268] sm:$0xf]
        %v413 = vld [vmem:[%s268 + $0x4] sm:$0xf]
        %v414 = vld [vmem:[%s268 + $0x8] sm:$0xf]
        %v415 = vld [vmem:[%s268 + $0xc] sm:$0xf]
        %v416 = vld [vmem:[%s268 + $0x10] sm:$0xf]
        %v417 = vld [vmem:[%s268 + $0x14] sm:$0xf]
        %v418 = vld [vmem:[%s268 + $0x18] sm:$0xf]
        %v419 = vld [vmem:[%s268 + $0x1c] sm:$0xf]
        %v420 = vld [vmem:[%s268 + $0x20] sm:$0xf]
        %v421 = vld [vmem:[%s268 + $0x24] sm:$0xf]
        %v422 = vld [vmem:[%s268 + $0x28] sm:$0xf]
        %v423 = vld [vmem:[%s268 + $0x2c] sm:$0xf]
        %v424 = vld [vmem:[%s268 + $0x30] sm:$0xf]
        %v425 = vld [vmem:[%s268 + $0x34] sm:$0xf]
        %v426 = vld [vmem:[%s268 + $0x38] sm:$0xf]
        %v427 = vld [vmem:[%s268 + $0x3c] sm:$0xf]
        %v428 = vld [vmem:[%s227 + $0x200] sm:$0xf]
        %v429 = vld [vmem:[%s227 + $0x204] sm:$0xf]
        %v430 = vld [vmem:[%s227 + $0x208] sm:$0xf]
        %v431 = vld [vmem:[%s227 + $0x20c] sm:$0xf]
        %s432 = scalar_lea.vmem %s268, 64
        %v433 = vld [vmem:[%s432] sm:$0xf]
        %v434 = vld [vmem:[%s432 + $0x4] sm:$0xf]
        %v435 = vld [vmem:[%s432 + $0x8] sm:$0xf]
        %v436 = vld [vmem:[%s432 + $0xc] sm:$0xf]
        %v437 = vld [vmem:[%s432 + $0x10] sm:$0xf]
        %v438 = vld [vmem:[%s432 + $0x14] sm:$0xf]
        %v439 = vld [vmem:[%s432 + $0x18] sm:$0xf]
        %v440 = vld [vmem:[%s432 + $0x1c] sm:$0xf]
        %v441 = vld [vmem:[%s432 + $0x20] sm:$0xf]
        %v442 = vld [vmem:[%s432 + $0x24] sm:$0xf]
        %v443 = vld [vmem:[%s432 + $0x28] sm:$0xf]
        %v444 = vld [vmem:[%s432 + $0x2c] sm:$0xf]
        %v445 = vld [vmem:[%s432 + $0x30] sm:$0xf]
        %v446 = vld [vmem:[%s432 + $0x34] sm:$0xf]
        %v447 = vld [vmem:[%s432 + $0x38] sm:$0xf]
        %v448 = vld [vmem:[%s432 + $0x3c] sm:$0xf]
        %v577 = vunpack.c.l.b16 %v288
        %v578 = vunpack.c.l.b16 %v289
        %v579 = vunpack.c.l.b16 %v290
        %v580 = vunpack.c.l.b16 %v291
        %v581 = vunpack.c.l.b16 %v292
        %v582 = vunpack.c.l.b16 %v293
        %v583 = vunpack.c.l.b16 %v294
        %v584 = vunpack.c.l.b16 %v295
        %v585 = vunpack.c.l.b16 %v296
        %v586 = vunpack.c.l.b16 %v297
        %v587 = vunpack.c.l.b16 %v298
        %v588 = vunpack.c.l.b16 %v299
        %v589 = vunpack.c.l.b16 %v300
        %v590 = vunpack.c.l.b16 %v301
        %v591 = vunpack.c.l.b16 %v302
        %v592 = vunpack.c.l.b16 %v303
        %v593 = vunpack.c.l.b16 %v304
        %v594 = vunpack.c.l.b16 %v305
        %v595 = vunpack.c.l.b16 %v306
        %v596 = vunpack.c.l.b16 %v307
        %v597 = vunpack.c.l.b16 %v308
        %v598 = vunpack.c.l.b16 %v309
        %v599 = vunpack.c.l.b16 %v310
        %v600 = vunpack.c.l.b16 %v311
        %v601 = vunpack.c.l.b16 %v312
        %v602 = vunpack.c.l.b16 %v313
        %v603 = vunpack.c.l.b16 %v314
        %v604 = vunpack.c.l.b16 %v315
        %v605 = vunpack.c.l.b16 %v316
        %v606 = vunpack.c.l.b16 %v317
        %v607 = vunpack.c.l.b16 %v318
        %v608 = vunpack.c.l.b16 %v319
        %v609 = vunpack.c.l.b16 %v320
        %v610 = vunpack.c.l.b16 %v321
        %v611 = vunpack.c.l.b16 %v322
        %v612 = vunpack.c.l.b16 %v323
        %v613 = vunpack.c.l.b16 %v324
        %v614 = vunpack.c.l.b16 %v325
        %v615 = vunpack.c.l.b16 %v326
        %v616 = vunpack.c.l.b16 %v327
        %v617 = vunpack.c.l.b16 %v328
        %v618 = vunpack.c.l.b16 %v329
        %v619 = vunpack.c.l.b16 %v330
        %v620 = vunpack.c.l.b16 %v331
        %v621 = vunpack.c.l.b16 %v332
        %v622 = vunpack.c.l.b16 %v333
        %v623 = vunpack.c.l.b16 %v334
        %v624 = vunpack.c.l.b16 %v335
        %v625 = vunpack.c.l.b16 %v336
        %v626 = vunpack.c.l.b16 %v337
        %v627 = vunpack.c.l.b16 %v338
        %v628 = vunpack.c.l.b16 %v339
        %v629 = vunpack.c.l.b16 %v340
        %v630 = vunpack.c.l.b16 %v341
        %v631 = vunpack.c.l.b16 %v342
        %v632 = vunpack.c.l.b16 %v343
        %v633 = vunpack.c.l.b16 %v344
        %v634 = vunpack.c.l.b16 %v345
        %v635 = vunpack.c.l.b16 %v346
        %v636 = vunpack.c.l.b16 %v347
        %v637 = vunpack.c.l.b16 %v348
        %v638 = vunpack.c.l.b16 %v349
        %v639 = vunpack.c.l.b16 %v350
        %v640 = vunpack.c.l.b16 %v351
        %v641 = vunpack.c.l.b16 %v352
        %v642 = vunpack.c.l.b16 %v353
        %v643 = vunpack.c.l.b16 %v354
        %v644 = vunpack.c.l.b16 %v355
        %v645 = vunpack.c.l.b16 %v356
        %v646 = vunpack.c.l.b16 %v357
        %v647 = vunpack.c.l.b16 %v358
        %v648 = vunpack.c.l.b16 %v359
        %v649 = vunpack.c.l.b16 %v360
        %v650 = vunpack.c.l.b16 %v361
        %v651 = vunpack.c.l.b16 %v362
        %v652 = vunpack.c.l.b16 %v363
        %v653 = vunpack.c.l.b16 %v364
        %v654 = vunpack.c.l.b16 %v365
        %v655 = vunpack.c.l.b16 %v366
        %v656 = vunpack.c.l.b16 %v367
        %v657 = vunpack.c.l.b16 %v368
        %v658 = vunpack.c.l.b16 %v369
        %v659 = vunpack.c.l.b16 %v370
        %v660 = vunpack.c.l.b16 %v371
        %v661 = vunpack.c.l.b16 %v372
        %v662 = vunpack.c.l.b16 %v373
        %v663 = vunpack.c.l.b16 %v374
        %v664 = vunpack.c.l.b16 %v375
        %v665 = vunpack.c.l.b16 %v376
        %v666 = vunpack.c.l.b16 %v377
        %v667 = vunpack.c.l.b16 %v378
        %v668 = vunpack.c.l.b16 %v379
        %v669 = vunpack.c.l.b16 %v380
        %v670 = vunpack.c.l.b16 %v381
        %v671 = vunpack.c.l.b16 %v382
        %v672 = vunpack.c.l.b16 %v383
        %v673 = vunpack.c.l.b16 %v384
        %v674 = vunpack.c.l.b16 %v385
        %v675 = vunpack.c.l.b16 %v386
        %v676 = vunpack.c.l.b16 %v387
        %v677 = vunpack.c.l.b16 %v388
        %v678 = vunpack.c.l.b16 %v389
        %v679 = vunpack.c.l.b16 %v390
        %v680 = vunpack.c.l.b16 %v391
        %v681 = vunpack.c.l.b16 %v392
        %v682 = vunpack.c.l.b16 %v393
        %v683 = vunpack.c.l.b16 %v394
        %v684 = vunpack.c.l.b16 %v395
        %v685 = vunpack.c.l.b16 %v396
        %v686 = vunpack.c.l.b16 %v397
        %v687 = vunpack.c.l.b16 %v398
        %v688 = vunpack.c.l.b16 %v399
        %v689 = vunpack.c.l.b16 %v400
        %v690 = vunpack.c.l.b16 %v401
        %v691 = vunpack.c.l.b16 %v402
        %v692 = vunpack.c.l.b16 %v403
        %v693 = vunpack.c.l.b16 %v404
        %v694 = vunpack.c.l.b16 %v405
        %v695 = vunpack.c.l.b16 %v406
        %v696 = vunpack.c.l.b16 %v407
        %v697 = vunpack.c.l.b16 %v408
        %v698 = vunpack.c.l.b16 %v409
        %v699 = vunpack.c.l.b16 %v410
        %v700 = vunpack.c.l.b16 %v411
        %v701 = vunpack.c.l.b16 %v428
        %v702 = vunpack.c.l.b16 %v429
        %v703 = vunpack.c.l.b16 %v430
        %v704 = vunpack.c.l.b16 %v431
        %v705 = vpack.c.b16 %v578, %v577
        %v706 = vpack.c.b16 %v580, %v579
        %v707 = vpack.c.b16 %v582, %v581
        %v708 = vpack.c.b16 %v584, %v583
        %v709 = vpack.c.b16 %v586, %v585
        %v710 = vpack.c.b16 %v588, %v587
        %v711 = vpack.c.b16 %v590, %v589
        %v712 = vpack.c.b16 %v592, %v591
        %v713 = vpack.c.b16 %v594, %v593
        %v714 = vpack.c.b16 %v596, %v595
        %v715 = vpack.c.b16 %v598, %v597
        %v716 = vpack.c.b16 %v600, %v599
        %v717 = vpack.c.b16 %v602, %v601
        %v718 = vpack.c.b16 %v604, %v603
        %v719 = vpack.c.b16 %v606, %v605
        %v720 = vpack.c.b16 %v608, %v607
        %v721 = vpack.c.b16 %v610, %v609
        %v722 = vpack.c.b16 %v612, %v611
        %v723 = vpack.c.b16 %v614, %v613
        %v724 = vpack.c.b16 %v616, %v615
        %v725 = vpack.c.b16 %v618, %v617
        %v726 = vpack.c.b16 %v620, %v619
        %v727 = vpack.c.b16 %v622, %v621
        %v728 = vpack.c.b16 %v624, %v623
        %v729 = vpack.c.b16 %v626, %v625
        %v730 = vpack.c.b16 %v628, %v627
        %v731 = vpack.c.b16 %v630, %v629
        %v732 = vpack.c.b16 %v632, %v631
        %v733 = vpack.c.b16 %v634, %v633
        %v734 = vpack.c.b16 %v636, %v635
        %v735 = vpack.c.b16 %v638, %v637
        %v736 = vpack.c.b16 %v640, %v639
        %v737 = vpack.c.b16 %v642, %v641
        %v738 = vpack.c.b16 %v644, %v643
        %v739 = vpack.c.b16 %v646, %v645
        %v740 = vpack.c.b16 %v648, %v647
        %v741 = vpack.c.b16 %v650, %v649
        %v742 = vpack.c.b16 %v652, %v651
        %v743 = vpack.c.b16 %v654, %v653
        %v744 = vpack.c.b16 %v656, %v655
        %v745 = vpack.c.b16 %v658, %v657
        %v746 = vpack.c.b16 %v660, %v659
        %v747 = vpack.c.b16 %v662, %v661
        %v748 = vpack.c.b16 %v664, %v663
        %v749 = vpack.c.b16 %v666, %v665
        %v750 = vpack.c.b16 %v668, %v667
        %v751 = vpack.c.b16 %v670, %v669
        %v752 = vpack.c.b16 %v672, %v671
        %v753 = vpack.c.b16 %v674, %v673
        %v754 = vpack.c.b16 %v676, %v675
        %v755 = vpack.c.b16 %v678, %v677
        %v756 = vpack.c.b16 %v680, %v679
        %v757 = vpack.c.b16 %v682, %v681
        %v758 = vpack.c.b16 %v684, %v683
        %v759 = vpack.c.b16 %v686, %v685
        %v760 = vpack.c.b16 %v688, %v687
        %v761 = vpack.c.b16 %v690, %v689
        %v762 = vpack.c.b16 %v692, %v691
        %v763 = vpack.c.b16 %v694, %v693
        %v764 = vpack.c.b16 %v696, %v695
        %v765 = vpack.c.b16 %v698, %v697
        %v766 = vpack.c.b16 %v700, %v699
        %v767 = vpack.c.b16 %v702, %v701
        %v768 = vpack.c.b16 %v704, %v703
        %v849 = vunpack.c.l.b16 %v433
        %v850 = vunpack.c.l.b16 %v434
        %v851 = vunpack.c.l.b16 %v435
        %v852 = vunpack.c.l.b16 %v436
        %v853 = vunpack.c.l.b16 %v437
        %v854 = vunpack.c.l.b16 %v438
        %v855 = vunpack.c.l.b16 %v439
        %v856 = vunpack.c.l.b16 %v440
        %v857 = vunpack.c.l.b16 %v441
        %v858 = vunpack.c.l.b16 %v442
        %v859 = vunpack.c.l.b16 %v443
        %v860 = vunpack.c.l.b16 %v444
        %v861 = vunpack.c.l.b16 %v445
        %v862 = vunpack.c.l.b16 %v446
        %v863 = vunpack.c.l.b16 %v447
        %v864 = vunpack.c.l.b16 %v448
        %v865 = vpack.c.b16 %v850, %v849
        %v866 = vpack.c.b16 %v852, %v851
        %v867 = vpack.c.b16 %v854, %v853
        %v868 = vpack.c.b16 %v856, %v855
        %v869 = vpack.c.b16 %v858, %v857
        %v870 = vpack.c.b16 %v860, %v859
        %v871 = vpack.c.b16 %v862, %v861
        %v872 = vpack.c.b16 %v864, %v863
        %881 = vmatprep.subr.bf16.mxu0 0
        %882 = vmatpush1.bf16.msra.mxu0 %v872
        %883 = vmatprep.subr.bf16.mxu0 0
        %884 = vmatpush1.bf16.msra.mxu0 %v871
        %885 = vmatprep.subr.bf16.mxu0 0
        %886 = vmatpush1.bf16.msra.mxu0 %v870
        %887 = vmatprep.subr.bf16.mxu0 0
        %888 = vmatpush1.bf16.msra.mxu0 %v869
        %889 = vmatprep.subr.bf16.mxu0 0
        %890 = vmatpush1.bf16.msra.mxu0 %v868
        %891 = vmatprep.subr.bf16.mxu0 0
        %892 = vmatpush1.bf16.msra.mxu0 %v867
        %893 = vmatprep.subr.bf16.mxu0 0
        %894 = vmatpush1.bf16.msra.mxu0 %v866
        %895 = vmatprep.subr.bf16.mxu0 0
        %896 = vmatpush1.bf16.msra.mxu0 %v865
        %897 = vmatprep.subr.bf16.mxu0 0
        %898 = vmatpush2.bf16.msra.mxu0 0
        %899 = vmatprep.subr.bf16.mxu0 0
        %900 = vmatpush2.bf16.msra.mxu0 0
        %901 = vmatprep.subr.bf16.mxu0 0
        %902 = vmatpush2.bf16.msra.mxu0 0
        %903 = vmatprep.subr.bf16.mxu0 0
        %904 = vmatpush2.bf16.msra.mxu0 0
        %905 = vmatprep.subr.bf16.mxu0 0
        %906 = vmatpush2.bf16.msra.mxu0 0
        %907 = vmatprep.subr.bf16.mxu0 0
        %908 = vmatpush2.bf16.msra.mxu0 0
        %909 = vmatprep.subr.bf16.mxu0 0
        %910 = vmatpush2.bf16.msra.mxu0 0
        %911 = vmatprep.subr.bf16.mxu0 0
        %912 = vmatpush2.bf16.msra.mxu0 0
        %913 = vmatprep.mubr.bf16.mxu0 0
        %914 = vmatmul.mubr.bf16.gmra.mxu0 %v705
        %v915 = vpop.f32.mrf.mxu0
        %v916 = vadd.f32 0.0, %v915
        %v917 = vpop.f32.mrf.mxu0
        %v918 = vpop.f32.mrf.mxu0
        %v919 = vadd.f32 0.0, %v918
        %v920 = vpop.f32.mrf.mxu0
        %921 = vmatprep.mubr.bf16.mxu0 0
        %922 = vmatmul.mubr.bf16.gmra.mxu0 %v706
        %v923 = vpop.f32.mrf.mxu0
        %v924 = vadd.f32 0.0, %v923
        %v925 = vpop.f32.mrf.mxu0
        %v926 = vpop.f32.mrf.mxu0
        %v927 = vadd.f32 0.0, %v926
        %v928 = vpop.f32.mrf.mxu0
        %929 = vmatprep.mubr.bf16.mxu0 0
        %930 = vmatmul.mubr.bf16.gmra.mxu0 %v707
        %v931 = vpop.f32.mrf.mxu0
        %v932 = vadd.f32 0.0, %v931
        %v933 = vpop.f32.mrf.mxu0
        %v934 = vpop.f32.mrf.mxu0
        %v935 = vadd.f32 0.0, %v934
        %v936 = vpop.f32.mrf.mxu0
        %937 = vmatprep.mubr.bf16.mxu0 0
        %938 = vmatmul.mubr.bf16.gmra.mxu0 %v708
        %v939 = vpop.f32.mrf.mxu0
        %v940 = vadd.f32 0.0, %v939
        %v941 = vpop.f32.mrf.mxu0
        %v942 = vpop.f32.mrf.mxu0
        %v943 = vadd.f32 0.0, %v942
        %v944 = vpop.f32.mrf.mxu0
        %945 = vmatprep.mubr.bf16.mxu0 0
        %946 = vmatmul.mubr.bf16.gmra.mxu0 %v709
        %v947 = vpop.f32.mrf.mxu0
        %v948 = vadd.f32 0.0, %v947
        %v949 = vpop.f32.mrf.mxu0
        %v950 = vpop.f32.mrf.mxu0
        %v951 = vadd.f32 0.0, %v950
        %v952 = vpop.f32.mrf.mxu0
        %953 = vmatprep.mubr.bf16.mxu0 0
        %954 = vmatmul.mubr.bf16.gmra.mxu0 %v710
        %v955 = vpop.f32.mrf.mxu0
        %v956 = vadd.f32 0.0, %v955
        %v957 = vpop.f32.mrf.mxu0
        %v958 = vpop.f32.mrf.mxu0
        %v959 = vadd.f32 0.0, %v958
        %v960 = vpop.f32.mrf.mxu0
        %961 = vmatprep.mubr.bf16.mxu0 0
        %962 = vmatmul.mubr.bf16.gmra.mxu0 %v711
        %v963 = vpop.f32.mrf.mxu0
        %v964 = vadd.f32 0.0, %v963
        %v965 = vpop.f32.mrf.mxu0
        %v966 = vpop.f32.mrf.mxu0
        %v967 = vadd.f32 0.0, %v966
        %v968 = vpop.f32.mrf.mxu0
        %969 = vmatprep.mubr.bf16.mxu0 0
        %970 = vmatmul.mubr.bf16.gmra.mxu0 %v712
        %v971 = vpop.f32.mrf.mxu0
        %v972 = vadd.f32 0.0, %v971
        %v973 = vpop.f32.mrf.mxu0
        %v974 = vpop.f32.mrf.mxu0
        %v975 = vadd.f32 0.0, %v974
        %v976 = vpop.f32.mrf.mxu0
        %977 = vmatprep.mubr.bf16.mxu0 0
        %978 = vmatmul.mubr.bf16.gmra.mxu0 %v713
        %v979 = vpop.f32.mrf.mxu0
        %v980 = vadd.f32 0.0, %v979
        %v981 = vpop.f32.mrf.mxu0
        %v982 = vpop.f32.mrf.mxu0
        %v983 = vadd.f32 0.0, %v982
        %v984 = vpop.f32.mrf.mxu0
        %985 = vmatprep.mubr.bf16.mxu0 0
        %986 = vmatmul.mubr.bf16.gmra.mxu0 %v714
        %v987 = vpop.f32.mrf.mxu0
        %v988 = vadd.f32 0.0, %v987
        %v989 = vpop.f32.mrf.mxu0
        %v990 = vpop.f32.mrf.mxu0
        %v991 = vadd.f32 0.0, %v990
        %v992 = vpop.f32.mrf.mxu0
        %993 = vmatprep.mubr.bf16.mxu0 0
        %994 = vmatmul.mubr.bf16.gmra.mxu0 %v715
        %v995 = vpop.f32.mrf.mxu0
        %v996 = vadd.f32 0.0, %v995
        %v997 = vpop.f32.mrf.mxu0
        %v998 = vpop.f32.mrf.mxu0
        %v999 = vadd.f32 0.0, %v998
        %v1000 = vpop.f32.mrf.mxu0
        %1001 = vmatprep.mubr.bf16.mxu0 0
        %1002 = vmatmul.mubr.bf16.gmra.mxu0 %v716
        %v1003 = vpop.f32.mrf.mxu0
        %v1004 = vadd.f32 0.0, %v1003
        %v1005 = vpop.f32.mrf.mxu0
        %v1006 = vpop.f32.mrf.mxu0
        %v1007 = vadd.f32 0.0, %v1006
        %v1008 = vpop.f32.mrf.mxu0
        %1009 = vmatprep.mubr.bf16.mxu0 0
        %1010 = vmatmul.mubr.bf16.gmra.mxu0 %v717
        %v1011 = vpop.f32.mrf.mxu0
        %v1012 = vadd.f32 0.0, %v1011
        %v1013 = vpop.f32.mrf.mxu0
        %v1014 = vpop.f32.mrf.mxu0
        %v1015 = vadd.f32 0.0, %v1014
        %v1016 = vpop.f32.mrf.mxu0
        %1017 = vmatprep.mubr.bf16.mxu0 0
        %1018 = vmatmul.mubr.bf16.gmra.mxu0 %v718
        %v1019 = vpop.f32.mrf.mxu0
        %v1020 = vadd.f32 0.0, %v1019
        %v1021 = vpop.f32.mrf.mxu0
        %v1022 = vpop.f32.mrf.mxu0
        %v1023 = vadd.f32 0.0, %v1022
        %v1024 = vpop.f32.mrf.mxu0
        %1025 = vmatprep.mubr.bf16.mxu0 0
        %1026 = vmatmul.mubr.bf16.gmra.mxu0 %v719
        %v1027 = vpop.f32.mrf.mxu0
        %v1028 = vadd.f32 0.0, %v1027
        %v1029 = vpop.f32.mrf.mxu0
        %v1030 = vpop.f32.mrf.mxu0
        %v1031 = vadd.f32 0.0, %v1030
        %v1032 = vpop.f32.mrf.mxu0
        %1033 = vmatprep.mubr.bf16.mxu0 0
        %1034 = vmatmul.mubr.bf16.gmra.mxu0 %v720
        %v1035 = vpop.f32.mrf.mxu0
        %v1036 = vadd.f32 0.0, %v1035
        %v1037 = vpop.f32.mrf.mxu0
        %v1038 = vpop.f32.mrf.mxu0
        %v1039 = vadd.f32 0.0, %v1038
        %v1040 = vpop.f32.mrf.mxu0
        %1041 = vmatprep.mubr.bf16.mxu0 0
        %1042 = vmatmul.mubr.bf16.gmra.mxu0 %v721
        %v1043 = vpop.f32.mrf.mxu0
        %v1044 = vadd.f32 0.0, %v1043
        %v1045 = vpop.f32.mrf.mxu0
        %v1046 = vpop.f32.mrf.mxu0
        %v1047 = vadd.f32 0.0, %v1046
        %v1048 = vpop.f32.mrf.mxu0
        %1049 = vmatprep.mubr.bf16.mxu0 0
        %1050 = vmatmul.mubr.bf16.gmra.mxu0 %v722
        %v1051 = vpop.f32.mrf.mxu0
        %v1052 = vadd.f32 0.0, %v1051
        %v1053 = vpop.f32.mrf.mxu0
        %v1054 = vpop.f32.mrf.mxu0
        %v1055 = vadd.f32 0.0, %v1054
        %v1056 = vpop.f32.mrf.mxu0
        %1057 = vmatprep.mubr.bf16.mxu0 0
        %1058 = vmatmul.mubr.bf16.gmra.mxu0 %v723
        %v1059 = vpop.f32.mrf.mxu0
        %v1060 = vadd.f32 0.0, %v1059
        %v1061 = vpop.f32.mrf.mxu0
        %v1062 = vpop.f32.mrf.mxu0
        %v1063 = vadd.f32 0.0, %v1062
        %v1064 = vpop.f32.mrf.mxu0
        %1065 = vmatprep.mubr.bf16.mxu0 0
        %1066 = vmatmul.mubr.bf16.gmra.mxu0 %v724
        %v1067 = vpop.f32.mrf.mxu0
        %v1068 = vadd.f32 0.0, %v1067
        %v1069 = vpop.f32.mrf.mxu0
        %v1070 = vpop.f32.mrf.mxu0
        %v1071 = vadd.f32 0.0, %v1070
        %v1072 = vpop.f32.mrf.mxu0
        %1073 = vmatprep.mubr.bf16.mxu0 0
        %1074 = vmatmul.mubr.bf16.gmra.mxu0 %v725
        %v1075 = vpop.f32.mrf.mxu0
        %v1076 = vadd.f32 0.0, %v1075
        %v1077 = vpop.f32.mrf.mxu0
        %v1078 = vpop.f32.mrf.mxu0
        %v1079 = vadd.f32 0.0, %v1078
        %v1080 = vpop.f32.mrf.mxu0
        %1081 = vmatprep.mubr.bf16.mxu0 0
        %1082 = vmatmul.mubr.bf16.gmra.mxu0 %v726
        %v1083 = vpop.f32.mrf.mxu0
        %v1084 = vadd.f32 0.0, %v1083
        %v1085 = vpop.f32.mrf.mxu0
        %v1086 = vpop.f32.mrf.mxu0
        %v1087 = vadd.f32 0.0, %v1086
        %v1088 = vpop.f32.mrf.mxu0
        %1089 = vmatprep.mubr.bf16.mxu0 0
        %1090 = vmatmul.mubr.bf16.gmra.mxu0 %v727
        %v1091 = vpop.f32.mrf.mxu0
        %v1092 = vadd.f32 0.0, %v1091
        %v1093 = vpop.f32.mrf.mxu0
        %v1094 = vpop.f32.mrf.mxu0
        %v1095 = vadd.f32 0.0, %v1094
        %v1096 = vpop.f32.mrf.mxu0
        %1097 = vmatprep.mubr.bf16.mxu0 0
        %1098 = vmatmul.mubr.bf16.gmra.mxu0 %v728
        %v1099 = vpop.f32.mrf.mxu0
        %v1100 = vadd.f32 0.0, %v1099
        %v1101 = vpop.f32.mrf.mxu0
        %v1102 = vpop.f32.mrf.mxu0
        %v1103 = vadd.f32 0.0, %v1102
        %v1104 = vpop.f32.mrf.mxu0
        %1105 = vmatprep.mubr.bf16.mxu0 0
        %1106 = vmatmul.mubr.bf16.gmra.mxu0 %v729
        %v1107 = vpop.f32.mrf.mxu0
        %v1108 = vadd.f32 0.0, %v1107
        %v1109 = vpop.f32.mrf.mxu0
        %v1110 = vpop.f32.mrf.mxu0
        %v1111 = vadd.f32 0.0, %v1110
        %v1112 = vpop.f32.mrf.mxu0
        %1113 = vmatprep.mubr.bf16.mxu0 0
        %1114 = vmatmul.mubr.bf16.gmra.mxu0 %v730
        %v1115 = vpop.f32.mrf.mxu0
        %v1116 = vadd.f32 0.0, %v1115
        %v1117 = vpop.f32.mrf.mxu0
        %v1118 = vpop.f32.mrf.mxu0
        %v1119 = vadd.f32 0.0, %v1118
        %v1120 = vpop.f32.mrf.mxu0
        %1121 = vmatprep.mubr.bf16.mxu0 0
        %1122 = vmatmul.mubr.bf16.gmra.mxu0 %v731
        %v1123 = vpop.f32.mrf.mxu0
        %v1124 = vadd.f32 0.0, %v1123
        %v1125 = vpop.f32.mrf.mxu0
        %v1126 = vpop.f32.mrf.mxu0
        %v1127 = vadd.f32 0.0, %v1126
        %v1128 = vpop.f32.mrf.mxu0
        %1129 = vmatprep.mubr.bf16.mxu0 0
        %1130 = vmatmul.mubr.bf16.gmra.mxu0 %v732
        %v1131 = vpop.f32.mrf.mxu0
        %v1132 = vadd.f32 0.0, %v1131
        %v1133 = vpop.f32.mrf.mxu0
        %v1134 = vpop.f32.mrf.mxu0
        %v1135 = vadd.f32 0.0, %v1134
        %v1136 = vpop.f32.mrf.mxu0
        %1137 = vmatprep.mubr.bf16.mxu0 0
        %1138 = vmatmul.mubr.bf16.gmra.mxu0 %v733
        %v1139 = vpop.f32.mrf.mxu0
        %v1140 = vadd.f32 0.0, %v1139
        %v1141 = vpop.f32.mrf.mxu0
        %v1142 = vpop.f32.mrf.mxu0
        %v1143 = vadd.f32 0.0, %v1142
        %v1144 = vpop.f32.mrf.mxu0
        %1145 = vmatprep.mubr.bf16.mxu0 0
        %1146 = vmatmul.mubr.bf16.gmra.mxu0 %v734
        %v1147 = vpop.f32.mrf.mxu0
        %v1148 = vadd.f32 0.0, %v1147
        %v1149 = vpop.f32.mrf.mxu0
        %v1150 = vpop.f32.mrf.mxu0
        %v1151 = vadd.f32 0.0, %v1150
        %v1152 = vpop.f32.mrf.mxu0
        %1153 = vmatprep.mubr.bf16.mxu0 0
        %1154 = vmatmul.mubr.bf16.gmra.mxu0 %v735
        %v1155 = vpop.f32.mrf.mxu0
        %v1156 = vadd.f32 0.0, %v1155
        %v1157 = vpop.f32.mrf.mxu0
        %v1158 = vpop.f32.mrf.mxu0
        %v1159 = vadd.f32 0.0, %v1158
        %v1160 = vpop.f32.mrf.mxu0
        %1161 = vmatprep.mubr.bf16.mxu0 0
        %1162 = vmatmul.mubr.bf16.gmra.mxu0 %v736
        %v1163 = vpop.f32.mrf.mxu0
        %v1164 = vadd.f32 0.0, %v1163
        %v1165 = vpop.f32.mrf.mxu0
        %v1166 = vpop.f32.mrf.mxu0
        %v1167 = vadd.f32 0.0, %v1166
        %v1168 = vpop.f32.mrf.mxu0
        %1169 = vmatprep.mubr.bf16.mxu0 0
        %1170 = vmatmul.mubr.bf16.gmra.mxu0 %v737
        %v1171 = vpop.f32.mrf.mxu0
        %v1172 = vadd.f32 0.0, %v1171
        %v1173 = vpop.f32.mrf.mxu0
        %v1174 = vpop.f32.mrf.mxu0
        %v1175 = vadd.f32 0.0, %v1174
        %v1176 = vpop.f32.mrf.mxu0
        %1177 = vmatprep.mubr.bf16.mxu0 0
        %1178 = vmatmul.mubr.bf16.gmra.mxu0 %v738
        %v1179 = vpop.f32.mrf.mxu0
        %v1180 = vadd.f32 0.0, %v1179
        %v1181 = vpop.f32.mrf.mxu0
        %v1182 = vpop.f32.mrf.mxu0
        %v1183 = vadd.f32 0.0, %v1182
        %v1184 = vpop.f32.mrf.mxu0
        %1185 = vmatprep.mubr.bf16.mxu0 0
        %1186 = vmatmul.mubr.bf16.gmra.mxu0 %v739
        %v1187 = vpop.f32.mrf.mxu0
        %v1188 = vadd.f32 0.0, %v1187
        %v1189 = vpop.f32.mrf.mxu0
        %v1190 = vpop.f32.mrf.mxu0
        %v1191 = vadd.f32 0.0, %v1190
        %v1192 = vpop.f32.mrf.mxu0
        %1193 = vmatprep.mubr.bf16.mxu0 0
        %1194 = vmatmul.mubr.bf16.gmra.mxu0 %v740
        %v1195 = vpop.f32.mrf.mxu0
        %v1196 = vadd.f32 0.0, %v1195
        %v1197 = vpop.f32.mrf.mxu0
        %v1198 = vpop.f32.mrf.mxu0
        %v1199 = vadd.f32 0.0, %v1198
        %v1200 = vpop.f32.mrf.mxu0
        %1201 = vmatprep.mubr.bf16.mxu0 0
        %1202 = vmatmul.mubr.bf16.gmra.mxu0 %v741
        %v1203 = vpop.f32.mrf.mxu0
        %v1204 = vadd.f32 0.0, %v1203
        %v1205 = vpop.f32.mrf.mxu0
        %v1206 = vpop.f32.mrf.mxu0
        %v1207 = vadd.f32 0.0, %v1206
        %v1208 = vpop.f32.mrf.mxu0
        %1209 = vmatprep.mubr.bf16.mxu0 0
        %1210 = vmatmul.mubr.bf16.gmra.mxu0 %v742
        %v1211 = vpop.f32.mrf.mxu0
        %v1212 = vadd.f32 0.0, %v1211
        %v1213 = vpop.f32.mrf.mxu0
        %v1214 = vpop.f32.mrf.mxu0
        %v1215 = vadd.f32 0.0, %v1214
        %v1216 = vpop.f32.mrf.mxu0
        %1217 = vmatprep.mubr.bf16.mxu0 0
        %1218 = vmatmul.mubr.bf16.gmra.mxu0 %v743
        %v1219 = vpop.f32.mrf.mxu0
        %v1220 = vadd.f32 0.0, %v1219
        %v1221 = vpop.f32.mrf.mxu0
        %v1222 = vpop.f32.mrf.mxu0
        %v1223 = vadd.f32 0.0, %v1222
        %v1224 = vpop.f32.mrf.mxu0
        %1225 = vmatprep.mubr.bf16.mxu0 0
        %1226 = vmatmul.mubr.bf16.gmra.mxu0 %v744
        %v1227 = vpop.f32.mrf.mxu0
        %v1228 = vadd.f32 0.0, %v1227
        %v1229 = vpop.f32.mrf.mxu0
        %v1230 = vpop.f32.mrf.mxu0
        %v1231 = vadd.f32 0.0, %v1230
        %v1232 = vpop.f32.mrf.mxu0
        %1233 = vmatprep.mubr.bf16.mxu0 0
        %1234 = vmatmul.mubr.bf16.gmra.mxu0 %v745
        %v1235 = vpop.f32.mrf.mxu0
        %v1236 = vadd.f32 0.0, %v1235
        %v1237 = vpop.f32.mrf.mxu0
        %v1238 = vpop.f32.mrf.mxu0
        %v1239 = vadd.f32 0.0, %v1238
        %v1240 = vpop.f32.mrf.mxu0
        %1241 = vmatprep.mubr.bf16.mxu0 0
        %1242 = vmatmul.mubr.bf16.gmra.mxu0 %v746
        %v1243 = vpop.f32.mrf.mxu0
        %v1244 = vadd.f32 0.0, %v1243
        %v1245 = vpop.f32.mrf.mxu0
        %v1246 = vpop.f32.mrf.mxu0
        %v1247 = vadd.f32 0.0, %v1246
        %v1248 = vpop.f32.mrf.mxu0
        %1249 = vmatprep.mubr.bf16.mxu0 0
        %1250 = vmatmul.mubr.bf16.gmra.mxu0 %v747
        %v1251 = vpop.f32.mrf.mxu0
        %v1252 = vadd.f32 0.0, %v1251
        %v1253 = vpop.f32.mrf.mxu0
        %v1254 = vpop.f32.mrf.mxu0
        %v1255 = vadd.f32 0.0, %v1254
        %v1256 = vpop.f32.mrf.mxu0
        %1257 = vmatprep.mubr.bf16.mxu0 0
        %1258 = vmatmul.mubr.bf16.gmra.mxu0 %v748
        %v1259 = vpop.f32.mrf.mxu0
        %v1260 = vadd.f32 0.0, %v1259
        %v1261 = vpop.f32.mrf.mxu0
        %v1262 = vpop.f32.mrf.mxu0
        %v1263 = vadd.f32 0.0, %v1262
        %v1264 = vpop.f32.mrf.mxu0
        %1265 = vmatprep.mubr.bf16.mxu0 0
        %1266 = vmatmul.mubr.bf16.gmra.mxu0 %v749
        %v1267 = vpop.f32.mrf.mxu0
        %v1268 = vadd.f32 0.0, %v1267
        %v1269 = vpop.f32.mrf.mxu0
        %v1270 = vpop.f32.mrf.mxu0
        %v1271 = vadd.f32 0.0, %v1270
        %v1272 = vpop.f32.mrf.mxu0
        %1273 = vmatprep.mubr.bf16.mxu0 0
        %1274 = vmatmul.mubr.bf16.gmra.mxu0 %v750
        %v1275 = vpop.f32.mrf.mxu0
        %v1276 = vadd.f32 0.0, %v1275
        %v1277 = vpop.f32.mrf.mxu0
        %v1278 = vpop.f32.mrf.mxu0
        %v1279 = vadd.f32 0.0, %v1278
        %v1280 = vpop.f32.mrf.mxu0
        %1281 = vmatprep.mubr.bf16.mxu0 0
        %1282 = vmatmul.mubr.bf16.gmra.mxu0 %v751
        %v1283 = vpop.f32.mrf.mxu0
        %v1284 = vadd.f32 0.0, %v1283
        %v1285 = vpop.f32.mrf.mxu0
        %v1286 = vpop.f32.mrf.mxu0
        %v1287 = vadd.f32 0.0, %v1286
        %v1288 = vpop.f32.mrf.mxu0
        %1289 = vmatprep.mubr.bf16.mxu0 0
        %1290 = vmatmul.mubr.bf16.gmra.mxu0 %v752
        %v1291 = vpop.f32.mrf.mxu0
        %v1292 = vadd.f32 0.0, %v1291
        %v1293 = vpop.f32.mrf.mxu0
        %v1294 = vpop.f32.mrf.mxu0
        %v1295 = vadd.f32 0.0, %v1294
        %v1296 = vpop.f32.mrf.mxu0
        %1297 = vmatprep.mubr.bf16.mxu0 0
        %1298 = vmatmul.mubr.bf16.gmra.mxu0 %v753
        %v1299 = vpop.f32.mrf.mxu0
        %v1300 = vadd.f32 0.0, %v1299
        %v1301 = vpop.f32.mrf.mxu0
        %v1302 = vpop.f32.mrf.mxu0
        %v1303 = vadd.f32 0.0, %v1302
        %v1304 = vpop.f32.mrf.mxu0
        %1305 = vmatprep.mubr.bf16.mxu0 0
        %1306 = vmatmul.mubr.bf16.gmra.mxu0 %v754
        %v1307 = vpop.f32.mrf.mxu0
        %v1308 = vadd.f32 0.0, %v1307
        %v1309 = vpop.f32.mrf.mxu0
        %v1310 = vpop.f32.mrf.mxu0
        %v1311 = vadd.f32 0.0, %v1310
        %v1312 = vpop.f32.mrf.mxu0
        %1313 = vmatprep.mubr.bf16.mxu0 0
        %1314 = vmatmul.mubr.bf16.gmra.mxu0 %v755
        %v1315 = vpop.f32.mrf.mxu0
        %v1316 = vadd.f32 0.0, %v1315
        %v1317 = vpop.f32.mrf.mxu0
        %v1318 = vpop.f32.mrf.mxu0
        %v1319 = vadd.f32 0.0, %v1318
        %v1320 = vpop.f32.mrf.mxu0
        %1321 = vmatprep.mubr.bf16.mxu0 0
        %1322 = vmatmul.mubr.bf16.gmra.mxu0 %v756
        %v1323 = vpop.f32.mrf.mxu0
        %v1324 = vadd.f32 0.0, %v1323
        %v1325 = vpop.f32.mrf.mxu0
        %v1326 = vpop.f32.mrf.mxu0
        %v1327 = vadd.f32 0.0, %v1326
        %v1328 = vpop.f32.mrf.mxu0
        %1329 = vmatprep.mubr.bf16.mxu0 0
        %1330 = vmatmul.mubr.bf16.gmra.mxu0 %v757
        %v1331 = vpop.f32.mrf.mxu0
        %v1332 = vadd.f32 0.0, %v1331
        %v1333 = vpop.f32.mrf.mxu0
        %v1334 = vpop.f32.mrf.mxu0
        %v1335 = vadd.f32 0.0, %v1334
        %v1336 = vpop.f32.mrf.mxu0
        %1337 = vmatprep.mubr.bf16.mxu0 0
        %1338 = vmatmul.mubr.bf16.gmra.mxu0 %v758
        %v1339 = vpop.f32.mrf.mxu0
        %v1340 = vadd.f32 0.0, %v1339
        %v1341 = vpop.f32.mrf.mxu0
        %v1342 = vpop.f32.mrf.mxu0
        %v1343 = vadd.f32 0.0, %v1342
        %v1344 = vpop.f32.mrf.mxu0
        %1345 = vmatprep.mubr.bf16.mxu0 0
        %1346 = vmatmul.mubr.bf16.gmra.mxu0 %v759
        %v1347 = vpop.f32.mrf.mxu0
        %v1348 = vadd.f32 0.0, %v1347
        %v1349 = vpop.f32.mrf.mxu0
        %v1350 = vpop.f32.mrf.mxu0
        %v1351 = vadd.f32 0.0, %v1350
        %v1352 = vpop.f32.mrf.mxu0
        %1353 = vmatprep.mubr.bf16.mxu0 0
        %1354 = vmatmul.mubr.bf16.gmra.mxu0 %v760
        %v1355 = vpop.f32.mrf.mxu0
        %v1356 = vadd.f32 0.0, %v1355
        %v1357 = vpop.f32.mrf.mxu0
        %v1358 = vpop.f32.mrf.mxu0
        %v1359 = vadd.f32 0.0, %v1358
        %v1360 = vpop.f32.mrf.mxu0
        %1361 = vmatprep.mubr.bf16.mxu0 0
        %1362 = vmatmul.mubr.bf16.gmra.mxu0 %v761
        %v1363 = vpop.f32.mrf.mxu0
        %v1364 = vadd.f32 0.0, %v1363
        %v1365 = vpop.f32.mrf.mxu0
        %v1366 = vpop.f32.mrf.mxu0
        %v1367 = vadd.f32 0.0, %v1366
        %v1368 = vpop.f32.mrf.mxu0
        %1369 = vmatprep.mubr.bf16.mxu0 0
        %1370 = vmatmul.mubr.bf16.gmra.mxu0 %v762
        %v1371 = vpop.f32.mrf.mxu0
        %v1372 = vadd.f32 0.0, %v1371
        %v1373 = vpop.f32.mrf.mxu0
        %v1374 = vpop.f32.mrf.mxu0
        %v1375 = vadd.f32 0.0, %v1374
        %v1376 = vpop.f32.mrf.mxu0
        %1377 = vmatprep.mubr.bf16.mxu0 0
        %1378 = vmatmul.mubr.bf16.gmra.mxu0 %v763
        %v1379 = vpop.f32.mrf.mxu0
        %v1380 = vadd.f32 0.0, %v1379
        %v1381 = vpop.f32.mrf.mxu0
        %v1382 = vpop.f32.mrf.mxu0
        %v1383 = vadd.f32 0.0, %v1382
        %v1384 = vpop.f32.mrf.mxu0
        %1385 = vmatprep.mubr.bf16.mxu0 0
        %1386 = vmatmul.mubr.bf16.gmra.mxu0 %v764
        %v1387 = vpop.f32.mrf.mxu0
        %v1388 = vadd.f32 0.0, %v1387
        %v1389 = vpop.f32.mrf.mxu0
        %v1390 = vpop.f32.mrf.mxu0
        %v1391 = vadd.f32 0.0, %v1390
        %v1392 = vpop.f32.mrf.mxu0
        %1393 = vmatprep.mubr.bf16.mxu0 0
        %1394 = vmatmul.mubr.bf16.gmra.mxu0 %v765
        %v1395 = vpop.f32.mrf.mxu0
        %v1396 = vadd.f32 0.0, %v1395
        %v1397 = vpop.f32.mrf.mxu0
        %v1398 = vpop.f32.mrf.mxu0
        %v1399 = vadd.f32 0.0, %v1398
        %v1400 = vpop.f32.mrf.mxu0
        %1401 = vmatprep.mubr.bf16.mxu0 0
        %1402 = vmatmul.mubr.bf16.gmra.mxu0 %v766
        %v1403 = vpop.f32.mrf.mxu0
        %v1404 = vadd.f32 0.0, %v1403
        %v1405 = vpop.f32.mrf.mxu0
        %v1406 = vpop.f32.mrf.mxu0
        %v1407 = vadd.f32 0.0, %v1406
        %v1408 = vpop.f32.mrf.mxu0
        %1409 = vmatprep.mubr.bf16.mxu0 0
        %1410 = vmatmul.mubr.bf16.gmra.mxu0 %v767
        %v1411 = vpop.f32.mrf.mxu0
        %v1412 = vadd.f32 0.0, %v1411
        %v1413 = vpop.f32.mrf.mxu0
        %v1414 = vpop.f32.mrf.mxu0
        %v1415 = vadd.f32 0.0, %v1414
        %v1416 = vpop.f32.mrf.mxu0
        %1417 = vmatprep.mubr.bf16.mxu0 0
        %1418 = vmatmul.mubr.bf16.gmra.mxu0 %v768
        %v1419 = vpop.f32.mrf.mxu0
        %v1420 = vadd.f32 0.0, %v1419
        %v1421 = vpop.f32.mrf.mxu0
        %v1422 = vpop.f32.mrf.mxu0
        %v1423 = vadd.f32 0.0, %v1422
        %v1424 = vpop.f32.mrf.mxu0
        %1425 = vdwg.mxu0
        %v1430 = vunpack.c.l.b16 %v284
        %v1431 = vunpack.c.l.b16 %v285
        %v1432 = vunpack.c.l.b16 %v286
        %v1433 = vunpack.c.l.b16 %v287
        %v1434 = vpack.c.b16 %v1431, %v1430
        %v1435 = vpack.c.b16 %v1433, %v1432
        %v1454 = vunpack.c.l.b16 %v412
        %v1455 = vunpack.c.l.b16 %v413
        %v1456 = vunpack.c.l.b16 %v414
        %v1457 = vunpack.c.l.b16 %v415
        %v1458 = vunpack.c.l.b16 %v416
        %v1459 = vunpack.c.l.b16 %v417
        %v1460 = vunpack.c.l.b16 %v418
        %v1461 = vunpack.c.l.b16 %v419
        %v1462 = vunpack.c.l.b16 %v420
        %v1463 = vunpack.c.l.b16 %v421
        %v1464 = vunpack.c.l.b16 %v422
        %v1465 = vunpack.c.l.b16 %v423
        %v1466 = vunpack.c.l.b16 %v424
        %v1467 = vunpack.c.l.b16 %v425
        %v1468 = vunpack.c.l.b16 %v426
        %v1469 = vunpack.c.l.b16 %v427
        %v1470 = vpack.c.b16 %v1455, %v1454
        %v1471 = vpack.c.b16 %v1457, %v1456
        %v1472 = vpack.c.b16 %v1459, %v1458
        %v1473 = vpack.c.b16 %v1461, %v1460
        %v1474 = vpack.c.b16 %v1463, %v1462
        %v1475 = vpack.c.b16 %v1465, %v1464
        %v1476 = vpack.c.b16 %v1467, %v1466
        %v1477 = vpack.c.b16 %v1469, %v1468
        %1486 = vmatprep.subr.bf16.mxu0 0
        %1487 = vmatpush1.bf16.msra.mxu0 %v1477
        %1488 = vmatprep.subr.bf16.mxu0 0
        %1489 = vmatpush1.bf16.msra.mxu0 %v1476
        %1490 = vmatprep.subr.bf16.mxu0 0
        %1491 = vmatpush1.bf16.msra.mxu0 %v1475
        %1492 = vmatprep.subr.bf16.mxu0 0
        %1493 = vmatpush1.bf16.msra.mxu0 %v1474
        %1494 = vmatprep.subr.bf16.mxu0 0
        %1495 = vmatpush1.bf16.msra.mxu0 %v1473
        %1496 = vmatprep.subr.bf16.mxu0 0
        %1497 = vmatpush1.bf16.msra.mxu0 %v1472
        %1498 = vmatprep.subr.bf16.mxu0 0
        %1499 = vmatpush1.bf16.msra.mxu0 %v1471
        %1500 = vmatprep.subr.bf16.mxu0 0
        %1501 = vmatpush1.bf16.msra.mxu0 %v1470
        %1502 = vmatprep.subr.bf16.mxu0 0
        %1503 = vmatpush2.bf16.msra.mxu0 0
        %1504 = vmatprep.subr.bf16.mxu0 0
        %1505 = vmatpush2.bf16.msra.mxu0 0
        %1506 = vmatprep.subr.bf16.mxu0 0
        %1507 = vmatpush2.bf16.msra.mxu0 0
        %1508 = vmatprep.subr.bf16.mxu0 0
        %1509 = vmatpush2.bf16.msra.mxu0 0
        %1510 = vmatprep.subr.bf16.mxu0 0
        %1511 = vmatpush2.bf16.msra.mxu0 0
        %1512 = vmatprep.subr.bf16.mxu0 0
        %1513 = vmatpush2.bf16.msra.mxu0 0
        %1514 = vmatprep.subr.bf16.mxu0 0
        %1515 = vmatpush2.bf16.msra.mxu0 0
        %1516 = vmatprep.subr.bf16.mxu0 0
        %1517 = vmatpush2.bf16.msra.mxu0 0
        %1518 = vmatprep.mubr.bf16.mxu0 0
        %1519 = vmatmul.mubr.bf16.gmra.mxu0 %v1434
        %v1520 = vpop.f32.mrf.mxu0
        %v1521 = vadd.f32 %v916, %v1520
        %v1522 = vpop.f32.mrf.mxu0
        %v1523 = vpop.f32.mrf.mxu0
        %v1524 = vadd.f32 %v919, %v1523
        %v1525 = vpop.f32.mrf.mxu0
        %1526 = vmatprep.mubr.bf16.mxu0 0
        %1527 = vmatmul.mubr.bf16.gmra.mxu0 %v1435
        %v1528 = vpop.f32.mrf.mxu0
        %v1529 = vadd.f32 %v924, %v1528
        %v1530 = vpop.f32.mrf.mxu0
        %v1531 = vpop.f32.mrf.mxu0
        %v1532 = vadd.f32 %v927, %v1531
        %v1533 = vpop.f32.mrf.mxu0
        %1534 = vmatprep.mubr.bf16.mxu0 0
        %1535 = vmatmul.mubr.bf16.gmra.mxu0 %v705
        %v1536 = vpop.f32.mrf.mxu0
        %v1537 = vadd.f32 %v932, %v1536
        %v1538 = vpop.f32.mrf.mxu0
        %v1539 = vpop.f32.mrf.mxu0
        %v1540 = vadd.f32 %v935, %v1539
        %v1541 = vpop.f32.mrf.mxu0
        %1542 = vmatprep.mubr.bf16.mxu0 0
        %1543 = vmatmul.mubr.bf16.gmra.mxu0 %v706
        %v1544 = vpop.f32.mrf.mxu0
        %v1545 = vadd.f32 %v940, %v1544
        %v1546 = vpop.f32.mrf.mxu0
        %v1547 = vpop.f32.mrf.mxu0
        %v1548 = vadd.f32 %v943, %v1547
        %v1549 = vpop.f32.mrf.mxu0
        %1550 = vmatprep.mubr.bf16.mxu0 0
        %1551 = vmatmul.mubr.bf16.gmra.mxu0 %v707
        %v1552 = vpop.f32.mrf.mxu0
        %v1553 = vadd.f32 %v948, %v1552
        %v1554 = vpop.f32.mrf.mxu0
        %v1555 = vpop.f32.mrf.mxu0
        %v1556 = vadd.f32 %v951, %v1555
        %v1557 = vpop.f32.mrf.mxu0
        %1558 = vmatprep.mubr.bf16.mxu0 0
        %1559 = vmatmul.mubr.bf16.gmra.mxu0 %v708
        %v1560 = vpop.f32.mrf.mxu0
        %v1561 = vadd.f32 %v956, %v1560
        %v1562 = vpop.f32.mrf.mxu0
        %v1563 = vpop.f32.mrf.mxu0
        %v1564 = vadd.f32 %v959, %v1563
        %v1565 = vpop.f32.mrf.mxu0
        %1566 = vmatprep.mubr.bf16.mxu0 0
        %1567 = vmatmul.mubr.bf16.gmra.mxu0 %v709
        %v1568 = vpop.f32.mrf.mxu0
        %v1569 = vadd.f32 %v964, %v1568
        %v1570 = vpop.f32.mrf.mxu0
        %v1571 = vpop.f32.mrf.mxu0
        %v1572 = vadd.f32 %v967, %v1571
        %v1573 = vpop.f32.mrf.mxu0
        %1574 = vmatprep.mubr.bf16.mxu0 0
        %1575 = vmatmul.mubr.bf16.gmra.mxu0 %v710
        %v1576 = vpop.f32.mrf.mxu0
        %v1577 = vadd.f32 %v972, %v1576
        %v1578 = vpop.f32.mrf.mxu0
        %v1579 = vpop.f32.mrf.mxu0
        %v1580 = vadd.f32 %v975, %v1579
        %v1581 = vpop.f32.mrf.mxu0
        %1582 = vmatprep.mubr.bf16.mxu0 0
        %1583 = vmatmul.mubr.bf16.gmra.mxu0 %v711
        %v1584 = vpop.f32.mrf.mxu0
        %v1585 = vadd.f32 %v980, %v1584
        %v1586 = vpop.f32.mrf.mxu0
        %v1587 = vpop.f32.mrf.mxu0
        %v1588 = vadd.f32 %v983, %v1587
        %v1589 = vpop.f32.mrf.mxu0
        %1590 = vmatprep.mubr.bf16.mxu0 0
        %1591 = vmatmul.mubr.bf16.gmra.mxu0 %v712
        %v1592 = vpop.f32.mrf.mxu0
        %v1593 = vadd.f32 %v988, %v1592
        %v1594 = vpop.f32.mrf.mxu0
        %v1595 = vpop.f32.mrf.mxu0
        %v1596 = vadd.f32 %v991, %v1595
        %v1597 = vpop.f32.mrf.mxu0
        %1598 = vmatprep.mubr.bf16.mxu0 0
        %1599 = vmatmul.mubr.bf16.gmra.mxu0 %v713
        %v1600 = vpop.f32.mrf.mxu0
        %v1601 = vadd.f32 %v996, %v1600
        %v1602 = vpop.f32.mrf.mxu0
        %v1603 = vpop.f32.mrf.mxu0
        %v1604 = vadd.f32 %v999, %v1603
        %v1605 = vpop.f32.mrf.mxu0
        %1606 = vmatprep.mubr.bf16.mxu0 0
        %1607 = vmatmul.mubr.bf16.gmra.mxu0 %v714
        %v1608 = vpop.f32.mrf.mxu0
        %v1609 = vadd.f32 %v1004, %v1608
        %v1610 = vpop.f32.mrf.mxu0
        %v1611 = vpop.f32.mrf.mxu0
        %v1612 = vadd.f32 %v1007, %v1611
        %v1613 = vpop.f32.mrf.mxu0
        %1614 = vmatprep.mubr.bf16.mxu0 0
        %1615 = vmatmul.mubr.bf16.gmra.mxu0 %v715
        %v1616 = vpop.f32.mrf.mxu0
        %v1617 = vadd.f32 %v1012, %v1616
        %v1618 = vpop.f32.mrf.mxu0
        %v1619 = vpop.f32.mrf.mxu0
        %v1620 = vadd.f32 %v1015, %v1619
        %v1621 = vpop.f32.mrf.mxu0
        %1622 = vmatprep.mubr.bf16.mxu0 0
        %1623 = vmatmul.mubr.bf16.gmra.mxu0 %v716
        %v1624 = vpop.f32.mrf.mxu0
        %v1625 = vadd.f32 %v1020, %v1624
        %v1626 = vpop.f32.mrf.mxu0
        %v1627 = vpop.f32.mrf.mxu0
        %v1628 = vadd.f32 %v1023, %v1627
        %v1629 = vpop.f32.mrf.mxu0
        %1630 = vmatprep.mubr.bf16.mxu0 0
        %1631 = vmatmul.mubr.bf16.gmra.mxu0 %v717
        %v1632 = vpop.f32.mrf.mxu0
        %v1633 = vadd.f32 %v1028, %v1632
        %v1634 = vpop.f32.mrf.mxu0
        %v1635 = vpop.f32.mrf.mxu0
        %v1636 = vadd.f32 %v1031, %v1635
        %v1637 = vpop.f32.mrf.mxu0
        %1638 = vmatprep.mubr.bf16.mxu0 0
        %1639 = vmatmul.mubr.bf16.gmra.mxu0 %v718
        %v1640 = vpop.f32.mrf.mxu0
        %v1641 = vadd.f32 %v1036, %v1640
        %v1642 = vpop.f32.mrf.mxu0
        %v1643 = vpop.f32.mrf.mxu0
        %v1644 = vadd.f32 %v1039, %v1643
        %v1645 = vpop.f32.mrf.mxu0
        %1646 = vmatprep.mubr.bf16.mxu0 0
        %1647 = vmatmul.mubr.bf16.gmra.mxu0 %v719
        %v1648 = vpop.f32.mrf.mxu0
        %v1649 = vadd.f32 %v1044, %v1648
        %v1650 = vpop.f32.mrf.mxu0
        %v1651 = vpop.f32.mrf.mxu0
        %v1652 = vadd.f32 %v1047, %v1651
        %v1653 = vpop.f32.mrf.mxu0
        %1654 = vmatprep.mubr.bf16.mxu0 0
        %1655 = vmatmul.mubr.bf16.gmra.mxu0 %v720
        %v1656 = vpop.f32.mrf.mxu0
        %v1657 = vadd.f32 %v1052, %v1656
        %v1658 = vpop.f32.mrf.mxu0
        %v1659 = vpop.f32.mrf.mxu0
        %v1660 = vadd.f32 %v1055, %v1659
        %v1661 = vpop.f32.mrf.mxu0
        %1662 = vmatprep.mubr.bf16.mxu0 0
        %1663 = vmatmul.mubr.bf16.gmra.mxu0 %v721
        %v1664 = vpop.f32.mrf.mxu0
        %v1665 = vadd.f32 %v1060, %v1664
        %v1666 = vpop.f32.mrf.mxu0
        %v1667 = vpop.f32.mrf.mxu0
        %v1668 = vadd.f32 %v1063, %v1667
        %v1669 = vpop.f32.mrf.mxu0
        %1670 = vmatprep.mubr.bf16.mxu0 0
        %1671 = vmatmul.mubr.bf16.gmra.mxu0 %v722
        %v1672 = vpop.f32.mrf.mxu0
        %v1673 = vadd.f32 %v1068, %v1672
        %v1674 = vpop.f32.mrf.mxu0
        %v1675 = vpop.f32.mrf.mxu0
        %v1676 = vadd.f32 %v1071, %v1675
        %v1677 = vpop.f32.mrf.mxu0
        %1678 = vmatprep.mubr.bf16.mxu0 0
        %1679 = vmatmul.mubr.bf16.gmra.mxu0 %v723
        %v1680 = vpop.f32.mrf.mxu0
        %v1681 = vadd.f32 %v1076, %v1680
        %v1682 = vpop.f32.mrf.mxu0
        %v1683 = vpop.f32.mrf.mxu0
        %v1684 = vadd.f32 %v1079, %v1683
        %v1685 = vpop.f32.mrf.mxu0
        %1686 = vmatprep.mubr.bf16.mxu0 0
        %1687 = vmatmul.mubr.bf16.gmra.mxu0 %v724
        %v1688 = vpop.f32.mrf.mxu0
        %v1689 = vadd.f32 %v1084, %v1688
        %v1690 = vpop.f32.mrf.mxu0
        %v1691 = vpop.f32.mrf.mxu0
        %v1692 = vadd.f32 %v1087, %v1691
        %v1693 = vpop.f32.mrf.mxu0
        %1694 = vmatprep.mubr.bf16.mxu0 0
        %1695 = vmatmul.mubr.bf16.gmra.mxu0 %v725
        %v1696 = vpop.f32.mrf.mxu0
        %v1697 = vadd.f32 %v1092, %v1696
        %v1698 = vpop.f32.mrf.mxu0
        %v1699 = vpop.f32.mrf.mxu0
        %v1700 = vadd.f32 %v1095, %v1699
        %v1701 = vpop.f32.mrf.mxu0
        %1702 = vmatprep.mubr.bf16.mxu0 0
        %1703 = vmatmul.mubr.bf16.gmra.mxu0 %v726
        %v1704 = vpop.f32.mrf.mxu0
        %v1705 = vadd.f32 %v1100, %v1704
        %v1706 = vpop.f32.mrf.mxu0
        %v1707 = vpop.f32.mrf.mxu0
        %v1708 = vadd.f32 %v1103, %v1707
        %v1709 = vpop.f32.mrf.mxu0
        %1710 = vmatprep.mubr.bf16.mxu0 0
        %1711 = vmatmul.mubr.bf16.gmra.mxu0 %v727
        %v1712 = vpop.f32.mrf.mxu0
        %v1713 = vadd.f32 %v1108, %v1712
        %v1714 = vpop.f32.mrf.mxu0
        %v1715 = vpop.f32.mrf.mxu0
        %v1716 = vadd.f32 %v1111, %v1715
        %v1717 = vpop.f32.mrf.mxu0
        %1718 = vmatprep.mubr.bf16.mxu0 0
        %1719 = vmatmul.mubr.bf16.gmra.mxu0 %v728
        %v1720 = vpop.f32.mrf.mxu0
        %v1721 = vadd.f32 %v1116, %v1720
        %v1722 = vpop.f32.mrf.mxu0
        %v1723 = vpop.f32.mrf.mxu0
        %v1724 = vadd.f32 %v1119, %v1723
        %v1725 = vpop.f32.mrf.mxu0
        %1726 = vmatprep.mubr.bf16.mxu0 0
        %1727 = vmatmul.mubr.bf16.gmra.mxu0 %v729
        %v1728 = vpop.f32.mrf.mxu0
        %v1729 = vadd.f32 %v1124, %v1728
        %v1730 = vpop.f32.mrf.mxu0
        %v1731 = vpop.f32.mrf.mxu0
        %v1732 = vadd.f32 %v1127, %v1731
        %v1733 = vpop.f32.mrf.mxu0
        %1734 = vmatprep.mubr.bf16.mxu0 0
        %1735 = vmatmul.mubr.bf16.gmra.mxu0 %v730
        %v1736 = vpop.f32.mrf.mxu0
        %v1737 = vadd.f32 %v1132, %v1736
        %v1738 = vpop.f32.mrf.mxu0
        %v1739 = vpop.f32.mrf.mxu0
        %v1740 = vadd.f32 %v1135, %v1739
        %v1741 = vpop.f32.mrf.mxu0
        %1742 = vmatprep.mubr.bf16.mxu0 0
        %1743 = vmatmul.mubr.bf16.gmra.mxu0 %v731
        %v1744 = vpop.f32.mrf.mxu0
        %v1745 = vadd.f32 %v1140, %v1744
        %v1746 = vpop.f32.mrf.mxu0
        %v1747 = vpop.f32.mrf.mxu0
        %v1748 = vadd.f32 %v1143, %v1747
        %v1749 = vpop.f32.mrf.mxu0
        %1750 = vmatprep.mubr.bf16.mxu0 0
        %1751 = vmatmul.mubr.bf16.gmra.mxu0 %v732
        %v1752 = vpop.f32.mrf.mxu0
        %v1753 = vadd.f32 %v1148, %v1752
        %v1754 = vpop.f32.mrf.mxu0
        %v1755 = vpop.f32.mrf.mxu0
        %v1756 = vadd.f32 %v1151, %v1755
        %v1757 = vpop.f32.mrf.mxu0
        %1758 = vmatprep.mubr.bf16.mxu0 0
        %1759 = vmatmul.mubr.bf16.gmra.mxu0 %v733
        %v1760 = vpop.f32.mrf.mxu0
        %v1761 = vadd.f32 %v1156, %v1760
        %v1762 = vpop.f32.mrf.mxu0
        %v1763 = vpop.f32.mrf.mxu0
        %v1764 = vadd.f32 %v1159, %v1763
        %v1765 = vpop.f32.mrf.mxu0
        %1766 = vmatprep.mubr.bf16.mxu0 0
        %1767 = vmatmul.mubr.bf16.gmra.mxu0 %v734
        %v1768 = vpop.f32.mrf.mxu0
        %v1769 = vadd.f32 %v1164, %v1768
        %v1770 = vpop.f32.mrf.mxu0
        %v1771 = vpop.f32.mrf.mxu0
        %v1772 = vadd.f32 %v1167, %v1771
        %v1773 = vpop.f32.mrf.mxu0
        %1774 = vmatprep.mubr.bf16.mxu0 0
        %1775 = vmatmul.mubr.bf16.gmra.mxu0 %v735
        %v1776 = vpop.f32.mrf.mxu0
        %v1777 = vadd.f32 %v1172, %v1776
        %v1778 = vpop.f32.mrf.mxu0
        %v1779 = vpop.f32.mrf.mxu0
        %v1780 = vadd.f32 %v1175, %v1779
        %v1781 = vpop.f32.mrf.mxu0
        %1782 = vmatprep.mubr.bf16.mxu0 0
        %1783 = vmatmul.mubr.bf16.gmra.mxu0 %v736
        %v1784 = vpop.f32.mrf.mxu0
        %v1785 = vadd.f32 %v1180, %v1784
        %v1786 = vpop.f32.mrf.mxu0
        %v1787 = vpop.f32.mrf.mxu0
        %v1788 = vadd.f32 %v1183, %v1787
        %v1789 = vpop.f32.mrf.mxu0
        %1790 = vmatprep.mubr.bf16.mxu0 0
        %1791 = vmatmul.mubr.bf16.gmra.mxu0 %v737
        %v1792 = vpop.f32.mrf.mxu0
        %v1793 = vadd.f32 %v1188, %v1792
        %v1794 = vpop.f32.mrf.mxu0
        %v1795 = vpop.f32.mrf.mxu0
        %v1796 = vadd.f32 %v1191, %v1795
        %v1797 = vpop.f32.mrf.mxu0
        %1798 = vmatprep.mubr.bf16.mxu0 0
        %1799 = vmatmul.mubr.bf16.gmra.mxu0 %v738
        %v1800 = vpop.f32.mrf.mxu0
        %v1801 = vadd.f32 %v1196, %v1800
        %v1802 = vpop.f32.mrf.mxu0
        %v1803 = vpop.f32.mrf.mxu0
        %v1804 = vadd.f32 %v1199, %v1803
        %v1805 = vpop.f32.mrf.mxu0
        %1806 = vmatprep.mubr.bf16.mxu0 0
        %1807 = vmatmul.mubr.bf16.gmra.mxu0 %v739
        %v1808 = vpop.f32.mrf.mxu0
        %v1809 = vadd.f32 %v1204, %v1808
        %v1810 = vpop.f32.mrf.mxu0
        %v1811 = vpop.f32.mrf.mxu0
        %v1812 = vadd.f32 %v1207, %v1811
        %v1813 = vpop.f32.mrf.mxu0
        %1814 = vmatprep.mubr.bf16.mxu0 0
        %1815 = vmatmul.mubr.bf16.gmra.mxu0 %v740
        %v1816 = vpop.f32.mrf.mxu0
        %v1817 = vadd.f32 %v1212, %v1816
        %v1818 = vpop.f32.mrf.mxu0
        %v1819 = vpop.f32.mrf.mxu0
        %v1820 = vadd.f32 %v1215, %v1819
        %v1821 = vpop.f32.mrf.mxu0
        %1822 = vmatprep.mubr.bf16.mxu0 0
        %1823 = vmatmul.mubr.bf16.gmra.mxu0 %v741
        %v1824 = vpop.f32.mrf.mxu0
        %v1825 = vadd.f32 %v1220, %v1824
        %v1826 = vpop.f32.mrf.mxu0
        %v1827 = vpop.f32.mrf.mxu0
        %v1828 = vadd.f32 %v1223, %v1827
        %v1829 = vpop.f32.mrf.mxu0
        %1830 = vmatprep.mubr.bf16.mxu0 0
        %1831 = vmatmul.mubr.bf16.gmra.mxu0 %v742
        %v1832 = vpop.f32.mrf.mxu0
        %v1833 = vadd.f32 %v1228, %v1832
        %v1834 = vpop.f32.mrf.mxu0
        %v1835 = vpop.f32.mrf.mxu0
        %v1836 = vadd.f32 %v1231, %v1835
        %v1837 = vpop.f32.mrf.mxu0
        %1838 = vmatprep.mubr.bf16.mxu0 0
        %1839 = vmatmul.mubr.bf16.gmra.mxu0 %v743
        %v1840 = vpop.f32.mrf.mxu0
        %v1841 = vadd.f32 %v1236, %v1840
        %v1842 = vpop.f32.mrf.mxu0
        %v1843 = vpop.f32.mrf.mxu0
        %v1844 = vadd.f32 %v1239, %v1843
        %v1845 = vpop.f32.mrf.mxu0
        %1846 = vmatprep.mubr.bf16.mxu0 0
        %1847 = vmatmul.mubr.bf16.gmra.mxu0 %v744
        %v1848 = vpop.f32.mrf.mxu0
        %v1849 = vadd.f32 %v1244, %v1848
        %v1850 = vpop.f32.mrf.mxu0
        %v1851 = vpop.f32.mrf.mxu0
        %v1852 = vadd.f32 %v1247, %v1851
        %v1853 = vpop.f32.mrf.mxu0
        %1854 = vmatprep.mubr.bf16.mxu0 0
        %1855 = vmatmul.mubr.bf16.gmra.mxu0 %v745
        %v1856 = vpop.f32.mrf.mxu0
        %v1857 = vadd.f32 %v1252, %v1856
        %v1858 = vpop.f32.mrf.mxu0
        %v1859 = vpop.f32.mrf.mxu0
        %v1860 = vadd.f32 %v1255, %v1859
        %v1861 = vpop.f32.mrf.mxu0
        %1862 = vmatprep.mubr.bf16.mxu0 0
        %1863 = vmatmul.mubr.bf16.gmra.mxu0 %v746
        %v1864 = vpop.f32.mrf.mxu0
        %v1865 = vadd.f32 %v1260, %v1864
        %v1866 = vpop.f32.mrf.mxu0
        %v1867 = vpop.f32.mrf.mxu0
        %v1868 = vadd.f32 %v1263, %v1867
        %v1869 = vpop.f32.mrf.mxu0
        %1870 = vmatprep.mubr.bf16.mxu0 0
        %1871 = vmatmul.mubr.bf16.gmra.mxu0 %v747
        %v1872 = vpop.f32.mrf.mxu0
        %v1873 = vadd.f32 %v1268, %v1872
        %v1874 = vpop.f32.mrf.mxu0
        %v1875 = vpop.f32.mrf.mxu0
        %v1876 = vadd.f32 %v1271, %v1875
        %v1877 = vpop.f32.mrf.mxu0
        %1878 = vmatprep.mubr.bf16.mxu0 0
        %1879 = vmatmul.mubr.bf16.gmra.mxu0 %v748
        %v1880 = vpop.f32.mrf.mxu0
        %v1881 = vadd.f32 %v1276, %v1880
        %v1882 = vpop.f32.mrf.mxu0
        %v1883 = vpop.f32.mrf.mxu0
        %v1884 = vadd.f32 %v1279, %v1883
        %v1885 = vpop.f32.mrf.mxu0
        %1886 = vmatprep.mubr.bf16.mxu0 0
        %1887 = vmatmul.mubr.bf16.gmra.mxu0 %v749
        %v1888 = vpop.f32.mrf.mxu0
        %v1889 = vadd.f32 %v1284, %v1888
        %v1890 = vpop.f32.mrf.mxu0
        %v1891 = vpop.f32.mrf.mxu0
        %v1892 = vadd.f32 %v1287, %v1891
        %v1893 = vpop.f32.mrf.mxu0
        %1894 = vmatprep.mubr.bf16.mxu0 0
        %1895 = vmatmul.mubr.bf16.gmra.mxu0 %v750
        %v1896 = vpop.f32.mrf.mxu0
        %v1897 = vadd.f32 %v1292, %v1896
        %v1898 = vpop.f32.mrf.mxu0
        %v1899 = vpop.f32.mrf.mxu0
        %v1900 = vadd.f32 %v1295, %v1899
        %v1901 = vpop.f32.mrf.mxu0
        %1902 = vmatprep.mubr.bf16.mxu0 0
        %1903 = vmatmul.mubr.bf16.gmra.mxu0 %v751
        %v1904 = vpop.f32.mrf.mxu0
        %v1905 = vadd.f32 %v1300, %v1904
        %v1906 = vpop.f32.mrf.mxu0
        %v1907 = vpop.f32.mrf.mxu0
        %v1908 = vadd.f32 %v1303, %v1907
        %v1909 = vpop.f32.mrf.mxu0
        %1910 = vmatprep.mubr.bf16.mxu0 0
        %1911 = vmatmul.mubr.bf16.gmra.mxu0 %v752
        %v1912 = vpop.f32.mrf.mxu0
        %v1913 = vadd.f32 %v1308, %v1912
        %v1914 = vpop.f32.mrf.mxu0
        %v1915 = vpop.f32.mrf.mxu0
        %v1916 = vadd.f32 %v1311, %v1915
        %v1917 = vpop.f32.mrf.mxu0
        %1918 = vmatprep.mubr.bf16.mxu0 0
        %1919 = vmatmul.mubr.bf16.gmra.mxu0 %v753
        %v1920 = vpop.f32.mrf.mxu0
        %v1921 = vadd.f32 %v1316, %v1920
        %v1922 = vpop.f32.mrf.mxu0
        %v1923 = vpop.f32.mrf.mxu0
        %v1924 = vadd.f32 %v1319, %v1923
        %v1925 = vpop.f32.mrf.mxu0
        %1926 = vmatprep.mubr.bf16.mxu0 0
        %1927 = vmatmul.mubr.bf16.gmra.mxu0 %v754
        %v1928 = vpop.f32.mrf.mxu0
        %v1929 = vadd.f32 %v1324, %v1928
        %v1930 = vpop.f32.mrf.mxu0
        %v1931 = vpop.f32.mrf.mxu0
        %v1932 = vadd.f32 %v1327, %v1931
        %v1933 = vpop.f32.mrf.mxu0
        %1934 = vmatprep.mubr.bf16.mxu0 0
        %1935 = vmatmul.mubr.bf16.gmra.mxu0 %v755
        %v1936 = vpop.f32.mrf.mxu0
        %v1937 = vadd.f32 %v1332, %v1936
        %v1938 = vpop.f32.mrf.mxu0
        %v1939 = vpop.f32.mrf.mxu0
        %v1940 = vadd.f32 %v1335, %v1939
        %v1941 = vpop.f32.mrf.mxu0
        %1942 = vmatprep.mubr.bf16.mxu0 0
        %1943 = vmatmul.mubr.bf16.gmra.mxu0 %v756
        %v1944 = vpop.f32.mrf.mxu0
        %v1945 = vadd.f32 %v1340, %v1944
        %v1946 = vpop.f32.mrf.mxu0
        %v1947 = vpop.f32.mrf.mxu0
        %v1948 = vadd.f32 %v1343, %v1947
        %v1949 = vpop.f32.mrf.mxu0
        %1950 = vmatprep.mubr.bf16.mxu0 0
        %1951 = vmatmul.mubr.bf16.gmra.mxu0 %v757
        %v1952 = vpop.f32.mrf.mxu0
        %v1953 = vadd.f32 %v1348, %v1952
        %v1954 = vpop.f32.mrf.mxu0
        %v1955 = vpop.f32.mrf.mxu0
        %v1956 = vadd.f32 %v1351, %v1955
        %v1957 = vpop.f32.mrf.mxu0
        %1958 = vmatprep.mubr.bf16.mxu0 0
        %1959 = vmatmul.mubr.bf16.gmra.mxu0 %v758
        %v1960 = vpop.f32.mrf.mxu0
        %v1961 = vadd.f32 %v1356, %v1960
        %v1962 = vpop.f32.mrf.mxu0
        %v1963 = vpop.f32.mrf.mxu0
        %v1964 = vadd.f32 %v1359, %v1963
        %v1965 = vpop.f32.mrf.mxu0
        %1966 = vmatprep.mubr.bf16.mxu0 0
        %1967 = vmatmul.mubr.bf16.gmra.mxu0 %v759
        %v1968 = vpop.f32.mrf.mxu0
        %v1969 = vadd.f32 %v1364, %v1968
        %v1970 = vpop.f32.mrf.mxu0
        %v1971 = vpop.f32.mrf.mxu0
        %v1972 = vadd.f32 %v1367, %v1971
        %v1973 = vpop.f32.mrf.mxu0
        %1974 = vmatprep.mubr.bf16.mxu0 0
        %1975 = vmatmul.mubr.bf16.gmra.mxu0 %v760
        %v1976 = vpop.f32.mrf.mxu0
        %v1977 = vadd.f32 %v1372, %v1976
        %v1978 = vpop.f32.mrf.mxu0
        %v1979 = vpop.f32.mrf.mxu0
        %v1980 = vadd.f32 %v1375, %v1979
        %v1981 = vpop.f32.mrf.mxu0
        %1982 = vmatprep.mubr.bf16.mxu0 0
        %1983 = vmatmul.mubr.bf16.gmra.mxu0 %v761
        %v1984 = vpop.f32.mrf.mxu0
        %v1985 = vadd.f32 %v1380, %v1984
        %v1986 = vpop.f32.mrf.mxu0
        %v1987 = vpop.f32.mrf.mxu0
        %v1988 = vadd.f32 %v1383, %v1987
        %v1989 = vpop.f32.mrf.mxu0
        %1990 = vmatprep.mubr.bf16.mxu0 0
        %1991 = vmatmul.mubr.bf16.gmra.mxu0 %v762
        %v1992 = vpop.f32.mrf.mxu0
        %v1993 = vadd.f32 %v1388, %v1992
        %v1994 = vpop.f32.mrf.mxu0
        %v1995 = vpop.f32.mrf.mxu0
        %v1996 = vadd.f32 %v1391, %v1995
        %v1997 = vpop.f32.mrf.mxu0
        %1998 = vmatprep.mubr.bf16.mxu0 0
        %1999 = vmatmul.mubr.bf16.gmra.mxu0 %v763
        %v2000 = vpop.f32.mrf.mxu0
        %v2001 = vadd.f32 %v1396, %v2000
        %v2002 = vpop.f32.mrf.mxu0
        %v2003 = vpop.f32.mrf.mxu0
        %v2004 = vadd.f32 %v1399, %v2003
        %v2005 = vpop.f32.mrf.mxu0
        %2006 = vmatprep.mubr.bf16.mxu0 0
        %2007 = vmatmul.mubr.bf16.gmra.mxu0 %v764
        %v2008 = vpop.f32.mrf.mxu0
        %v2009 = vadd.f32 %v1404, %v2008
        %v2010 = vpop.f32.mrf.mxu0
        %v2011 = vpop.f32.mrf.mxu0
        %v2012 = vadd.f32 %v1407, %v2011
        %v2013 = vpop.f32.mrf.mxu0
        %2014 = vmatprep.mubr.bf16.mxu0 0
        %2015 = vmatmul.mubr.bf16.gmra.mxu0 %v765
        %v2016 = vpop.f32.mrf.mxu0
        %v2017 = vadd.f32 %v1412, %v2016
        %v2018 = vpop.f32.mrf.mxu0
        %v2019 = vpop.f32.mrf.mxu0
        %v2020 = vadd.f32 %v1415, %v2019
        %v2021 = vpop.f32.mrf.mxu0
        %2022 = vmatprep.mubr.bf16.mxu0 0
        %2023 = vmatmul.mubr.bf16.gmra.mxu0 %v766
        %v2024 = vpop.f32.mrf.mxu0
        %v2025 = vadd.f32 %v1420, %v2024
        %v2026 = vpop.f32.mrf.mxu0
        %v2027 = vpop.f32.mrf.mxu0
        %v2028 = vadd.f32 %v1423, %v2027
        %v2029 = vpop.f32.mrf.mxu0
        %2030 = vdwg.mxu0
        %v2031 = vld [vmem:[%s227 + $0x20] sm:$0xf]
        %v2032 = vld [vmem:[%s227 + $0x24] sm:$0xf]
        %v2033 = vld [vmem:[%s227 + $0x28] sm:$0xf]
        %v2034 = vld [vmem:[%s227 + $0x2c] sm:$0xf]
        %v2035 = vld [vmem:[%s227 + $0x30] sm:$0xf]
        %v2036 = vld [vmem:[%s227 + $0x34] sm:$0xf]
        %v2037 = vld [vmem:[%s227 + $0x38] sm:$0xf]
        %v2038 = vld [vmem:[%s227 + $0x3c] sm:$0xf]
        %v2039 = vld [vmem:[%s227 + $0x40] sm:$0xf]
        %v2040 = vld [vmem:[%s227 + $0x44] sm:$0xf]
        %v2041 = vld [vmem:[%s227 + $0x48] sm:$0xf]
        %v2042 = vld [vmem:[%s227 + $0x4c] sm:$0xf]
        %v2043 = vld [vmem:[%s227 + $0x50] sm:$0xf]
        %v2044 = vld [vmem:[%s227 + $0x54] sm:$0xf]
        %v2045 = vld [vmem:[%s227 + $0x58] sm:$0xf]
        %v2046 = vld [vmem:[%s227 + $0x5c] sm:$0xf]
        %v2047 = vld [vmem:[%s227 + $0x60] sm:$0xf]
        %v2048 = vld [vmem:[%s227 + $0x64] sm:$0xf]
        %v2049 = vld [vmem:[%s227 + $0x68] sm:$0xf]
        %v2050 = vld [vmem:[%s227 + $0x6c] sm:$0xf]
        %v2051 = vld [vmem:[%s227 + $0x70] sm:$0xf]
        %v2052 = vld [vmem:[%s227 + $0x74] sm:$0xf]
        %v2053 = vld [vmem:[%s227 + $0x78] sm:$0xf]
        %v2054 = vld [vmem:[%s227 + $0x7c] sm:$0xf]
        %v2055 = vld [vmem:[%s227 + $0x80] sm:$0xf]
        %v2056 = vld [vmem:[%s227 + $0x84] sm:$0xf]
        %v2057 = vld [vmem:[%s227 + $0x88] sm:$0xf]
        %v2058 = vld [vmem:[%s227 + $0x8c] sm:$0xf]
        %v2059 = vld [vmem:[%s227 + $0x90] sm:$0xf]
        %v2060 = vld [vmem:[%s227 + $0x94] sm:$0xf]
        %v2061 = vld [vmem:[%s227 + $0x98] sm:$0xf]
        %v2062 = vld [vmem:[%s227 + $0x9c] sm:$0xf]
        %v2063 = vld [vmem:[%s227 + $0xa0] sm:$0xf]
        %v2064 = vld [vmem:[%s227 + $0xa4] sm:$0xf]
        %v2065 = vld [vmem:[%s227 + $0xa8] sm:$0xf]
        %v2066 = vld [vmem:[%s227 + $0xac] sm:$0xf]
        %v2067 = vld [vmem:[%s227 + $0xb0] sm:$0xf]
        %v2068 = vld [vmem:[%s227 + $0xb4] sm:$0xf]
        %v2069 = vld [vmem:[%s227 + $0xb8] sm:$0xf]
        %v2070 = vld [vmem:[%s227 + $0xbc] sm:$0xf]
        %v2071 = vld [vmem:[%s227 + $0xc0] sm:$0xf]
        %v2072 = vld [vmem:[%s227 + $0xc4] sm:$0xf]
        %v2073 = vld [vmem:[%s227 + $0xc8] sm:$0xf]
        %v2074 = vld [vmem:[%s227 + $0xcc] sm:$0xf]
        %v2075 = vld [vmem:[%s227 + $0xd0] sm:$0xf]
        %v2076 = vld [vmem:[%s227 + $0xd4] sm:$0xf]
        %v2077 = vld [vmem:[%s227 + $0xd8] sm:$0xf]
        %v2078 = vld [vmem:[%s227 + $0xdc] sm:$0xf]
        %v2079 = vld [vmem:[%s227 + $0xe0] sm:$0xf]
        %v2080 = vld [vmem:[%s227 + $0xe4] sm:$0xf]
        %v2081 = vld [vmem:[%s227 + $0xe8] sm:$0xf]
        %v2082 = vld [vmem:[%s227 + $0xec] sm:$0xf]
        %v2083 = vld [vmem:[%s227 + $0xf0] sm:$0xf]
        %v2084 = vld [vmem:[%s227 + $0xf4] sm:$0xf]
        %v2085 = vld [vmem:[%s227 + $0xf8] sm:$0xf]
        %v2086 = vld [vmem:[%s227 + $0xfc] sm:$0xf]
        %v2087 = vld [vmem:[%s227 + $0x100] sm:$0xf]
        %v2088 = vld [vmem:[%s227 + $0x104] sm:$0xf]
        %v2089 = vld [vmem:[%s227 + $0x108] sm:$0xf]
        %v2090 = vld [vmem:[%s227 + $0x10c] sm:$0xf]
        %v2091 = vld [vmem:[%s227 + $0x110] sm:$0xf]
        %v2092 = vld [vmem:[%s227 + $0x114] sm:$0xf]
        %v2093 = vld [vmem:[%s227 + $0x118] sm:$0xf]
        %v2094 = vld [vmem:[%s227 + $0x11c] sm:$0xf]
        %v2095 = vld [vmem:[%s227 + $0x120] sm:$0xf]
        %v2096 = vld [vmem:[%s227 + $0x124] sm:$0xf]
        %v2097 = vld [vmem:[%s227 + $0x128] sm:$0xf]
        %v2098 = vld [vmem:[%s227 + $0x12c] sm:$0xf]
        %v2099 = vld [vmem:[%s227 + $0x130] sm:$0xf]
        %v2100 = vld [vmem:[%s227 + $0x134] sm:$0xf]
        %v2101 = vld [vmem:[%s227 + $0x138] sm:$0xf]
        %v2102 = vld [vmem:[%s227 + $0x13c] sm:$0xf]
        %v2103 = vld [vmem:[%s227 + $0x140] sm:$0xf]
        %v2104 = vld [vmem:[%s227 + $0x144] sm:$0xf]
        %v2105 = vld [vmem:[%s227 + $0x148] sm:$0xf]
        %v2106 = vld [vmem:[%s227 + $0x14c] sm:$0xf]
        %v2107 = vld [vmem:[%s227 + $0x150] sm:$0xf]
        %v2108 = vld [vmem:[%s227 + $0x154] sm:$0xf]
        %v2109 = vld [vmem:[%s227 + $0x158] sm:$0xf]
        %v2110 = vld [vmem:[%s227 + $0x15c] sm:$0xf]
        %v2111 = vld [vmem:[%s227 + $0x160] sm:$0xf]
        %v2112 = vld [vmem:[%s227 + $0x164] sm:$0xf]
        %v2113 = vld [vmem:[%s227 + $0x168] sm:$0xf]
        %v2114 = vld [vmem:[%s227 + $0x16c] sm:$0xf]
        %v2115 = vld [vmem:[%s227 + $0x170] sm:$0xf]
        %v2116 = vld [vmem:[%s227 + $0x174] sm:$0xf]
        %v2117 = vld [vmem:[%s227 + $0x178] sm:$0xf]
        %v2118 = vld [vmem:[%s227 + $0x17c] sm:$0xf]
        %v2119 = vld [vmem:[%s227 + $0x180] sm:$0xf]
        %v2120 = vld [vmem:[%s227 + $0x184] sm:$0xf]
        %v2121 = vld [vmem:[%s227 + $0x188] sm:$0xf]
        %v2122 = vld [vmem:[%s227 + $0x18c] sm:$0xf]
        %v2123 = vld [vmem:[%s227 + $0x190] sm:$0xf]
        %v2124 = vld [vmem:[%s227 + $0x194] sm:$0xf]
        %v2125 = vld [vmem:[%s227 + $0x198] sm:$0xf]
        %v2126 = vld [vmem:[%s227 + $0x19c] sm:$0xf]
        %v2127 = vld [vmem:[%s227 + $0x1a0] sm:$0xf]
        %v2128 = vld [vmem:[%s227 + $0x1a4] sm:$0xf]
        %v2129 = vld [vmem:[%s227 + $0x1a8] sm:$0xf]
        %v2130 = vld [vmem:[%s227 + $0x1ac] sm:$0xf]
        %v2131 = vld [vmem:[%s227 + $0x1b0] sm:$0xf]
        %v2132 = vld [vmem:[%s227 + $0x1b4] sm:$0xf]
        %v2133 = vld [vmem:[%s227 + $0x1b8] sm:$0xf]
        %v2134 = vld [vmem:[%s227 + $0x1bc] sm:$0xf]
        %v2135 = vld [vmem:[%s227 + $0x1c0] sm:$0xf]
        %v2136 = vld [vmem:[%s227 + $0x1c4] sm:$0xf]
        %v2137 = vld [vmem:[%s227 + $0x1c8] sm:$0xf]
        %v2138 = vld [vmem:[%s227 + $0x1cc] sm:$0xf]
        %v2139 = vld [vmem:[%s227 + $0x1d0] sm:$0xf]
        %v2140 = vld [vmem:[%s227 + $0x1d4] sm:$0xf]
        %v2141 = vld [vmem:[%s227 + $0x1d8] sm:$0xf]
        %v2142 = vld [vmem:[%s227 + $0x1dc] sm:$0xf]
        %v2143 = vld [vmem:[%s227 + $0x1e0] sm:$0xf]
        %v2144 = vld [vmem:[%s227 + $0x1e4] sm:$0xf]
        %v2145 = vld [vmem:[%s227 + $0x1e8] sm:$0xf]
        %v2146 = vld [vmem:[%s227 + $0x1ec] sm:$0xf]
        %v2147 = vld [vmem:[%s227 + $0x1f0] sm:$0xf]
        %v2148 = vld [vmem:[%s227 + $0x1f4] sm:$0xf]
        %v2149 = vld [vmem:[%s227 + $0x1f8] sm:$0xf]
        %v2150 = vld [vmem:[%s227 + $0x1fc] sm:$0xf]
        %v2151 = vld [vmem:[%s227 + $0x200] sm:$0xf]
        %v2152 = vld [vmem:[%s227 + $0x204] sm:$0xf]
        %v2153 = vld [vmem:[%s227 + $0x208] sm:$0xf]
        %v2154 = vld [vmem:[%s227 + $0x20c] sm:$0xf]
        %v2155 = vld [vmem:[%s227 + $0x210] sm:$0xf]
        %v2156 = vld [vmem:[%s227 + $0x214] sm:$0xf]
        %v2157 = vld [vmem:[%s227 + $0x218] sm:$0xf]
        %v2158 = vld [vmem:[%s227 + $0x21c] sm:$0xf]
        %s2159 = scalar_lea.vmem %s268, 128
        %v2160 = vld [vmem:[%s2159] sm:$0xf]
        %v2161 = vld [vmem:[%s2159 + $0x4] sm:$0xf]
        %v2162 = vld [vmem:[%s2159 + $0x8] sm:$0xf]
        %v2163 = vld [vmem:[%s2159 + $0xc] sm:$0xf]
        %v2164 = vld [vmem:[%s2159 + $0x10] sm:$0xf]
        %v2165 = vld [vmem:[%s2159 + $0x14] sm:$0xf]
        %v2166 = vld [vmem:[%s2159 + $0x18] sm:$0xf]
        %v2167 = vld [vmem:[%s2159 + $0x1c] sm:$0xf]
        %v2168 = vld [vmem:[%s2159 + $0x20] sm:$0xf]
        %v2169 = vld [vmem:[%s2159 + $0x24] sm:$0xf]
        %v2170 = vld [vmem:[%s2159 + $0x28] sm:$0xf]
        %v2171 = vld [vmem:[%s2159 + $0x2c] sm:$0xf]
        %v2172 = vld [vmem:[%s2159 + $0x30] sm:$0xf]
        %v2173 = vld [vmem:[%s2159 + $0x34] sm:$0xf]
        %v2174 = vld [vmem:[%s2159 + $0x38] sm:$0xf]
        %v2175 = vld [vmem:[%s2159 + $0x3c] sm:$0xf]
        %v2304 = vunpack.c.l.b16 %v2031
        %v2305 = vunpack.c.l.b16 %v2032
        %v2306 = vunpack.c.l.b16 %v2033
        %v2307 = vunpack.c.l.b16 %v2034
        %v2308 = vunpack.c.l.b16 %v2035
        %v2309 = vunpack.c.l.b16 %v2036
        %v2310 = vunpack.c.l.b16 %v2037
        %v2311 = vunpack.c.l.b16 %v2038
        %v2312 = vunpack.c.l.b16 %v2039
        %v2313 = vunpack.c.l.b16 %v2040
        %v2314 = vunpack.c.l.b16 %v2041
        %v2315 = vunpack.c.l.b16 %v2042
        %v2316 = vunpack.c.l.b16 %v2043
        %v2317 = vunpack.c.l.b16 %v2044
        %v2318 = vunpack.c.l.b16 %v2045
        %v2319 = vunpack.c.l.b16 %v2046
        %v2320 = vunpack.c.l.b16 %v2047
        %v2321 = vunpack.c.l.b16 %v2048
        %v2322 = vunpack.c.l.b16 %v2049
        %v2323 = vunpack.c.l.b16 %v2050
        %v2324 = vunpack.c.l.b16 %v2051
        %v2325 = vunpack.c.l.b16 %v2052
        %v2326 = vunpack.c.l.b16 %v2053
        %v2327 = vunpack.c.l.b16 %v2054
        %v2328 = vunpack.c.l.b16 %v2055
        %v2329 = vunpack.c.l.b16 %v2056
        %v2330 = vunpack.c.l.b16 %v2057
        %v2331 = vunpack.c.l.b16 %v2058
        %v2332 = vunpack.c.l.b16 %v2059
        %v2333 = vunpack.c.l.b16 %v2060
        %v2334 = vunpack.c.l.b16 %v2061
        %v2335 = vunpack.c.l.b16 %v2062
        %v2336 = vunpack.c.l.b16 %v2063
        %v2337 = vunpack.c.l.b16 %v2064
        %v2338 = vunpack.c.l.b16 %v2065
        %v2339 = vunpack.c.l.b16 %v2066
        %v2340 = vunpack.c.l.b16 %v2067
        %v2341 = vunpack.c.l.b16 %v2068
        %v2342 = vunpack.c.l.b16 %v2069
        %v2343 = vunpack.c.l.b16 %v2070
        %v2344 = vunpack.c.l.b16 %v2071
        %v2345 = vunpack.c.l.b16 %v2072
        %v2346 = vunpack.c.l.b16 %v2073
        %v2347 = vunpack.c.l.b16 %v2074
        %v2348 = vunpack.c.l.b16 %v2075
        %v2349 = vunpack.c.l.b16 %v2076
        %v2350 = vunpack.c.l.b16 %v2077
        %v2351 = vunpack.c.l.b16 %v2078
        %v2352 = vunpack.c.l.b16 %v2079
        %v2353 = vunpack.c.l.b16 %v2080
        %v2354 = vunpack.c.l.b16 %v2081
        %v2355 = vunpack.c.l.b16 %v2082
        %v2356 = vunpack.c.l.b16 %v2083
        %v2357 = vunpack.c.l.b16 %v2084
        %v2358 = vunpack.c.l.b16 %v2085
        %v2359 = vunpack.c.l.b16 %v2086
        %v2360 = vunpack.c.l.b16 %v2087
        %v2361 = vunpack.c.l.b16 %v2088
        %v2362 = vunpack.c.l.b16 %v2089
        %v2363 = vunpack.c.l.b16 %v2090
        %v2364 = vunpack.c.l.b16 %v2091
        %v2365 = vunpack.c.l.b16 %v2092
        %v2366 = vunpack.c.l.b16 %v2093
        %v2367 = vunpack.c.l.b16 %v2094
        %v2368 = vunpack.c.l.b16 %v2095
        %v2369 = vunpack.c.l.b16 %v2096
        %v2370 = vunpack.c.l.b16 %v2097
        %v2371 = vunpack.c.l.b16 %v2098
        %v2372 = vunpack.c.l.b16 %v2099
        %v2373 = vunpack.c.l.b16 %v2100
        %v2374 = vunpack.c.l.b16 %v2101
        %v2375 = vunpack.c.l.b16 %v2102
        %v2376 = vunpack.c.l.b16 %v2103
        %v2377 = vunpack.c.l.b16 %v2104
        %v2378 = vunpack.c.l.b16 %v2105
        %v2379 = vunpack.c.l.b16 %v2106
        %v2380 = vunpack.c.l.b16 %v2107
        %v2381 = vunpack.c.l.b16 %v2108
        %v2382 = vunpack.c.l.b16 %v2109
        %v2383 = vunpack.c.l.b16 %v2110
        %v2384 = vunpack.c.l.b16 %v2111
        %v2385 = vunpack.c.l.b16 %v2112
        %v2386 = vunpack.c.l.b16 %v2113
        %v2387 = vunpack.c.l.b16 %v2114
        %v2388 = vunpack.c.l.b16 %v2115
        %v2389 = vunpack.c.l.b16 %v2116
        %v2390 = vunpack.c.l.b16 %v2117
        %v2391 = vunpack.c.l.b16 %v2118
        %v2392 = vunpack.c.l.b16 %v2119
        %v2393 = vunpack.c.l.b16 %v2120
        %v2394 = vunpack.c.l.b16 %v2121
        %v2395 = vunpack.c.l.b16 %v2122
        %v2396 = vunpack.c.l.b16 %v2123
        %v2397 = vunpack.c.l.b16 %v2124
        %v2398 = vunpack.c.l.b16 %v2125
        %v2399 = vunpack.c.l.b16 %v2126
        %v2400 = vunpack.c.l.b16 %v2127
        %v2401 = vunpack.c.l.b16 %v2128
        %v2402 = vunpack.c.l.b16 %v2129
        %v2403 = vunpack.c.l.b16 %v2130
        %v2404 = vunpack.c.l.b16 %v2131
        %v2405 = vunpack.c.l.b16 %v2132
        %v2406 = vunpack.c.l.b16 %v2133
        %v2407 = vunpack.c.l.b16 %v2134
        %v2408 = vunpack.c.l.b16 %v2135
        %v2409 = vunpack.c.l.b16 %v2136
        %v2410 = vunpack.c.l.b16 %v2137
        %v2411 = vunpack.c.l.b16 %v2138
        %v2412 = vunpack.c.l.b16 %v2139
        %v2413 = vunpack.c.l.b16 %v2140
        %v2414 = vunpack.c.l.b16 %v2141
        %v2415 = vunpack.c.l.b16 %v2142
        %v2416 = vunpack.c.l.b16 %v2143
        %v2417 = vunpack.c.l.b16 %v2144
        %v2418 = vunpack.c.l.b16 %v2145
        %v2419 = vunpack.c.l.b16 %v2146
        %v2420 = vunpack.c.l.b16 %v2147
        %v2421 = vunpack.c.l.b16 %v2148
        %v2422 = vunpack.c.l.b16 %v2149
        %v2423 = vunpack.c.l.b16 %v2150
        %v2424 = vunpack.c.l.b16 %v2151
        %v2425 = vunpack.c.l.b16 %v2152
        %v2426 = vunpack.c.l.b16 %v2153
        %v2427 = vunpack.c.l.b16 %v2154
        %v2428 = vunpack.c.l.b16 %v2155
        %v2429 = vunpack.c.l.b16 %v2156
        %v2430 = vunpack.c.l.b16 %v2157
        %v2431 = vunpack.c.l.b16 %v2158
        %v2432 = vpack.c.b16 %v2305, %v2304
        %v2433 = vpack.c.b16 %v2307, %v2306
        %v2434 = vpack.c.b16 %v2309, %v2308
        %v2435 = vpack.c.b16 %v2311, %v2310
        %v2436 = vpack.c.b16 %v2313, %v2312
        %v2437 = vpack.c.b16 %v2315, %v2314
        %v2438 = vpack.c.b16 %v2317, %v2316
        %v2439 = vpack.c.b16 %v2319, %v2318
        %v2440 = vpack.c.b16 %v2321, %v2320
        %v2441 = vpack.c.b16 %v2323, %v2322
        %v2442 = vpack.c.b16 %v2325, %v2324
        %v2443 = vpack.c.b16 %v2327, %v2326
        %v2444 = vpack.c.b16 %v2329, %v2328
        %v2445 = vpack.c.b16 %v2331, %v2330
        %v2446 = vpack.c.b16 %v2333, %v2332
        %v2447 = vpack.c.b16 %v2335, %v2334
        %v2448 = vpack.c.b16 %v2337, %v2336
        %v2449 = vpack.c.b16 %v2339, %v2338
        %v2450 = vpack.c.b16 %v2341, %v2340
        %v2451 = vpack.c.b16 %v2343, %v2342
        %v2452 = vpack.c.b16 %v2345, %v2344
        %v2453 = vpack.c.b16 %v2347, %v2346
        %v2454 = vpack.c.b16 %v2349, %v2348
        %v2455 = vpack.c.b16 %v2351, %v2350
        %v2456 = vpack.c.b16 %v2353, %v2352
        %v2457 = vpack.c.b16 %v2355, %v2354
        %v2458 = vpack.c.b16 %v2357, %v2356
        %v2459 = vpack.c.b16 %v2359, %v2358
        %v2460 = vpack.c.b16 %v2361, %v2360
        %v2461 = vpack.c.b16 %v2363, %v2362
        %v2462 = vpack.c.b16 %v2365, %v2364
        %v2463 = vpack.c.b16 %v2367, %v2366
        %v2464 = vpack.c.b16 %v2369, %v2368
        %v2465 = vpack.c.b16 %v2371, %v2370
        %v2466 = vpack.c.b16 %v2373, %v2372
        %v2467 = vpack.c.b16 %v2375, %v2374
        %v2468 = vpack.c.b16 %v2377, %v2376
        %v2469 = vpack.c.b16 %v2379, %v2378
        %v2470 = vpack.c.b16 %v2381, %v2380
        %v2471 = vpack.c.b16 %v2383, %v2382
        %v2472 = vpack.c.b16 %v2385, %v2384
        %v2473 = vpack.c.b16 %v2387, %v2386
        %v2474 = vpack.c.b16 %v2389, %v2388
        %v2475 = vpack.c.b16 %v2391, %v2390
        %v2476 = vpack.c.b16 %v2393, %v2392
        %v2477 = vpack.c.b16 %v2395, %v2394
        %v2478 = vpack.c.b16 %v2397, %v2396
        %v2479 = vpack.c.b16 %v2399, %v2398
        %v2480 = vpack.c.b16 %v2401, %v2400
        %v2481 = vpack.c.b16 %v2403, %v2402
        %v2482 = vpack.c.b16 %v2405, %v2404
        %v2483 = vpack.c.b16 %v2407, %v2406
        %v2484 = vpack.c.b16 %v2409, %v2408
        %v2485 = vpack.c.b16 %v2411, %v2410
        %v2486 = vpack.c.b16 %v2413, %v2412
        %v2487 = vpack.c.b16 %v2415, %v2414
        %v2488 = vpack.c.b16 %v2417, %v2416
        %v2489 = vpack.c.b16 %v2419, %v2418
        %v2490 = vpack.c.b16 %v2421, %v2420
        %v2491 = vpack.c.b16 %v2423, %v2422
        %v2492 = vpack.c.b16 %v2425, %v2424
        %v2493 = vpack.c.b16 %v2427, %v2426
        %v2494 = vpack.c.b16 %v2429, %v2428
        %v2495 = vpack.c.b16 %v2431, %v2430
        %v2576 = vunpack.c.l.b16 %v2160
        %v2577 = vunpack.c.l.b16 %v2161
        %v2578 = vunpack.c.l.b16 %v2162
        %v2579 = vunpack.c.l.b16 %v2163
        %v2580 = vunpack.c.l.b16 %v2164
        %v2581 = vunpack.c.l.b16 %v2165
        %v2582 = vunpack.c.l.b16 %v2166
        %v2583 = vunpack.c.l.b16 %v2167
        %v2584 = vunpack.c.l.b16 %v2168
        %v2585 = vunpack.c.l.b16 %v2169
        %v2586 = vunpack.c.l.b16 %v2170
        %v2587 = vunpack.c.l.b16 %v2171
        %v2588 = vunpack.c.l.b16 %v2172
        %v2589 = vunpack.c.l.b16 %v2173
        %v2590 = vunpack.c.l.b16 %v2174
        %v2591 = vunpack.c.l.b16 %v2175
        %v2592 = vpack.c.b16 %v2577, %v2576
        %v2593 = vpack.c.b16 %v2579, %v2578
        %v2594 = vpack.c.b16 %v2581, %v2580
        %v2595 = vpack.c.b16 %v2583, %v2582
        %v2596 = vpack.c.b16 %v2585, %v2584
        %v2597 = vpack.c.b16 %v2587, %v2586
        %v2598 = vpack.c.b16 %v2589, %v2588
        %v2599 = vpack.c.b16 %v2591, %v2590
        %2608 = vmatprep.subr.bf16.mxu0 0
        %2609 = vmatpush1.bf16.msra.mxu0 %v2599
        %2610 = vmatprep.subr.bf16.mxu0 0
        %2611 = vmatpush1.bf16.msra.mxu0 %v2598
        %2612 = vmatprep.subr.bf16.mxu0 0
        %2613 = vmatpush1.bf16.msra.mxu0 %v2597
        %2614 = vmatprep.subr.bf16.mxu0 0
        %2615 = vmatpush1.bf16.msra.mxu0 %v2596
        %2616 = vmatprep.subr.bf16.mxu0 0
        %2617 = vmatpush1.bf16.msra.mxu0 %v2595
        %2618 = vmatprep.subr.bf16.mxu0 0
        %2619 = vmatpush1.bf16.msra.mxu0 %v2594
        %2620 = vmatprep.subr.bf16.mxu0 0
        %2621 = vmatpush1.bf16.msra.mxu0 %v2593
        %2622 = vmatprep.subr.bf16.mxu0 0
        %2623 = vmatpush1.bf16.msra.mxu0 %v2592
        %2624 = vmatprep.subr.bf16.mxu0 0
        %2625 = vmatpush2.bf16.msra.mxu0 0
        %2626 = vmatprep.subr.bf16.mxu0 0
        %2627 = vmatpush2.bf16.msra.mxu0 0
        %2628 = vmatprep.subr.bf16.mxu0 0
        %2629 = vmatpush2.bf16.msra.mxu0 0
        %2630 = vmatprep.subr.bf16.mxu0 0
        %2631 = vmatpush2.bf16.msra.mxu0 0
        %2632 = vmatprep.subr.bf16.mxu0 0
        %2633 = vmatpush2.bf16.msra.mxu0 0
        %2634 = vmatprep.subr.bf16.mxu0 0
        %2635 = vmatpush2.bf16.msra.mxu0 0
        %2636 = vmatprep.subr.bf16.mxu0 0
        %2637 = vmatpush2.bf16.msra.mxu0 0
        %2638 = vmatprep.subr.bf16.mxu0 0
        %2639 = vmatpush2.bf16.msra.mxu0 0
        %2640 = vmatprep.mubr.bf16.mxu0 0
        %2641 = vmatmul.mubr.bf16.gmra.mxu0 %v2432
        %v2642 = vpop.f32.mrf.mxu0
        %v2643 = vadd.f32 0.0, %v2642
        %v2644 = vpop.f32.mrf.mxu0
        %v2645 = vpop.f32.mrf.mxu0
        %v2646 = vadd.f32 0.0, %v2645
        %v2647 = vpop.f32.mrf.mxu0
        %2648 = vmatprep.mubr.bf16.mxu0 0
        %2649 = vmatmul.mubr.bf16.gmra.mxu0 %v2433
        %v2650 = vpop.f32.mrf.mxu0
        %v2651 = vadd.f32 0.0, %v2650
        %v2652 = vpop.f32.mrf.mxu0
        %v2653 = vpop.f32.mrf.mxu0
        %v2654 = vadd.f32 0.0, %v2653
        %v2655 = vpop.f32.mrf.mxu0
        %2656 = vmatprep.mubr.bf16.mxu0 0
        %2657 = vmatmul.mubr.bf16.gmra.mxu0 %v2434
        %v2658 = vpop.f32.mrf.mxu0
        %v2659 = vadd.f32 0.0, %v2658
        %v2660 = vpop.f32.mrf.mxu0
        %v2661 = vpop.f32.mrf.mxu0
        %v2662 = vadd.f32 0.0, %v2661
        %v2663 = vpop.f32.mrf.mxu0
        %2664 = vmatprep.mubr.bf16.mxu0 0
        %2665 = vmatmul.mubr.bf16.gmra.mxu0 %v2435
        %v2666 = vpop.f32.mrf.mxu0
        %v2667 = vadd.f32 0.0, %v2666
        %v2668 = vpop.f32.mrf.mxu0
        %v2669 = vpop.f32.mrf.mxu0
        %v2670 = vadd.f32 0.0, %v2669
        %v2671 = vpop.f32.mrf.mxu0
        %2672 = vmatprep.mubr.bf16.mxu0 0
        %2673 = vmatmul.mubr.bf16.gmra.mxu0 %v2436
        %v2674 = vpop.f32.mrf.mxu0
        %v2675 = vadd.f32 0.0, %v2674
        %v2676 = vpop.f32.mrf.mxu0
        %v2677 = vpop.f32.mrf.mxu0
        %v2678 = vadd.f32 0.0, %v2677
        %v2679 = vpop.f32.mrf.mxu0
        %2680 = vmatprep.mubr.bf16.mxu0 0
        %2681 = vmatmul.mubr.bf16.gmra.mxu0 %v2437
        %v2682 = vpop.f32.mrf.mxu0
        %v2683 = vadd.f32 0.0, %v2682
        %v2684 = vpop.f32.mrf.mxu0
        %v2685 = vpop.f32.mrf.mxu0
        %v2686 = vadd.f32 0.0, %v2685
        %v2687 = vpop.f32.mrf.mxu0
        %2688 = vmatprep.mubr.bf16.mxu0 0
        %2689 = vmatmul.mubr.bf16.gmra.mxu0 %v2438
        %v2690 = vpop.f32.mrf.mxu0
        %v2691 = vadd.f32 0.0, %v2690
        %v2692 = vpop.f32.mrf.mxu0
        %v2693 = vpop.f32.mrf.mxu0
        %v2694 = vadd.f32 0.0, %v2693
        %v2695 = vpop.f32.mrf.mxu0
        %2696 = vmatprep.mubr.bf16.mxu0 0
        %2697 = vmatmul.mubr.bf16.gmra.mxu0 %v2439
        %v2698 = vpop.f32.mrf.mxu0
        %v2699 = vadd.f32 0.0, %v2698
        %v2700 = vpop.f32.mrf.mxu0
        %v2701 = vpop.f32.mrf.mxu0
        %v2702 = vadd.f32 0.0, %v2701
        %v2703 = vpop.f32.mrf.mxu0
        %2704 = vmatprep.mubr.bf16.mxu0 0
        %2705 = vmatmul.mubr.bf16.gmra.mxu0 %v2440
        %v2706 = vpop.f32.mrf.mxu0
        %v2707 = vadd.f32 0.0, %v2706
        %v2708 = vpop.f32.mrf.mxu0
        %v2709 = vpop.f32.mrf.mxu0
        %v2710 = vadd.f32 0.0, %v2709
        %v2711 = vpop.f32.mrf.mxu0
        %2712 = vmatprep.mubr.bf16.mxu0 0
        %2713 = vmatmul.mubr.bf16.gmra.mxu0 %v2441
        %v2714 = vpop.f32.mrf.mxu0
        %v2715 = vadd.f32 0.0, %v2714
        %v2716 = vpop.f32.mrf.mxu0
        %v2717 = vpop.f32.mrf.mxu0
        %v2718 = vadd.f32 0.0, %v2717
        %v2719 = vpop.f32.mrf.mxu0
        %2720 = vmatprep.mubr.bf16.mxu0 0
        %2721 = vmatmul.mubr.bf16.gmra.mxu0 %v2442
        %v2722 = vpop.f32.mrf.mxu0
        %v2723 = vadd.f32 0.0, %v2722
        %v2724 = vpop.f32.mrf.mxu0
        %v2725 = vpop.f32.mrf.mxu0
        %v2726 = vadd.f32 0.0, %v2725
        %v2727 = vpop.f32.mrf.mxu0
        %2728 = vmatprep.mubr.bf16.mxu0 0
        %2729 = vmatmul.mubr.bf16.gmra.mxu0 %v2443
        %v2730 = vpop.f32.mrf.mxu0
        %v2731 = vadd.f32 0.0, %v2730
        %v2732 = vpop.f32.mrf.mxu0
        %v2733 = vpop.f32.mrf.mxu0
        %v2734 = vadd.f32 0.0, %v2733
        %v2735 = vpop.f32.mrf.mxu0
        %2736 = vmatprep.mubr.bf16.mxu0 0
        %2737 = vmatmul.mubr.bf16.gmra.mxu0 %v2444
        %v2738 = vpop.f32.mrf.mxu0
        %v2739 = vadd.f32 0.0, %v2738
        %v2740 = vpop.f32.mrf.mxu0
        %v2741 = vpop.f32.mrf.mxu0
        %v2742 = vadd.f32 0.0, %v2741
        %v2743 = vpop.f32.mrf.mxu0
        %2744 = vmatprep.mubr.bf16.mxu0 0
        %2745 = vmatmul.mubr.bf16.gmra.mxu0 %v2445
        %v2746 = vpop.f32.mrf.mxu0
        %v2747 = vadd.f32 0.0, %v2746
        %v2748 = vpop.f32.mrf.mxu0
        %v2749 = vpop.f32.mrf.mxu0
        %v2750 = vadd.f32 0.0, %v2749
        %v2751 = vpop.f32.mrf.mxu0
        %2752 = vmatprep.mubr.bf16.mxu0 0
        %2753 = vmatmul.mubr.bf16.gmra.mxu0 %v2446
        %v2754 = vpop.f32.mrf.mxu0
        %v2755 = vadd.f32 0.0, %v2754
        %v2756 = vpop.f32.mrf.mxu0
        %v2757 = vpop.f32.mrf.mxu0
        %v2758 = vadd.f32 0.0, %v2757
        %v2759 = vpop.f32.mrf.mxu0
        %2760 = vmatprep.mubr.bf16.mxu0 0
        %2761 = vmatmul.mubr.bf16.gmra.mxu0 %v2447
        %v2762 = vpop.f32.mrf.mxu0
        %v2763 = vadd.f32 0.0, %v2762
        %v2764 = vpop.f32.mrf.mxu0
        %v2765 = vpop.f32.mrf.mxu0
        %v2766 = vadd.f32 0.0, %v2765
        %v2767 = vpop.f32.mrf.mxu0
        %2768 = vmatprep.mubr.bf16.mxu0 0
        %2769 = vmatmul.mubr.bf16.gmra.mxu0 %v2448
        %v2770 = vpop.f32.mrf.mxu0
        %v2771 = vadd.f32 0.0, %v2770
        %v2772 = vpop.f32.mrf.mxu0
        %v2773 = vpop.f32.mrf.mxu0
        %v2774 = vadd.f32 0.0, %v2773
        %v2775 = vpop.f32.mrf.mxu0
        %2776 = vmatprep.mubr.bf16.mxu0 0
        %2777 = vmatmul.mubr.bf16.gmra.mxu0 %v2449
        %v2778 = vpop.f32.mrf.mxu0
        %v2779 = vadd.f32 0.0, %v2778
        %v2780 = vpop.f32.mrf.mxu0
        %v2781 = vpop.f32.mrf.mxu0
        %v2782 = vadd.f32 0.0, %v2781
        %v2783 = vpop.f32.mrf.mxu0
        %2784 = vmatprep.mubr.bf16.mxu0 0
        %2785 = vmatmul.mubr.bf16.gmra.mxu0 %v2450
        %v2786 = vpop.f32.mrf.mxu0
        %v2787 = vadd.f32 0.0, %v2786
        %v2788 = vpop.f32.mrf.mxu0
        %v2789 = vpop.f32.mrf.mxu0
        %v2790 = vadd.f32 0.0, %v2789
        %v2791 = vpop.f32.mrf.mxu0
        %2792 = vmatprep.mubr.bf16.mxu0 0
        %2793 = vmatmul.mubr.bf16.gmra.mxu0 %v2451
        %v2794 = vpop.f32.mrf.mxu0
        %v2795 = vadd.f32 0.0, %v2794
        %v2796 = vpop.f32.mrf.mxu0
        %v2797 = vpop.f32.mrf.mxu0
        %v2798 = vadd.f32 0.0, %v2797
        %v2799 = vpop.f32.mrf.mxu0
        %2800 = vmatprep.mubr.bf16.mxu0 0
        %2801 = vmatmul.mubr.bf16.gmra.mxu0 %v2452
        %v2802 = vpop.f32.mrf.mxu0
        %v2803 = vadd.f32 0.0, %v2802
        %v2804 = vpop.f32.mrf.mxu0
        %v2805 = vpop.f32.mrf.mxu0
        %v2806 = vadd.f32 0.0, %v2805
        %v2807 = vpop.f32.mrf.mxu0
        %2808 = vmatprep.mubr.bf16.mxu0 0
        %2809 = vmatmul.mubr.bf16.gmra.mxu0 %v2453
        %v2810 = vpop.f32.mrf.mxu0
        %v2811 = vadd.f32 0.0, %v2810
        %v2812 = vpop.f32.mrf.mxu0
        %v2813 = vpop.f32.mrf.mxu0
        %v2814 = vadd.f32 0.0, %v2813
        %v2815 = vpop.f32.mrf.mxu0
        %2816 = vmatprep.mubr.bf16.mxu0 0
        %2817 = vmatmul.mubr.bf16.gmra.mxu0 %v2454
        %v2818 = vpop.f32.mrf.mxu0
        %v2819 = vadd.f32 0.0, %v2818
        %v2820 = vpop.f32.mrf.mxu0
        %v2821 = vpop.f32.mrf.mxu0
        %v2822 = vadd.f32 0.0, %v2821
        %v2823 = vpop.f32.mrf.mxu0
        %2824 = vmatprep.mubr.bf16.mxu0 0
        %2825 = vmatmul.mubr.bf16.gmra.mxu0 %v2455
        %v2826 = vpop.f32.mrf.mxu0
        %v2827 = vadd.f32 0.0, %v2826
        %v2828 = vpop.f32.mrf.mxu0
        %v2829 = vpop.f32.mrf.mxu0
        %v2830 = vadd.f32 0.0, %v2829
        %v2831 = vpop.f32.mrf.mxu0
        %2832 = vmatprep.mubr.bf16.mxu0 0
        %2833 = vmatmul.mubr.bf16.gmra.mxu0 %v2456
        %v2834 = vpop.f32.mrf.mxu0
        %v2835 = vadd.f32 0.0, %v2834
        %v2836 = vpop.f32.mrf.mxu0
        %v2837 = vpop.f32.mrf.mxu0
        %v2838 = vadd.f32 0.0, %v2837
        %v2839 = vpop.f32.mrf.mxu0
        %2840 = vmatprep.mubr.bf16.mxu0 0
        %2841 = vmatmul.mubr.bf16.gmra.mxu0 %v2457
        %v2842 = vpop.f32.mrf.mxu0
        %v2843 = vadd.f32 0.0, %v2842
        %v2844 = vpop.f32.mrf.mxu0
        %v2845 = vpop.f32.mrf.mxu0
        %v2846 = vadd.f32 0.0, %v2845
        %v2847 = vpop.f32.mrf.mxu0
        %2848 = vmatprep.mubr.bf16.mxu0 0
        %2849 = vmatmul.mubr.bf16.gmra.mxu0 %v2458
        %v2850 = vpop.f32.mrf.mxu0
        %v2851 = vadd.f32 0.0, %v2850
        %v2852 = vpop.f32.mrf.mxu0
        %v2853 = vpop.f32.mrf.mxu0
        %v2854 = vadd.f32 0.0, %v2853
        %v2855 = vpop.f32.mrf.mxu0
        %2856 = vmatprep.mubr.bf16.mxu0 0
        %2857 = vmatmul.mubr.bf16.gmra.mxu0 %v2459
        %v2858 = vpop.f32.mrf.mxu0
        %v2859 = vadd.f32 0.0, %v2858
        %v2860 = vpop.f32.mrf.mxu0
        %v2861 = vpop.f32.mrf.mxu0
        %v2862 = vadd.f32 0.0, %v2861
        %v2863 = vpop.f32.mrf.mxu0
        %2864 = vmatprep.mubr.bf16.mxu0 0
        %2865 = vmatmul.mubr.bf16.gmra.mxu0 %v2460
        %v2866 = vpop.f32.mrf.mxu0
        %v2867 = vadd.f32 0.0, %v2866
        %v2868 = vpop.f32.mrf.mxu0
        %v2869 = vpop.f32.mrf.mxu0
        %v2870 = vadd.f32 0.0, %v2869
        %v2871 = vpop.f32.mrf.mxu0
        %2872 = vmatprep.mubr.bf16.mxu0 0
        %2873 = vmatmul.mubr.bf16.gmra.mxu0 %v2461
        %v2874 = vpop.f32.mrf.mxu0
        %v2875 = vadd.f32 0.0, %v2874
        %v2876 = vpop.f32.mrf.mxu0
        %v2877 = vpop.f32.mrf.mxu0
        %v2878 = vadd.f32 0.0, %v2877
        %v2879 = vpop.f32.mrf.mxu0
        %2880 = vmatprep.mubr.bf16.mxu0 0
        %2881 = vmatmul.mubr.bf16.gmra.mxu0 %v2462
        %v2882 = vpop.f32.mrf.mxu0
        %v2883 = vadd.f32 0.0, %v2882
        %v2884 = vpop.f32.mrf.mxu0
        %v2885 = vpop.f32.mrf.mxu0
        %v2886 = vadd.f32 0.0, %v2885
        %v2887 = vpop.f32.mrf.mxu0
        %2888 = vmatprep.mubr.bf16.mxu0 0
        %2889 = vmatmul.mubr.bf16.gmra.mxu0 %v2463
        %v2890 = vpop.f32.mrf.mxu0
        %v2891 = vadd.f32 0.0, %v2890
        %v2892 = vpop.f32.mrf.mxu0
        %v2893 = vpop.f32.mrf.mxu0
        %v2894 = vadd.f32 0.0, %v2893
        %v2895 = vpop.f32.mrf.mxu0
        %2896 = vmatprep.mubr.bf16.mxu0 0
        %2897 = vmatmul.mubr.bf16.gmra.mxu0 %v2464
        %v2898 = vpop.f32.mrf.mxu0
        %v2899 = vadd.f32 0.0, %v2898
        %v2900 = vpop.f32.mrf.mxu0
        %v2901 = vpop.f32.mrf.mxu0
        %v2902 = vadd.f32 0.0, %v2901
        %v2903 = vpop.f32.mrf.mxu0
        %2904 = vmatprep.mubr.bf16.mxu0 0
        %2905 = vmatmul.mubr.bf16.gmra.mxu0 %v2465
        %v2906 = vpop.f32.mrf.mxu0
        %v2907 = vadd.f32 0.0, %v2906
        %v2908 = vpop.f32.mrf.mxu0
        %v2909 = vpop.f32.mrf.mxu0
        %v2910 = vadd.f32 0.0, %v2909
        %v2911 = vpop.f32.mrf.mxu0
        %2912 = vmatprep.mubr.bf16.mxu0 0
        %2913 = vmatmul.mubr.bf16.gmra.mxu0 %v2466
        %v2914 = vpop.f32.mrf.mxu0
        %v2915 = vadd.f32 0.0, %v2914
        %v2916 = vpop.f32.mrf.mxu0
        %v2917 = vpop.f32.mrf.mxu0
        %v2918 = vadd.f32 0.0, %v2917
        %v2919 = vpop.f32.mrf.mxu0
        %2920 = vmatprep.mubr.bf16.mxu0 0
        %2921 = vmatmul.mubr.bf16.gmra.mxu0 %v2467
        %v2922 = vpop.f32.mrf.mxu0
        %v2923 = vadd.f32 0.0, %v2922
        %v2924 = vpop.f32.mrf.mxu0
        %v2925 = vpop.f32.mrf.mxu0
        %v2926 = vadd.f32 0.0, %v2925
        %v2927 = vpop.f32.mrf.mxu0
        %2928 = vmatprep.mubr.bf16.mxu0 0
        %2929 = vmatmul.mubr.bf16.gmra.mxu0 %v2468
        %v2930 = vpop.f32.mrf.mxu0
        %v2931 = vadd.f32 0.0, %v2930
        %v2932 = vpop.f32.mrf.mxu0
        %v2933 = vpop.f32.mrf.mxu0
        %v2934 = vadd.f32 0.0, %v2933
        %v2935 = vpop.f32.mrf.mxu0
        %2936 = vmatprep.mubr.bf16.mxu0 0
        %2937 = vmatmul.mubr.bf16.gmra.mxu0 %v2469
        %v2938 = vpop.f32.mrf.mxu0
        %v2939 = vadd.f32 0.0, %v2938
        %v2940 = vpop.f32.mrf.mxu0
        %v2941 = vpop.f32.mrf.mxu0
        %v2942 = vadd.f32 0.0, %v2941
        %v2943 = vpop.f32.mrf.mxu0
        %2944 = vmatprep.mubr.bf16.mxu0 0
        %2945 = vmatmul.mubr.bf16.gmra.mxu0 %v2470
        %v2946 = vpop.f32.mrf.mxu0
        %v2947 = vadd.f32 0.0, %v2946
        %v2948 = vpop.f32.mrf.mxu0
        %v2949 = vpop.f32.mrf.mxu0
        %v2950 = vadd.f32 0.0, %v2949
        %v2951 = vpop.f32.mrf.mxu0
        %2952 = vmatprep.mubr.bf16.mxu0 0
        %2953 = vmatmul.mubr.bf16.gmra.mxu0 %v2471
        %v2954 = vpop.f32.mrf.mxu0
        %v2955 = vadd.f32 0.0, %v2954
        %v2956 = vpop.f32.mrf.mxu0
        %v2957 = vpop.f32.mrf.mxu0
        %v2958 = vadd.f32 0.0, %v2957
        %v2959 = vpop.f32.mrf.mxu0
        %2960 = vmatprep.mubr.bf16.mxu0 0
        %2961 = vmatmul.mubr.bf16.gmra.mxu0 %v2472
        %v2962 = vpop.f32.mrf.mxu0
        %v2963 = vadd.f32 0.0, %v2962
        %v2964 = vpop.f32.mrf.mxu0
        %v2965 = vpop.f32.mrf.mxu0
        %v2966 = vadd.f32 0.0, %v2965
        %v2967 = vpop.f32.mrf.mxu0
        %2968 = vmatprep.mubr.bf16.mxu0 0
        %2969 = vmatmul.mubr.bf16.gmra.mxu0 %v2473
        %v2970 = vpop.f32.mrf.mxu0
        %v2971 = vadd.f32 0.0, %v2970
        %v2972 = vpop.f32.mrf.mxu0
        %v2973 = vpop.f32.mrf.mxu0
        %v2974 = vadd.f32 0.0, %v2973
        %v2975 = vpop.f32.mrf.mxu0
        %2976 = vmatprep.mubr.bf16.mxu0 0
        %2977 = vmatmul.mubr.bf16.gmra.mxu0 %v2474
        %v2978 = vpop.f32.mrf.mxu0
        %v2979 = vadd.f32 0.0, %v2978
        %v2980 = vpop.f32.mrf.mxu0
        %v2981 = vpop.f32.mrf.mxu0
        %v2982 = vadd.f32 0.0, %v2981
        %v2983 = vpop.f32.mrf.mxu0
        %2984 = vmatprep.mubr.bf16.mxu0 0
        %2985 = vmatmul.mubr.bf16.gmra.mxu0 %v2475
        %v2986 = vpop.f32.mrf.mxu0
        %v2987 = vadd.f32 0.0, %v2986
        %v2988 = vpop.f32.mrf.mxu0
        %v2989 = vpop.f32.mrf.mxu0
        %v2990 = vadd.f32 0.0, %v2989
        %v2991 = vpop.f32.mrf.mxu0
        %2992 = vmatprep.mubr.bf16.mxu0 0
        %2993 = vmatmul.mubr.bf16.gmra.mxu0 %v2476
        %v2994 = vpop.f32.mrf.mxu0
        %v2995 = vadd.f32 0.0, %v2994
        %v2996 = vpop.f32.mrf.mxu0
        %v2997 = vpop.f32.mrf.mxu0
        %v2998 = vadd.f32 0.0, %v2997
        %v2999 = vpop.f32.mrf.mxu0
        %3000 = vmatprep.mubr.bf16.mxu0 0
        %3001 = vmatmul.mubr.bf16.gmra.mxu0 %v2477
        %v3002 = vpop.f32.mrf.mxu0
        %v3003 = vadd.f32 0.0, %v3002
        %v3004 = vpop.f32.mrf.mxu0
        %v3005 = vpop.f32.mrf.mxu0
        %v3006 = vadd.f32 0.0, %v3005
        %v3007 = vpop.f32.mrf.mxu0
        %3008 = vmatprep.mubr.bf16.mxu0 0
        %3009 = vmatmul.mubr.bf16.gmra.mxu0 %v2478
        %v3010 = vpop.f32.mrf.mxu0
        %v3011 = vadd.f32 0.0, %v3010
        %v3012 = vpop.f32.mrf.mxu0
        %v3013 = vpop.f32.mrf.mxu0
        %v3014 = vadd.f32 0.0, %v3013
        %v3015 = vpop.f32.mrf.mxu0
        %3016 = vmatprep.mubr.bf16.mxu0 0
        %3017 = vmatmul.mubr.bf16.gmra.mxu0 %v2479
        %v3018 = vpop.f32.mrf.mxu0
        %v3019 = vadd.f32 0.0, %v3018
        %v3020 = vpop.f32.mrf.mxu0
        %v3021 = vpop.f32.mrf.mxu0
        %v3022 = vadd.f32 0.0, %v3021
        %v3023 = vpop.f32.mrf.mxu0
        %3024 = vmatprep.mubr.bf16.mxu0 0
        %3025 = vmatmul.mubr.bf16.gmra.mxu0 %v2480
        %v3026 = vpop.f32.mrf.mxu0
        %v3027 = vadd.f32 0.0, %v3026
        %v3028 = vpop.f32.mrf.mxu0
        %v3029 = vpop.f32.mrf.mxu0
        %v3030 = vadd.f32 0.0, %v3029
        %v3031 = vpop.f32.mrf.mxu0
        %3032 = vmatprep.mubr.bf16.mxu0 0
        %3033 = vmatmul.mubr.bf16.gmra.mxu0 %v2481
        %v3034 = vpop.f32.mrf.mxu0
        %v3035 = vadd.f32 0.0, %v3034
        %v3036 = vpop.f32.mrf.mxu0
        %v3037 = vpop.f32.mrf.mxu0
        %v3038 = vadd.f32 0.0, %v3037
        %v3039 = vpop.f32.mrf.mxu0
        %3040 = vmatprep.mubr.bf16.mxu0 0
        %3041 = vmatmul.mubr.bf16.gmra.mxu0 %v2482
        %v3042 = vpop.f32.mrf.mxu0
        %v3043 = vadd.f32 0.0, %v3042
        %v3044 = vpop.f32.mrf.mxu0
        %v3045 = vpop.f32.mrf.mxu0
        %v3046 = vadd.f32 0.0, %v3045
        %v3047 = vpop.f32.mrf.mxu0
        %3048 = vmatprep.mubr.bf16.mxu0 0
        %3049 = vmatmul.mubr.bf16.gmra.mxu0 %v2483
        %v3050 = vpop.f32.mrf.mxu0
        %v3051 = vadd.f32 0.0, %v3050
        %v3052 = vpop.f32.mrf.mxu0
        %v3053 = vpop.f32.mrf.mxu0
        %v3054 = vadd.f32 0.0, %v3053
        %v3055 = vpop.f32.mrf.mxu0
        %3056 = vmatprep.mubr.bf16.mxu0 0
        %3057 = vmatmul.mubr.bf16.gmra.mxu0 %v2484
        %v3058 = vpop.f32.mrf.mxu0
        %v3059 = vadd.f32 0.0, %v3058
        %v3060 = vpop.f32.mrf.mxu0
        %v3061 = vpop.f32.mrf.mxu0
        %v3062 = vadd.f32 0.0, %v3061
        %v3063 = vpop.f32.mrf.mxu0
        %3064 = vmatprep.mubr.bf16.mxu0 0
        %3065 = vmatmul.mubr.bf16.gmra.mxu0 %v2485
        %v3066 = vpop.f32.mrf.mxu0
        %v3067 = vadd.f32 0.0, %v3066
        %v3068 = vpop.f32.mrf.mxu0
        %v3069 = vpop.f32.mrf.mxu0
        %v3070 = vadd.f32 0.0, %v3069
        %v3071 = vpop.f32.mrf.mxu0
        %3072 = vmatprep.mubr.bf16.mxu0 0
        %3073 = vmatmul.mubr.bf16.gmra.mxu0 %v2486
        %v3074 = vpop.f32.mrf.mxu0
        %v3075 = vadd.f32 0.0, %v3074
        %v3076 = vpop.f32.mrf.mxu0
        %v3077 = vpop.f32.mrf.mxu0
        %v3078 = vadd.f32 0.0, %v3077
        %v3079 = vpop.f32.mrf.mxu0
        %3080 = vmatprep.mubr.bf16.mxu0 0
        %3081 = vmatmul.mubr.bf16.gmra.mxu0 %v2487
        %v3082 = vpop.f32.mrf.mxu0
        %v3083 = vadd.f32 0.0, %v3082
        %v3084 = vpop.f32.mrf.mxu0
        %v3085 = vpop.f32.mrf.mxu0
        %v3086 = vadd.f32 0.0, %v3085
        %v3087 = vpop.f32.mrf.mxu0
        %3088 = vmatprep.mubr.bf16.mxu0 0
        %3089 = vmatmul.mubr.bf16.gmra.mxu0 %v2488
        %v3090 = vpop.f32.mrf.mxu0
        %v3091 = vadd.f32 0.0, %v3090
        %v3092 = vpop.f32.mrf.mxu0
        %v3093 = vpop.f32.mrf.mxu0
        %v3094 = vadd.f32 0.0, %v3093
        %v3095 = vpop.f32.mrf.mxu0
        %3096 = vmatprep.mubr.bf16.mxu0 0
        %3097 = vmatmul.mubr.bf16.gmra.mxu0 %v2489
        %v3098 = vpop.f32.mrf.mxu0
        %v3099 = vadd.f32 0.0, %v3098
        %v3100 = vpop.f32.mrf.mxu0
        %v3101 = vpop.f32.mrf.mxu0
        %v3102 = vadd.f32 0.0, %v3101
        %v3103 = vpop.f32.mrf.mxu0
        %3104 = vmatprep.mubr.bf16.mxu0 0
        %3105 = vmatmul.mubr.bf16.gmra.mxu0 %v2490
        %v3106 = vpop.f32.mrf.mxu0
        %v3107 = vadd.f32 0.0, %v3106
        %v3108 = vpop.f32.mrf.mxu0
        %v3109 = vpop.f32.mrf.mxu0
        %v3110 = vadd.f32 0.0, %v3109
        %v3111 = vpop.f32.mrf.mxu0
        %3112 = vmatprep.mubr.bf16.mxu0 0
        %3113 = vmatmul.mubr.bf16.gmra.mxu0 %v2491
        %v3114 = vpop.f32.mrf.mxu0
        %v3115 = vadd.f32 0.0, %v3114
        %v3116 = vpop.f32.mrf.mxu0
        %v3117 = vpop.f32.mrf.mxu0
        %v3118 = vadd.f32 0.0, %v3117
        %v3119 = vpop.f32.mrf.mxu0
        %3120 = vmatprep.mubr.bf16.mxu0 0
        %3121 = vmatmul.mubr.bf16.gmra.mxu0 %v2492
        %v3122 = vpop.f32.mrf.mxu0
        %v3123 = vadd.f32 0.0, %v3122
        %v3124 = vpop.f32.mrf.mxu0
        %v3125 = vpop.f32.mrf.mxu0
        %v3126 = vadd.f32 0.0, %v3125
        %v3127 = vpop.f32.mrf.mxu0
        %3128 = vmatprep.mubr.bf16.mxu0 0
        %3129 = vmatmul.mubr.bf16.gmra.mxu0 %v2493
        %v3130 = vpop.f32.mrf.mxu0
        %v3131 = vadd.f32 0.0, %v3130
        %v3132 = vpop.f32.mrf.mxu0
        %v3133 = vpop.f32.mrf.mxu0
        %v3134 = vadd.f32 0.0, %v3133
        %v3135 = vpop.f32.mrf.mxu0
        %3136 = vmatprep.mubr.bf16.mxu0 0
        %3137 = vmatmul.mubr.bf16.gmra.mxu0 %v2494
        %v3138 = vpop.f32.mrf.mxu0
        %v3139 = vadd.f32 0.0, %v3138
        %v3140 = vpop.f32.mrf.mxu0
        %v3141 = vpop.f32.mrf.mxu0
        %v3142 = vadd.f32 0.0, %v3141
        %v3143 = vpop.f32.mrf.mxu0
        %3144 = vmatprep.mubr.bf16.mxu0 0
        %3145 = vmatmul.mubr.bf16.gmra.mxu0 %v2495
        %v3146 = vpop.f32.mrf.mxu0
        %v3147 = vadd.f32 0.0, %v3146
        %v3148 = vpop.f32.mrf.mxu0
        %v3149 = vpop.f32.mrf.mxu0
        %v3150 = vadd.f32 0.0, %v3149
        %v3151 = vpop.f32.mrf.mxu0
        %3152 = vdwg.mxu0
        %v3153 = vadd.f32 %v1521, %v2643
        %v3154 = vadd.f32 %v1524, %v2646
        %v3155 = vadd.f32 %v1529, %v2651
        %v3156 = vadd.f32 %v1532, %v2654
        %v3157 = vadd.f32 %v1537, %v2659
        %v3158 = vadd.f32 %v1540, %v2662
        %v3159 = vadd.f32 %v1545, %v2667
        %v3160 = vadd.f32 %v1548, %v2670
        %v3161 = vadd.f32 %v1553, %v2675
        %v3162 = vadd.f32 %v1556, %v2678
        %v3163 = vadd.f32 %v1561, %v2683
        %v3164 = vadd.f32 %v1564, %v2686
        %v3165 = vadd.f32 %v1569, %v2691
        %v3166 = vadd.f32 %v1572, %v2694
        %v3167 = vadd.f32 %v1577, %v2699
        %v3168 = vadd.f32 %v1580, %v2702
        %v3169 = vadd.f32 %v1585, %v2707
        %v3170 = vadd.f32 %v1588, %v2710
        %v3171 = vadd.f32 %v1593, %v2715
        %v3172 = vadd.f32 %v1596, %v2718
        %v3173 = vadd.f32 %v1601, %v2723
        %v3174 = vadd.f32 %v1604, %v2726
        %v3175 = vadd.f32 %v1609, %v2731
        %v3176 = vadd.f32 %v1612, %v2734
        %v3177 = vadd.f32 %v1617, %v2739
        %v3178 = vadd.f32 %v1620, %v2742
        %v3179 = vadd.f32 %v1625, %v2747
        %v3180 = vadd.f32 %v1628, %v2750
        %v3181 = vadd.f32 %v1633, %v2755
        %v3182 = vadd.f32 %v1636, %v2758
        %v3183 = vadd.f32 %v1641, %v2763
        %v3184 = vadd.f32 %v1644, %v2766
        %v3185 = vadd.f32 %v1649, %v2771
        %v3186 = vadd.f32 %v1652, %v2774
        %v3187 = vadd.f32 %v1657, %v2779
        %v3188 = vadd.f32 %v1660, %v2782
        %v3189 = vadd.f32 %v1665, %v2787
        %v3190 = vadd.f32 %v1668, %v2790
        %v3191 = vadd.f32 %v1673, %v2795
        %v3192 = vadd.f32 %v1676, %v2798
        %v3193 = vadd.f32 %v1681, %v2803
        %v3194 = vadd.f32 %v1684, %v2806
        %v3195 = vadd.f32 %v1689, %v2811
        %v3196 = vadd.f32 %v1692, %v2814
        %v3197 = vadd.f32 %v1697, %v2819
        %v3198 = vadd.f32 %v1700, %v2822
        %v3199 = vadd.f32 %v1705, %v2827
        %v3200 = vadd.f32 %v1708, %v2830
        %v3201 = vadd.f32 %v1713, %v2835
        %v3202 = vadd.f32 %v1716, %v2838
        %v3203 = vadd.f32 %v1721, %v2843
        %v3204 = vadd.f32 %v1724, %v2846
        %v3205 = vadd.f32 %v1729, %v2851
        %v3206 = vadd.f32 %v1732, %v2854
        %v3207 = vadd.f32 %v1737, %v2859
        %v3208 = vadd.f32 %v1740, %v2862
        %v3209 = vadd.f32 %v1745, %v2867
        %v3210 = vadd.f32 %v1748, %v2870
        %v3211 = vadd.f32 %v1753, %v2875
        %v3212 = vadd.f32 %v1756, %v2878
        %v3213 = vadd.f32 %v1761, %v2883
        %v3214 = vadd.f32 %v1764, %v2886
        %v3215 = vadd.f32 %v1769, %v2891
        %v3216 = vadd.f32 %v1772, %v2894
        %v3217 = vadd.f32 %v1777, %v2899
        %v3218 = vadd.f32 %v1780, %v2902
        %v3219 = vadd.f32 %v1785, %v2907
        %v3220 = vadd.f32 %v1788, %v2910
        %v3221 = vadd.f32 %v1793, %v2915
        %v3222 = vadd.f32 %v1796, %v2918
        %v3223 = vadd.f32 %v1801, %v2923
        %v3224 = vadd.f32 %v1804, %v2926
        %v3225 = vadd.f32 %v1809, %v2931
        %v3226 = vadd.f32 %v1812, %v2934
        %v3227 = vadd.f32 %v1817, %v2939
        %v3228 = vadd.f32 %v1820, %v2942
        %v3229 = vadd.f32 %v1825, %v2947
        %v3230 = vadd.f32 %v1828, %v2950
        %v3231 = vadd.f32 %v1833, %v2955
        %v3232 = vadd.f32 %v1836, %v2958
        %v3233 = vadd.f32 %v1841, %v2963
        %v3234 = vadd.f32 %v1844, %v2966
        %v3235 = vadd.f32 %v1849, %v2971
        %v3236 = vadd.f32 %v1852, %v2974
        %v3237 = vadd.f32 %v1857, %v2979
        %v3238 = vadd.f32 %v1860, %v2982
        %v3239 = vadd.f32 %v1865, %v2987
        %v3240 = vadd.f32 %v1868, %v2990
        %v3241 = vadd.f32 %v1873, %v2995
        %v3242 = vadd.f32 %v1876, %v2998
        %v3243 = vadd.f32 %v1881, %v3003
        %v3244 = vadd.f32 %v1884, %v3006
        %v3245 = vadd.f32 %v1889, %v3011
        %v3246 = vadd.f32 %v1892, %v3014
        %v3247 = vadd.f32 %v1897, %v3019
        %v3248 = vadd.f32 %v1900, %v3022
        %v3249 = vadd.f32 %v1905, %v3027
        %v3250 = vadd.f32 %v1908, %v3030
        %v3251 = vadd.f32 %v1913, %v3035
        %v3252 = vadd.f32 %v1916, %v3038
        %v3253 = vadd.f32 %v1921, %v3043
        %v3254 = vadd.f32 %v1924, %v3046
        %v3255 = vadd.f32 %v1929, %v3051
        %v3256 = vadd.f32 %v1932, %v3054
        %v3257 = vadd.f32 %v1937, %v3059
        %v3258 = vadd.f32 %v1940, %v3062
        %v3259 = vadd.f32 %v1945, %v3067
        %v3260 = vadd.f32 %v1948, %v3070
        %v3261 = vadd.f32 %v1953, %v3075
        %v3262 = vadd.f32 %v1956, %v3078
        %v3263 = vadd.f32 %v1961, %v3083
        %v3264 = vadd.f32 %v1964, %v3086
        %v3265 = vadd.f32 %v1969, %v3091
        %v3266 = vadd.f32 %v1972, %v3094
        %v3267 = vadd.f32 %v1977, %v3099
        %v3268 = vadd.f32 %v1980, %v3102
        %v3269 = vadd.f32 %v1985, %v3107
        %v3270 = vadd.f32 %v1988, %v3110
        %v3271 = vadd.f32 %v1993, %v3115
        %v3272 = vadd.f32 %v1996, %v3118
        %v3273 = vadd.f32 %v2001, %v3123
        %v3274 = vadd.f32 %v2004, %v3126
        %v3275 = vadd.f32 %v2009, %v3131
        %v3276 = vadd.f32 %v2012, %v3134
        %v3277 = vadd.f32 %v2017, %v3139
        %v3278 = vadd.f32 %v2020, %v3142
        %v3279 = vadd.f32 %v2025, %v3147
        %v3280 = vadd.f32 %v2028, %v3150
        %v3281 = vld [vmem:[%s271] sm:$0x1]
        %v3283 = vlaneseq
        %v3284 = vshrl.u32 %v3283, 7
        %v3285 = vsub.s32 0, %v3284
        %v3286 = vrot.slane %v3281, %v3285
        %v3288 = vmul.f32 %v3153, %v3286
        %v3289 = vmul.f32 %v3154, %v3286
        %v3290 = vmul.f32 %v3155, %v3286
        %v3291 = vmul.f32 %v3156, %v3286
        %v3292 = vmul.f32 %v3157, %v3286
        %v3293 = vmul.f32 %v3158, %v3286
        %v3294 = vmul.f32 %v3159, %v3286
        %v3295 = vmul.f32 %v3160, %v3286
        %v3296 = vmul.f32 %v3161, %v3286
        %v3297 = vmul.f32 %v3162, %v3286
        %v3298 = vmul.f32 %v3163, %v3286
        %v3299 = vmul.f32 %v3164, %v3286
        %v3300 = vmul.f32 %v3165, %v3286
        %v3301 = vmul.f32 %v3166, %v3286
        %v3302 = vmul.f32 %v3167, %v3286
        %v3303 = vmul.f32 %v3168, %v3286
        %v3304 = vmul.f32 %v3169, %v3286
        %v3305 = vmul.f32 %v3170, %v3286
        %v3306 = vmul.f32 %v3171, %v3286
        %v3307 = vmul.f32 %v3172, %v3286
        %v3308 = vmul.f32 %v3173, %v3286
        %v3309 = vmul.f32 %v3174, %v3286
        %v3310 = vmul.f32 %v3175, %v3286
        %v3311 = vmul.f32 %v3176, %v3286
        %v3312 = vmul.f32 %v3177, %v3286
        %v3313 = vmul.f32 %v3178, %v3286
        %v3314 = vmul.f32 %v3179, %v3286
        %v3315 = vmul.f32 %v3180, %v3286
        %v3316 = vmul.f32 %v3181, %v3286
        %v3317 = vmul.f32 %v3182, %v3286
        %v3318 = vmul.f32 %v3183, %v3286
        %v3319 = vmul.f32 %v3184, %v3286
        %v3320 = vmul.f32 %v3185, %v3286
        %v3321 = vmul.f32 %v3186, %v3286
        %v3322 = vmul.f32 %v3187, %v3286
        %v3323 = vmul.f32 %v3188, %v3286
        %v3324 = vmul.f32 %v3189, %v3286
        %v3325 = vmul.f32 %v3190, %v3286
        %v3326 = vmul.f32 %v3191, %v3286
        %v3327 = vmul.f32 %v3192, %v3286
        %v3328 = vmul.f32 %v3193, %v3286
        %v3329 = vmul.f32 %v3194, %v3286
        %v3330 = vmul.f32 %v3195, %v3286
        %v3331 = vmul.f32 %v3196, %v3286
        %v3332 = vmul.f32 %v3197, %v3286
        %v3333 = vmul.f32 %v3198, %v3286
        %v3334 = vmul.f32 %v3199, %v3286
        %v3335 = vmul.f32 %v3200, %v3286
        %v3336 = vmul.f32 %v3201, %v3286
        %v3337 = vmul.f32 %v3202, %v3286
        %v3338 = vmul.f32 %v3203, %v3286
        %v3339 = vmul.f32 %v3204, %v3286
        %v3340 = vmul.f32 %v3205, %v3286
        %v3341 = vmul.f32 %v3206, %v3286
        %v3342 = vmul.f32 %v3207, %v3286
        %v3343 = vmul.f32 %v3208, %v3286
        %v3344 = vmul.f32 %v3209, %v3286
        %v3345 = vmul.f32 %v3210, %v3286
        %v3346 = vmul.f32 %v3211, %v3286
        %v3347 = vmul.f32 %v3212, %v3286
        %v3348 = vmul.f32 %v3213, %v3286
        %v3349 = vmul.f32 %v3214, %v3286
        %v3350 = vmul.f32 %v3215, %v3286
        %v3351 = vmul.f32 %v3216, %v3286
        %v3352 = vmul.f32 %v3217, %v3286
        %v3353 = vmul.f32 %v3218, %v3286
        %v3354 = vmul.f32 %v3219, %v3286
        %v3355 = vmul.f32 %v3220, %v3286
        %v3356 = vmul.f32 %v3221, %v3286
        %v3357 = vmul.f32 %v3222, %v3286
        %v3358 = vmul.f32 %v3223, %v3286
        %v3359 = vmul.f32 %v3224, %v3286
        %v3360 = vmul.f32 %v3225, %v3286
        %v3361 = vmul.f32 %v3226, %v3286
        %v3362 = vmul.f32 %v3227, %v3286
        %v3363 = vmul.f32 %v3228, %v3286
        %v3364 = vmul.f32 %v3229, %v3286
        %v3365 = vmul.f32 %v3230, %v3286
        %v3366 = vmul.f32 %v3231, %v3286
        %v3367 = vmul.f32 %v3232, %v3286
        %v3368 = vmul.f32 %v3233, %v3286
        %v3369 = vmul.f32 %v3234, %v3286
        %v3370 = vmul.f32 %v3235, %v3286
        %v3371 = vmul.f32 %v3236, %v3286
        %v3372 = vmul.f32 %v3237, %v3286
        %v3373 = vmul.f32 %v3238, %v3286
        %v3374 = vmul.f32 %v3239, %v3286
        %v3375 = vmul.f32 %v3240, %v3286
        %v3376 = vmul.f32 %v3241, %v3286
        %v3377 = vmul.f32 %v3242, %v3286
        %v3378 = vmul.f32 %v3243, %v3286
        %v3379 = vmul.f32 %v3244, %v3286
        %v3380 = vmul.f32 %v3245, %v3286
        %v3381 = vmul.f32 %v3246, %v3286
        %v3382 = vmul.f32 %v3247, %v3286
        %v3383 = vmul.f32 %v3248, %v3286
        %v3384 = vmul.f32 %v3249, %v3286
        %v3385 = vmul.f32 %v3250, %v3286
        %v3386 = vmul.f32 %v3251, %v3286
        %v3387 = vmul.f32 %v3252, %v3286
        %v3388 = vmul.f32 %v3253, %v3286
        %v3389 = vmul.f32 %v3254, %v3286
        %v3390 = vmul.f32 %v3255, %v3286
        %v3391 = vmul.f32 %v3256, %v3286
        %v3392 = vmul.f32 %v3257, %v3286
        %v3393 = vmul.f32 %v3258, %v3286
        %v3394 = vmul.f32 %v3259, %v3286
        %v3395 = vmul.f32 %v3260, %v3286
        %v3396 = vmul.f32 %v3261, %v3286
        %v3397 = vmul.f32 %v3262, %v3286
        %v3398 = vmul.f32 %v3263, %v3286
        %v3399 = vmul.f32 %v3264, %v3286
        %v3400 = vmul.f32 %v3265, %v3286
        %v3401 = vmul.f32 %v3266, %v3286
        %v3402 = vmul.f32 %v3267, %v3286
        %v3403 = vmul.f32 %v3268, %v3286
        %v3404 = vmul.f32 %v3269, %v3286
        %v3405 = vmul.f32 %v3270, %v3286
        %v3406 = vmul.f32 %v3271, %v3286
        %v3407 = vmul.f32 %v3272, %v3286
        %v3408 = vmul.f32 %v3273, %v3286
        %v3409 = vmul.f32 %v3274, %v3286
        %v3410 = vmul.f32 %v3275, %v3286
        %v3411 = vmul.f32 %v3276, %v3286
        %v3412 = vmul.f32 %v3277, %v3286
        %v3413 = vmul.f32 %v3278, %v3286
        %v3414 = vmul.f32 %v3279, %v3286
        %v3415 = vmul.f32 %v3280, %v3286
        %v3416 = vld [vmem:[%s274] sm:$0x1]
        %v3418 = vlaneseq
        %v3419 = vshrl.u32 %v3418, 7
        %v3420 = vsub.s32 0, %v3419
        %v3421 = vrot.slane %v3416, %v3420
        %v3423 = vadd.f32 %v3288, %v3421
        %v3424 = vadd.f32 %v3289, %v3421
        %v3425 = vadd.f32 %v3290, %v3421
        %v3426 = vadd.f32 %v3291, %v3421
        %v3427 = vadd.f32 %v3292, %v3421
        %v3428 = vadd.f32 %v3293, %v3421
        %v3429 = vadd.f32 %v3294, %v3421
        %v3430 = vadd.f32 %v3295, %v3421
        %v3431 = vadd.f32 %v3296, %v3421
        %v3432 = vadd.f32 %v3297, %v3421
        %v3433 = vadd.f32 %v3298, %v3421
        %v3434 = vadd.f32 %v3299, %v3421
        %v3435 = vadd.f32 %v3300, %v3421
        %v3436 = vadd.f32 %v3301, %v3421
        %v3437 = vadd.f32 %v3302, %v3421
        %v3438 = vadd.f32 %v3303, %v3421
        %v3439 = vadd.f32 %v3304, %v3421
        %v3440 = vadd.f32 %v3305, %v3421
        %v3441 = vadd.f32 %v3306, %v3421
        %v3442 = vadd.f32 %v3307, %v3421
        %v3443 = vadd.f32 %v3308, %v3421
        %v3444 = vadd.f32 %v3309, %v3421
        %v3445 = vadd.f32 %v3310, %v3421
        %v3446 = vadd.f32 %v3311, %v3421
        %v3447 = vadd.f32 %v3312, %v3421
        %v3448 = vadd.f32 %v3313, %v3421
        %v3449 = vadd.f32 %v3314, %v3421
        %v3450 = vadd.f32 %v3315, %v3421
        %v3451 = vadd.f32 %v3316, %v3421
        %v3452 = vadd.f32 %v3317, %v3421
        %v3453 = vadd.f32 %v3318, %v3421
        %v3454 = vadd.f32 %v3319, %v3421
        %v3455 = vadd.f32 %v3320, %v3421
        %v3456 = vadd.f32 %v3321, %v3421
        %v3457 = vadd.f32 %v3322, %v3421
        %v3458 = vadd.f32 %v3323, %v3421
        %v3459 = vadd.f32 %v3324, %v3421
        %v3460 = vadd.f32 %v3325, %v3421
        %v3461 = vadd.f32 %v3326, %v3421
        %v3462 = vadd.f32 %v3327, %v3421
        %v3463 = vadd.f32 %v3328, %v3421
        %v3464 = vadd.f32 %v3329, %v3421
        %v3465 = vadd.f32 %v3330, %v3421
        %v3466 = vadd.f32 %v3331, %v3421
        %v3467 = vadd.f32 %v3332, %v3421
        %v3468 = vadd.f32 %v3333, %v3421
        %v3469 = vadd.f32 %v3334, %v3421
        %v3470 = vadd.f32 %v3335, %v3421
        %v3471 = vadd.f32 %v3336, %v3421
        %v3472 = vadd.f32 %v3337, %v3421
        %v3473 = vadd.f32 %v3338, %v3421
        %v3474 = vadd.f32 %v3339, %v3421
        %v3475 = vadd.f32 %v3340, %v3421
        %v3476 = vadd.f32 %v3341, %v3421
        %v3477 = vadd.f32 %v3342, %v3421
        %v3478 = vadd.f32 %v3343, %v3421
        %v3479 = vadd.f32 %v3344, %v3421
        %v3480 = vadd.f32 %v3345, %v3421
        %v3481 = vadd.f32 %v3346, %v3421
        %v3482 = vadd.f32 %v3347, %v3421
        %v3483 = vadd.f32 %v3348, %v3421
        %v3484 = vadd.f32 %v3349, %v3421
        %v3485 = vadd.f32 %v3350, %v3421
        %v3486 = vadd.f32 %v3351, %v3421
        %v3487 = vadd.f32 %v3352, %v3421
        %v3488 = vadd.f32 %v3353, %v3421
        %v3489 = vadd.f32 %v3354, %v3421
        %v3490 = vadd.f32 %v3355, %v3421
        %v3491 = vadd.f32 %v3356, %v3421
        %v3492 = vadd.f32 %v3357, %v3421
        %v3493 = vadd.f32 %v3358, %v3421
        %v3494 = vadd.f32 %v3359, %v3421
        %v3495 = vadd.f32 %v3360, %v3421
        %v3496 = vadd.f32 %v3361, %v3421
        %v3497 = vadd.f32 %v3362, %v3421
        %v3498 = vadd.f32 %v3363, %v3421
        %v3499 = vadd.f32 %v3364, %v3421
        %v3500 = vadd.f32 %v3365, %v3421
        %v3501 = vadd.f32 %v3366, %v3421
        %v3502 = vadd.f32 %v3367, %v3421
        %v3503 = vadd.f32 %v3368, %v3421
        %v3504 = vadd.f32 %v3369, %v3421
        %v3505 = vadd.f32 %v3370, %v3421
        %v3506 = vadd.f32 %v3371, %v3421
        %v3507 = vadd.f32 %v3372, %v3421
        %v3508 = vadd.f32 %v3373, %v3421
        %v3509 = vadd.f32 %v3374, %v3421
        %v3510 = vadd.f32 %v3375, %v3421
        %v3511 = vadd.f32 %v3376, %v3421
        %v3512 = vadd.f32 %v3377, %v3421
        %v3513 = vadd.f32 %v3378, %v3421
        %v3514 = vadd.f32 %v3379, %v3421
        %v3515 = vadd.f32 %v3380, %v3421
        %v3516 = vadd.f32 %v3381, %v3421
        %v3517 = vadd.f32 %v3382, %v3421
        %v3518 = vadd.f32 %v3383, %v3421
        %v3519 = vadd.f32 %v3384, %v3421
        %v3520 = vadd.f32 %v3385, %v3421
        %v3521 = vadd.f32 %v3386, %v3421
        %v3522 = vadd.f32 %v3387, %v3421
        %v3523 = vadd.f32 %v3388, %v3421
        %v3524 = vadd.f32 %v3389, %v3421
        %v3525 = vadd.f32 %v3390, %v3421
        %v3526 = vadd.f32 %v3391, %v3421
        %v3527 = vadd.f32 %v3392, %v3421
        %v3528 = vadd.f32 %v3393, %v3421
        %v3529 = vadd.f32 %v3394, %v3421
        %v3530 = vadd.f32 %v3395, %v3421
        %v3531 = vadd.f32 %v3396, %v3421
        %v3532 = vadd.f32 %v3397, %v3421
        %v3533 = vadd.f32 %v3398, %v3421
        %v3534 = vadd.f32 %v3399, %v3421
        %v3535 = vadd.f32 %v3400, %v3421
        %v3536 = vadd.f32 %v3401, %v3421
        %v3537 = vadd.f32 %v3402, %v3421
        %v3538 = vadd.f32 %v3403, %v3421
        %v3539 = vadd.f32 %v3404, %v3421
        %v3540 = vadd.f32 %v3405, %v3421
        %v3541 = vadd.f32 %v3406, %v3421
        %v3542 = vadd.f32 %v3407, %v3421
        %v3543 = vadd.f32 %v3408, %v3421
        %v3544 = vadd.f32 %v3409, %v3421
        %v3545 = vadd.f32 %v3410, %v3421
        %v3546 = vadd.f32 %v3411, %v3421
        %v3547 = vadd.f32 %v3412, %v3421
        %v3548 = vadd.f32 %v3413, %v3421
        %v3549 = vadd.f32 %v3414, %v3421
        %v3550 = vadd.f32 %v3415, %v3421
        %v3551 = vmax.f32 %v3423, 0.0
        %v3552 = vmax.f32 %v3424, 0.0
        %v3553 = vmax.f32 %v3425, 0.0
        %v3554 = vmax.f32 %v3426, 0.0
        %v3555 = vmax.f32 %v3427, 0.0
        %v3556 = vmax.f32 %v3428, 0.0
        %v3557 = vmax.f32 %v3429, 0.0
        %v3558 = vmax.f32 %v3430, 0.0
        %v3559 = vmax.f32 %v3431, 0.0
        %v3560 = vmax.f32 %v3432, 0.0
        %v3561 = vmax.f32 %v3433, 0.0
        %v3562 = vmax.f32 %v3434, 0.0
        %v3563 = vmax.f32 %v3435, 0.0
        %v3564 = vmax.f32 %v3436, 0.0
        %v3565 = vmax.f32 %v3437, 0.0
        %v3566 = vmax.f32 %v3438, 0.0
        %v3567 = vmax.f32 %v3439, 0.0
        %v3568 = vmax.f32 %v3440, 0.0
        %v3569 = vmax.f32 %v3441, 0.0
        %v3570 = vmax.f32 %v3442, 0.0
        %v3571 = vmax.f32 %v3443, 0.0
        %v3572 = vmax.f32 %v3444, 0.0
        %v3573 = vmax.f32 %v3445, 0.0
        %v3574 = vmax.f32 %v3446, 0.0
        %v3575 = vmax.f32 %v3447, 0.0
        %v3576 = vmax.f32 %v3448, 0.0
        %v3577 = vmax.f32 %v3449, 0.0
        %v3578 = vmax.f32 %v3450, 0.0
        %v3579 = vmax.f32 %v3451, 0.0
        %v3580 = vmax.f32 %v3452, 0.0
        %v3581 = vmax.f32 %v3453, 0.0
        %v3582 = vmax.f32 %v3454, 0.0
        %v3583 = vmax.f32 %v3455, 0.0
        %v3584 = vmax.f32 %v3456, 0.0
        %v3585 = vmax.f32 %v3457, 0.0
        %v3586 = vmax.f32 %v3458, 0.0
        %v3587 = vmax.f32 %v3459, 0.0
        %v3588 = vmax.f32 %v3460, 0.0
        %v3589 = vmax.f32 %v3461, 0.0
        %v3590 = vmax.f32 %v3462, 0.0
        %v3591 = vmax.f32 %v3463, 0.0
        %v3592 = vmax.f32 %v3464, 0.0
        %v3593 = vmax.f32 %v3465, 0.0
        %v3594 = vmax.f32 %v3466, 0.0
        %v3595 = vmax.f32 %v3467, 0.0
        %v3596 = vmax.f32 %v3468, 0.0
        %v3597 = vmax.f32 %v3469, 0.0
        %v3598 = vmax.f32 %v3470, 0.0
        %v3599 = vmax.f32 %v3471, 0.0
        %v3600 = vmax.f32 %v3472, 0.0
        %v3601 = vmax.f32 %v3473, 0.0
        %v3602 = vmax.f32 %v3474, 0.0
        %v3603 = vmax.f32 %v3475, 0.0
        %v3604 = vmax.f32 %v3476, 0.0
        %v3605 = vmax.f32 %v3477, 0.0
        %v3606 = vmax.f32 %v3478, 0.0
        %v3607 = vmax.f32 %v3479, 0.0
        %v3608 = vmax.f32 %v3480, 0.0
        %v3609 = vmax.f32 %v3481, 0.0
        %v3610 = vmax.f32 %v3482, 0.0
        %v3611 = vmax.f32 %v3483, 0.0
        %v3612 = vmax.f32 %v3484, 0.0
        %v3613 = vmax.f32 %v3485, 0.0
        %v3614 = vmax.f32 %v3486, 0.0
        %v3615 = vmax.f32 %v3487, 0.0
        %v3616 = vmax.f32 %v3488, 0.0
        %v3617 = vmax.f32 %v3489, 0.0
        %v3618 = vmax.f32 %v3490, 0.0
        %v3619 = vmax.f32 %v3491, 0.0
        %v3620 = vmax.f32 %v3492, 0.0
        %v3621 = vmax.f32 %v3493, 0.0
        %v3622 = vmax.f32 %v3494, 0.0
        %v3623 = vmax.f32 %v3495, 0.0
        %v3624 = vmax.f32 %v3496, 0.0
        %v3625 = vmax.f32 %v3497, 0.0
        %v3626 = vmax.f32 %v3498, 0.0
        %v3627 = vmax.f32 %v3499, 0.0
        %v3628 = vmax.f32 %v3500, 0.0
        %v3629 = vmax.f32 %v3501, 0.0
        %v3630 = vmax.f32 %v3502, 0.0
        %v3631 = vmax.f32 %v3503, 0.0
        %v3632 = vmax.f32 %v3504, 0.0
        %v3633 = vmax.f32 %v3505, 0.0
        %v3634 = vmax.f32 %v3506, 0.0
        %v3635 = vmax.f32 %v3507, 0.0
        %v3636 = vmax.f32 %v3508, 0.0
        %v3637 = vmax.f32 %v3509, 0.0
        %v3638 = vmax.f32 %v3510, 0.0
        %v3639 = vmax.f32 %v3511, 0.0
        %v3640 = vmax.f32 %v3512, 0.0
        %v3641 = vmax.f32 %v3513, 0.0
        %v3642 = vmax.f32 %v3514, 0.0
        %v3643 = vmax.f32 %v3515, 0.0
        %v3644 = vmax.f32 %v3516, 0.0
        %v3645 = vmax.f32 %v3517, 0.0
        %v3646 = vmax.f32 %v3518, 0.0
        %v3647 = vmax.f32 %v3519, 0.0
        %v3648 = vmax.f32 %v3520, 0.0
        %v3649 = vmax.f32 %v3521, 0.0
        %v3650 = vmax.f32 %v3522, 0.0
        %v3651 = vmax.f32 %v3523, 0.0
        %v3652 = vmax.f32 %v3524, 0.0
        %v3653 = vmax.f32 %v3525, 0.0
        %v3654 = vmax.f32 %v3526, 0.0
        %v3655 = vmax.f32 %v3527, 0.0
        %v3656 = vmax.f32 %v3528, 0.0
        %v3657 = vmax.f32 %v3529, 0.0
        %v3658 = vmax.f32 %v3530, 0.0
        %v3659 = vmax.f32 %v3531, 0.0
        %v3660 = vmax.f32 %v3532, 0.0
        %v3661 = vmax.f32 %v3533, 0.0
        %v3662 = vmax.f32 %v3534, 0.0
        %v3663 = vmax.f32 %v3535, 0.0
        %v3664 = vmax.f32 %v3536, 0.0
        %v3665 = vmax.f32 %v3537, 0.0
        %v3666 = vmax.f32 %v3538, 0.0
        %v3667 = vmax.f32 %v3539, 0.0
        %v3668 = vmax.f32 %v3540, 0.0
        %v3669 = vmax.f32 %v3541, 0.0
        %v3670 = vmax.f32 %v3542, 0.0
        %v3671 = vmax.f32 %v3543, 0.0
        %v3672 = vmax.f32 %v3544, 0.0
        %v3673 = vmax.f32 %v3545, 0.0
        %v3674 = vmax.f32 %v3546, 0.0
        %v3675 = vmax.f32 %v3547, 0.0
        %v3676 = vmax.f32 %v3548, 0.0
        %v3677 = vmax.f32 %v3549, 0.0
        %v3678 = vmax.f32 %v3550, 0.0
        %v3679 = vpack.c.bf16 %v3552, %v3551
        %v3680 = vpack.c.bf16 %v3554, %v3553
        %v3681 = vpack.c.bf16 %v3556, %v3555
        %v3682 = vpack.c.bf16 %v3558, %v3557
        %v3683 = vpack.c.bf16 %v3560, %v3559
        %v3684 = vpack.c.bf16 %v3562, %v3561
        %v3685 = vpack.c.bf16 %v3564, %v3563
        %v3686 = vpack.c.bf16 %v3566, %v3565
        %v3687 = vpack.c.bf16 %v3568, %v3567
        %v3688 = vpack.c.bf16 %v3570, %v3569
        %v3689 = vpack.c.bf16 %v3572, %v3571
        %v3690 = vpack.c.bf16 %v3574, %v3573
        %v3691 = vpack.c.bf16 %v3576, %v3575
        %v3692 = vpack.c.bf16 %v3578, %v3577
        %v3693 = vpack.c.bf16 %v3580, %v3579
        %v3694 = vpack.c.bf16 %v3582, %v3581
        %v3695 = vpack.c.bf16 %v3584, %v3583
        %v3696 = vpack.c.bf16 %v3586, %v3585
        %v3697 = vpack.c.bf16 %v3588, %v3587
        %v3698 = vpack.c.bf16 %v3590, %v3589
        %v3699 = vpack.c.bf16 %v3592, %v3591
        %v3700 = vpack.c.bf16 %v3594, %v3593
        %v3701 = vpack.c.bf16 %v3596, %v3595
        %v3702 = vpack.c.bf16 %v3598, %v3597
        %v3703 = vpack.c.bf16 %v3600, %v3599
        %v3704 = vpack.c.bf16 %v3602, %v3601
        %v3705 = vpack.c.bf16 %v3604, %v3603
        %v3706 = vpack.c.bf16 %v3606, %v3605
        %v3707 = vpack.c.bf16 %v3608, %v3607
        %v3708 = vpack.c.bf16 %v3610, %v3609
        %v3709 = vpack.c.bf16 %v3612, %v3611
        %v3710 = vpack.c.bf16 %v3614, %v3613
        %v3711 = vpack.c.bf16 %v3616, %v3615
        %v3712 = vpack.c.bf16 %v3618, %v3617
        %v3713 = vpack.c.bf16 %v3620, %v3619
        %v3714 = vpack.c.bf16 %v3622, %v3621
        %v3715 = vpack.c.bf16 %v3624, %v3623
        %v3716 = vpack.c.bf16 %v3626, %v3625
        %v3717 = vpack.c.bf16 %v3628, %v3627
        %v3718 = vpack.c.bf16 %v3630, %v3629
        %v3719 = vpack.c.bf16 %v3632, %v3631
        %v3720 = vpack.c.bf16 %v3634, %v3633
        %v3721 = vpack.c.bf16 %v3636, %v3635
        %v3722 = vpack.c.bf16 %v3638, %v3637
        %v3723 = vpack.c.bf16 %v3640, %v3639
        %v3724 = vpack.c.bf16 %v3642, %v3641
        %v3725 = vpack.c.bf16 %v3644, %v3643
        %v3726 = vpack.c.bf16 %v3646, %v3645
        %v3727 = vpack.c.bf16 %v3648, %v3647
        %v3728 = vpack.c.bf16 %v3650, %v3649
        %v3729 = vpack.c.bf16 %v3652, %v3651
        %v3730 = vpack.c.bf16 %v3654, %v3653
        %v3731 = vpack.c.bf16 %v3656, %v3655
        %v3732 = vpack.c.bf16 %v3658, %v3657
        %v3733 = vpack.c.bf16 %v3660, %v3659
        %v3734 = vpack.c.bf16 %v3662, %v3661
        %v3735 = vpack.c.bf16 %v3664, %v3663
        %v3736 = vpack.c.bf16 %v3666, %v3665
        %v3737 = vpack.c.bf16 %v3668, %v3667
        %v3738 = vpack.c.bf16 %v3670, %v3669
        %v3739 = vpack.c.bf16 %v3672, %v3671
        %v3740 = vpack.c.bf16 %v3674, %v3673
        %v3741 = vpack.c.bf16 %v3676, %v3675
        %v3742 = vpack.c.bf16 %v3678, %v3677
        %v3807 = vunpack.c.l.b16 %v3679
        %v3808 = vunpack.c.h.b16 %v3679
        %v3809 = vunpack.c.l.b16 %v3680
        %v3810 = vunpack.c.h.b16 %v3680
        %v3811 = vunpack.c.l.b16 %v3681
        %v3812 = vunpack.c.h.b16 %v3681
        %v3813 = vunpack.c.l.b16 %v3682
        %v3814 = vunpack.c.h.b16 %v3682
        %v3815 = vunpack.c.l.b16 %v3683
        %v3816 = vunpack.c.h.b16 %v3683
        %v3817 = vunpack.c.l.b16 %v3684
        %v3818 = vunpack.c.h.b16 %v3684
        %v3819 = vunpack.c.l.b16 %v3685
        %v3820 = vunpack.c.h.b16 %v3685
        %v3821 = vunpack.c.l.b16 %v3686
        %v3822 = vunpack.c.h.b16 %v3686
        %v3823 = vunpack.c.l.b16 %v3687
        %v3824 = vunpack.c.h.b16 %v3687
        %v3825 = vunpack.c.l.b16 %v3688
        %v3826 = vunpack.c.h.b16 %v3688
        %v3827 = vunpack.c.l.b16 %v3689
        %v3828 = vunpack.c.h.b16 %v3689
        %v3829 = vunpack.c.l.b16 %v3690
        %v3830 = vunpack.c.h.b16 %v3690
        %v3831 = vunpack.c.l.b16 %v3691
        %v3832 = vunpack.c.h.b16 %v3691
        %v3833 = vunpack.c.l.b16 %v3692
        %v3834 = vunpack.c.h.b16 %v3692
        %v3835 = vunpack.c.l.b16 %v3693
        %v3836 = vunpack.c.h.b16 %v3693
        %v3837 = vunpack.c.l.b16 %v3694
        %v3838 = vunpack.c.h.b16 %v3694
        %v3839 = vunpack.c.l.b16 %v3695
        %v3840 = vunpack.c.h.b16 %v3695
        %v3841 = vunpack.c.l.b16 %v3696
        %v3842 = vunpack.c.h.b16 %v3696
        %v3843 = vunpack.c.l.b16 %v3697
        %v3844 = vunpack.c.h.b16 %v3697
        %v3845 = vunpack.c.l.b16 %v3698
        %v3846 = vunpack.c.h.b16 %v3698
        %v3847 = vunpack.c.l.b16 %v3699
        %v3848 = vunpack.c.h.b16 %v3699
        %v3849 = vunpack.c.l.b16 %v3700
        %v3850 = vunpack.c.h.b16 %v3700
        %v3851 = vunpack.c.l.b16 %v3701
        %v3852 = vunpack.c.h.b16 %v3701
        %v3853 = vunpack.c.l.b16 %v3702
        %v3854 = vunpack.c.h.b16 %v3702
        %v3855 = vunpack.c.l.b16 %v3703
        %v3856 = vunpack.c.h.b16 %v3703
        %v3857 = vunpack.c.l.b16 %v3704
        %v3858 = vunpack.c.h.b16 %v3704
        %v3859 = vunpack.c.l.b16 %v3705
        %v3860 = vunpack.c.h.b16 %v3705
        %v3861 = vunpack.c.l.b16 %v3706
        %v3862 = vunpack.c.h.b16 %v3706
        %v3863 = vunpack.c.l.b16 %v3707
        %v3864 = vunpack.c.h.b16 %v3707
        %v3865 = vunpack.c.l.b16 %v3708
        %v3866 = vunpack.c.h.b16 %v3708
        %v3867 = vunpack.c.l.b16 %v3709
        %v3868 = vunpack.c.h.b16 %v3709
        %v3869 = vunpack.c.l.b16 %v3710
        %v3870 = vunpack.c.h.b16 %v3710
        %v3871 = vunpack.c.l.b16 %v3711
        %v3872 = vunpack.c.h.b16 %v3711
        %v3873 = vunpack.c.l.b16 %v3712
        %v3874 = vunpack.c.h.b16 %v3712
        %v3875 = vunpack.c.l.b16 %v3713
        %v3876 = vunpack.c.h.b16 %v3713
        %v3877 = vunpack.c.l.b16 %v3714
        %v3878 = vunpack.c.h.b16 %v3714
        %v3879 = vunpack.c.l.b16 %v3715
        %v3880 = vunpack.c.h.b16 %v3715
        %v3881 = vunpack.c.l.b16 %v3716
        %v3882 = vunpack.c.h.b16 %v3716
        %v3883 = vunpack.c.l.b16 %v3717
        %v3884 = vunpack.c.h.b16 %v3717
        %v3885 = vunpack.c.l.b16 %v3718
        %v3886 = vunpack.c.h.b16 %v3718
        %v3887 = vunpack.c.l.b16 %v3719
        %v3888 = vunpack.c.h.b16 %v3719
        %v3889 = vunpack.c.l.b16 %v3720
        %v3890 = vunpack.c.h.b16 %v3720
        %v3891 = vunpack.c.l.b16 %v3721
        %v3892 = vunpack.c.h.b16 %v3721
        %v3893 = vunpack.c.l.b16 %v3722
        %v3894 = vunpack.c.h.b16 %v3722
        %v3895 = vunpack.c.l.b16 %v3723
        %v3896 = vunpack.c.h.b16 %v3723
        %v3897 = vunpack.c.l.b16 %v3724
        %v3898 = vunpack.c.h.b16 %v3724
        %v3899 = vunpack.c.l.b16 %v3725
        %v3900 = vunpack.c.h.b16 %v3725
        %v3901 = vunpack.c.l.b16 %v3726
        %v3902 = vunpack.c.h.b16 %v3726
        %v3903 = vunpack.c.l.b16 %v3727
        %v3904 = vunpack.c.h.b16 %v3727
        %v3905 = vunpack.c.l.b16 %v3728
        %v3906 = vunpack.c.h.b16 %v3728
        %v3907 = vunpack.c.l.b16 %v3729
        %v3908 = vunpack.c.h.b16 %v3729
        %v3909 = vunpack.c.l.b16 %v3730
        %v3910 = vunpack.c.h.b16 %v3730
        %v3911 = vunpack.c.l.b16 %v3731
        %v3912 = vunpack.c.h.b16 %v3731
        %v3913 = vunpack.c.l.b16 %v3732
        %v3914 = vunpack.c.h.b16 %v3732
        %v3915 = vunpack.c.l.b16 %v3733
        %v3916 = vunpack.c.h.b16 %v3733
        %v3917 = vunpack.c.l.b16 %v3734
        %v3918 = vunpack.c.h.b16 %v3734
        %v3919 = vunpack.c.l.b16 %v3735
        %v3920 = vunpack.c.h.b16 %v3735
        %v3921 = vunpack.c.l.b16 %v3736
        %v3922 = vunpack.c.h.b16 %v3736
        %v3923 = vunpack.c.l.b16 %v3737
        %v3924 = vunpack.c.h.b16 %v3737
        %v3925 = vunpack.c.l.b16 %v3738
        %v3926 = vunpack.c.h.b16 %v3738
        %v3927 = vunpack.c.l.b16 %v3739
        %v3928 = vunpack.c.h.b16 %v3739
        %v3929 = vunpack.c.l.b16 %v3740
        %v3930 = vunpack.c.h.b16 %v3740
        %v3931 = vunpack.c.l.b16 %v3741
        %v3932 = vunpack.c.h.b16 %v3741
        %v3933 = vunpack.c.l.b16 %v3742
        %v3934 = vunpack.c.h.b16 %v3742
        %v3935 = vpack.c.b16 %v3807, %v3807
        %v3936 = vpack.c.b16 %v3808, %v3808
        %v3937 = vpack.c.b16 %v3809, %v3809
        %v3938 = vpack.c.b16 %v3810, %v3810
        %v3939 = vpack.c.b16 %v3811, %v3811
        %v3940 = vpack.c.b16 %v3812, %v3812
        %v3941 = vpack.c.b16 %v3813, %v3813
        %v3942 = vpack.c.b16 %v3814, %v3814
        %v3943 = vpack.c.b16 %v3815, %v3815
        %v3944 = vpack.c.b16 %v3816, %v3816
        %v3945 = vpack.c.b16 %v3817, %v3817
        %v3946 = vpack.c.b16 %v3818, %v3818
        %v3947 = vpack.c.b16 %v3819, %v3819
        %v3948 = vpack.c.b16 %v3820, %v3820
        %v3949 = vpack.c.b16 %v3821, %v3821
        %v3950 = vpack.c.b16 %v3822, %v3822
        %v3951 = vpack.c.b16 %v3823, %v3823
        %v3952 = vpack.c.b16 %v3824, %v3824
        %v3953 = vpack.c.b16 %v3825, %v3825
        %v3954 = vpack.c.b16 %v3826, %v3826
        %v3955 = vpack.c.b16 %v3827, %v3827
        %v3956 = vpack.c.b16 %v3828, %v3828
        %v3957 = vpack.c.b16 %v3829, %v3829
        %v3958 = vpack.c.b16 %v3830, %v3830
        %v3959 = vpack.c.b16 %v3831, %v3831
        %v3960 = vpack.c.b16 %v3832, %v3832
        %v3961 = vpack.c.b16 %v3833, %v3833
        %v3962 = vpack.c.b16 %v3834, %v3834
        %v3963 = vpack.c.b16 %v3835, %v3835
        %v3964 = vpack.c.b16 %v3836, %v3836
        %v3965 = vpack.c.b16 %v3837, %v3837
        %v3966 = vpack.c.b16 %v3838, %v3838
        %v3967 = vpack.c.b16 %v3839, %v3839
        %v3968 = vpack.c.b16 %v3840, %v3840
        %v3969 = vpack.c.b16 %v3841, %v3841
        %v3970 = vpack.c.b16 %v3842, %v3842
        %v3971 = vpack.c.b16 %v3843, %v3843
        %v3972 = vpack.c.b16 %v3844, %v3844
        %v3973 = vpack.c.b16 %v3845, %v3845
        %v3974 = vpack.c.b16 %v3846, %v3846
        %v3975 = vpack.c.b16 %v3847, %v3847
        %v3976 = vpack.c.b16 %v3848, %v3848
        %v3977 = vpack.c.b16 %v3849, %v3849
        %v3978 = vpack.c.b16 %v3850, %v3850
        %v3979 = vpack.c.b16 %v3851, %v3851
        %v3980 = vpack.c.b16 %v3852, %v3852
        %v3981 = vpack.c.b16 %v3853, %v3853
        %v3982 = vpack.c.b16 %v3854, %v3854
        %v3983 = vpack.c.b16 %v3855, %v3855
        %v3984 = vpack.c.b16 %v3856, %v3856
        %v3985 = vpack.c.b16 %v3857, %v3857
        %v3986 = vpack.c.b16 %v3858, %v3858
        %v3987 = vpack.c.b16 %v3859, %v3859
        %v3988 = vpack.c.b16 %v3860, %v3860
        %v3989 = vpack.c.b16 %v3861, %v3861
        %v3990 = vpack.c.b16 %v3862, %v3862
        %v3991 = vpack.c.b16 %v3863, %v3863
        %v3992 = vpack.c.b16 %v3864, %v3864
        %v3993 = vpack.c.b16 %v3865, %v3865
        %v3994 = vpack.c.b16 %v3866, %v3866
        %v3995 = vpack.c.b16 %v3867, %v3867
        %v3996 = vpack.c.b16 %v3868, %v3868
        %v3997 = vpack.c.b16 %v3869, %v3869
        %v3998 = vpack.c.b16 %v3870, %v3870
        %v3999 = vpack.c.b16 %v3871, %v3871
        %v4000 = vpack.c.b16 %v3872, %v3872
        %v4001 = vpack.c.b16 %v3873, %v3873
        %v4002 = vpack.c.b16 %v3874, %v3874
        %v4003 = vpack.c.b16 %v3875, %v3875
        %v4004 = vpack.c.b16 %v3876, %v3876
        %v4005 = vpack.c.b16 %v3877, %v3877
        %v4006 = vpack.c.b16 %v3878, %v3878
        %v4007 = vpack.c.b16 %v3879, %v3879
        %v4008 = vpack.c.b16 %v3880, %v3880
        %v4009 = vpack.c.b16 %v3881, %v3881
        %v4010 = vpack.c.b16 %v3882, %v3882
        %v4011 = vpack.c.b16 %v3883, %v3883
        %v4012 = vpack.c.b16 %v3884, %v3884
        %v4013 = vpack.c.b16 %v3885, %v3885
        %v4014 = vpack.c.b16 %v3886, %v3886
        %v4015 = vpack.c.b16 %v3887, %v3887
        %v4016 = vpack.c.b16 %v3888, %v3888
        %v4017 = vpack.c.b16 %v3889, %v3889
        %v4018 = vpack.c.b16 %v3890, %v3890
        %v4019 = vpack.c.b16 %v3891, %v3891
        %v4020 = vpack.c.b16 %v3892, %v3892
        %v4021 = vpack.c.b16 %v3893, %v3893
        %v4022 = vpack.c.b16 %v3894, %v3894
        %v4023 = vpack.c.b16 %v3895, %v3895
        %v4024 = vpack.c.b16 %v3896, %v3896
        %v4025 = vpack.c.b16 %v3897, %v3897
        %v4026 = vpack.c.b16 %v3898, %v3898
        %v4027 = vpack.c.b16 %v3899, %v3899
        %v4028 = vpack.c.b16 %v3900, %v3900
        %v4029 = vpack.c.b16 %v3901, %v3901
        %v4030 = vpack.c.b16 %v3902, %v3902
        %v4031 = vpack.c.b16 %v3903, %v3903
        %v4032 = vpack.c.b16 %v3904, %v3904
        %v4033 = vpack.c.b16 %v3905, %v3905
        %v4034 = vpack.c.b16 %v3906, %v3906
        %v4035 = vpack.c.b16 %v3907, %v3907
        %v4036 = vpack.c.b16 %v3908, %v3908
        %v4037 = vpack.c.b16 %v3909, %v3909
        %v4038 = vpack.c.b16 %v3910, %v3910
        %v4039 = vpack.c.b16 %v3911, %v3911
        %v4040 = vpack.c.b16 %v3912, %v3912
        %v4041 = vpack.c.b16 %v3913, %v3913
        %v4042 = vpack.c.b16 %v3914, %v3914
        %v4043 = vpack.c.b16 %v3915, %v3915
        %v4044 = vpack.c.b16 %v3916, %v3916
        %v4045 = vpack.c.b16 %v3917, %v3917
        %v4046 = vpack.c.b16 %v3918, %v3918
        %v4047 = vpack.c.b16 %v3919, %v3919
        %v4048 = vpack.c.b16 %v3920, %v3920
        %v4049 = vpack.c.b16 %v3921, %v3921
        %v4050 = vpack.c.b16 %v3922, %v3922
        %v4051 = vpack.c.b16 %v3923, %v3923
        %v4052 = vpack.c.b16 %v3924, %v3924
        %v4053 = vpack.c.b16 %v3925, %v3925
        %v4054 = vpack.c.b16 %v3926, %v3926
        %v4055 = vpack.c.b16 %v3927, %v3927
        %v4056 = vpack.c.b16 %v3928, %v3928
        %v4057 = vpack.c.b16 %v3929, %v3929
        %v4058 = vpack.c.b16 %v3930, %v3930
        %v4059 = vpack.c.b16 %v3931, %v3931
        %v4060 = vpack.c.b16 %v3932, %v3932
        %v4061 = vpack.c.b16 %v3933, %v3933
        %v4062 = vpack.c.b16 %v3934, %v3934
        %vm4191 = vcmask 519168
        %4192 = vst.msk [vmem:[%s282] sm:$0xf] %vm4191, %v3935
        %4193 = vst.msk [vmem:[%s282 + $0x4] sm:$0xf] %vm4191, %v3936
        %4194 = vst.msk [vmem:[%s282 + $0x8] sm:$0xf] %vm4191, %v3937
        %4195 = vst.msk [vmem:[%s282 + $0xc] sm:$0xf] %vm4191, %v3938
        %4196 = vst.msk [vmem:[%s282 + $0x10] sm:$0xf] %vm4191, %v3939
        %4197 = vst.msk [vmem:[%s282 + $0x14] sm:$0xf] %vm4191, %v3940
        %4198 = vst.msk [vmem:[%s282 + $0x18] sm:$0xf] %vm4191, %v3941
        %4199 = vst.msk [vmem:[%s282 + $0x1c] sm:$0xf] %vm4191, %v3942
        %4200 = vst.msk [vmem:[%s282 + $0x20] sm:$0xf] %vm4191, %v3943
        %4201 = vst.msk [vmem:[%s282 + $0x24] sm:$0xf] %vm4191, %v3944
        %4202 = vst.msk [vmem:[%s282 + $0x28] sm:$0xf] %vm4191, %v3945
        %4203 = vst.msk [vmem:[%s282 + $0x2c] sm:$0xf] %vm4191, %v3946
        %4204 = vst.msk [vmem:[%s282 + $0x30] sm:$0xf] %vm4191, %v3947
        %4205 = vst.msk [vmem:[%s282 + $0x34] sm:$0xf] %vm4191, %v3948
        %4206 = vst.msk [vmem:[%s282 + $0x38] sm:$0xf] %vm4191, %v3949
        %4207 = vst.msk [vmem:[%s282 + $0x3c] sm:$0xf] %vm4191, %v3950
        %4208 = vst.msk [vmem:[%s282 + $0x40] sm:$0xf] %vm4191, %v3951
        %4209 = vst.msk [vmem:[%s282 + $0x44] sm:$0xf] %vm4191, %v3952
        %4210 = vst.msk [vmem:[%s282 + $0x48] sm:$0xf] %vm4191, %v3953
        %4211 = vst.msk [vmem:[%s282 + $0x4c] sm:$0xf] %vm4191, %v3954
        %4212 = vst.msk [vmem:[%s282 + $0x50] sm:$0xf] %vm4191, %v3955
        %4213 = vst.msk [vmem:[%s282 + $0x54] sm:$0xf] %vm4191, %v3956
        %4214 = vst.msk [vmem:[%s282 + $0x58] sm:$0xf] %vm4191, %v3957
        %4215 = vst.msk [vmem:[%s282 + $0x5c] sm:$0xf] %vm4191, %v3958
        %4216 = vst.msk [vmem:[%s282 + $0x60] sm:$0xf] %vm4191, %v3959
        %4217 = vst.msk [vmem:[%s282 + $0x64] sm:$0xf] %vm4191, %v3960
        %4218 = vst.msk [vmem:[%s282 + $0x68] sm:$0xf] %vm4191, %v3961
        %4219 = vst.msk [vmem:[%s282 + $0x6c] sm:$0xf] %vm4191, %v3962
        %4220 = vst.msk [vmem:[%s282 + $0x70] sm:$0xf] %vm4191, %v3963
        %4221 = vst.msk [vmem:[%s282 + $0x74] sm:$0xf] %vm4191, %v3964
        %4222 = vst.msk [vmem:[%s282 + $0x78] sm:$0xf] %vm4191, %v3965
        %4223 = vst.msk [vmem:[%s282 + $0x7c] sm:$0xf] %vm4191, %v3966
        %4224 = vst.msk [vmem:[%s282 + $0x80] sm:$0xf] %vm4191, %v3967
        %4225 = vst.msk [vmem:[%s282 + $0x84] sm:$0xf] %vm4191, %v3968
        %4226 = vst.msk [vmem:[%s282 + $0x88] sm:$0xf] %vm4191, %v3969
        %4227 = vst.msk [vmem:[%s282 + $0x8c] sm:$0xf] %vm4191, %v3970
        %4228 = vst.msk [vmem:[%s282 + $0x90] sm:$0xf] %vm4191, %v3971
        %4229 = vst.msk [vmem:[%s282 + $0x94] sm:$0xf] %vm4191, %v3972
        %4230 = vst.msk [vmem:[%s282 + $0x98] sm:$0xf] %vm4191, %v3973
        %4231 = vst.msk [vmem:[%s282 + $0x9c] sm:$0xf] %vm4191, %v3974
        %4232 = vst.msk [vmem:[%s282 + $0xa0] sm:$0xf] %vm4191, %v3975
        %4233 = vst.msk [vmem:[%s282 + $0xa4] sm:$0xf] %vm4191, %v3976
        %4234 = vst.msk [vmem:[%s282 + $0xa8] sm:$0xf] %vm4191, %v3977
        %4235 = vst.msk [vmem:[%s282 + $0xac] sm:$0xf] %vm4191, %v3978
        %4236 = vst.msk [vmem:[%s282 + $0xb0] sm:$0xf] %vm4191, %v3979
        %4237 = vst.msk [vmem:[%s282 + $0xb4] sm:$0xf] %vm4191, %v3980
        %4238 = vst.msk [vmem:[%s282 + $0xb8] sm:$0xf] %vm4191, %v3981
        %4239 = vst.msk [vmem:[%s282 + $0xbc] sm:$0xf] %vm4191, %v3982
        %4240 = vst.msk [vmem:[%s282 + $0xc0] sm:$0xf] %vm4191, %v3983
        %4241 = vst.msk [vmem:[%s282 + $0xc4] sm:$0xf] %vm4191, %v3984
        %4242 = vst.msk [vmem:[%s282 + $0xc8] sm:$0xf] %vm4191, %v3985
        %4243 = vst.msk [vmem:[%s282 + $0xcc] sm:$0xf] %vm4191, %v3986
        %4244 = vst.msk [vmem:[%s282 + $0xd0] sm:$0xf] %vm4191, %v3987
        %4245 = vst.msk [vmem:[%s282 + $0xd4] sm:$0xf] %vm4191, %v3988
        %4246 = vst.msk [vmem:[%s282 + $0xd8] sm:$0xf] %vm4191, %v3989
        %4247 = vst.msk [vmem:[%s282 + $0xdc] sm:$0xf] %vm4191, %v3990
        %4248 = vst.msk [vmem:[%s282 + $0xe0] sm:$0xf] %vm4191, %v3991
        %4249 = vst.msk [vmem:[%s282 + $0xe4] sm:$0xf] %vm4191, %v3992
        %4250 = vst.msk [vmem:[%s282 + $0xe8] sm:$0xf] %vm4191, %v3993
        %4251 = vst.msk [vmem:[%s282 + $0xec] sm:$0xf] %vm4191, %v3994
        %4252 = vst.msk [vmem:[%s282 + $0xf0] sm:$0xf] %vm4191, %v3995
        %4253 = vst.msk [vmem:[%s282 + $0xf4] sm:$0xf] %vm4191, %v3996
        %4254 = vst.msk [vmem:[%s282 + $0xf8] sm:$0xf] %vm4191, %v3997
        %4255 = vst.msk [vmem:[%s282 + $0xfc] sm:$0xf] %vm4191, %v3998
        %4256 = vst.msk [vmem:[%s282 + $0x100] sm:$0xf] %vm4191, %v3999
        %4257 = vst.msk [vmem:[%s282 + $0x104] sm:$0xf] %vm4191, %v4000
        %4258 = vst.msk [vmem:[%s282 + $0x108] sm:$0xf] %vm4191, %v4001
        %4259 = vst.msk [vmem:[%s282 + $0x10c] sm:$0xf] %vm4191, %v4002
        %4260 = vst.msk [vmem:[%s282 + $0x110] sm:$0xf] %vm4191, %v4003
        %4261 = vst.msk [vmem:[%s282 + $0x114] sm:$0xf] %vm4191, %v4004
        %4262 = vst.msk [vmem:[%s282 + $0x118] sm:$0xf] %vm4191, %v4005
        %4263 = vst.msk [vmem:[%s282 + $0x11c] sm:$0xf] %vm4191, %v4006
        %4264 = vst.msk [vmem:[%s282 + $0x120] sm:$0xf] %vm4191, %v4007
        %4265 = vst.msk [vmem:[%s282 + $0x124] sm:$0xf] %vm4191, %v4008
        %4266 = vst.msk [vmem:[%s282 + $0x128] sm:$0xf] %vm4191, %v4009
        %4267 = vst.msk [vmem:[%s282 + $0x12c] sm:$0xf] %vm4191, %v4010
        %4268 = vst.msk [vmem:[%s282 + $0x130] sm:$0xf] %vm4191, %v4011
        %4269 = vst.msk [vmem:[%s282 + $0x134] sm:$0xf] %vm4191, %v4012
        %4270 = vst.msk [vmem:[%s282 + $0x138] sm:$0xf] %vm4191, %v4013
        %4271 = vst.msk [vmem:[%s282 + $0x13c] sm:$0xf] %vm4191, %v4014
        %4272 = vst.msk [vmem:[%s282 + $0x140] sm:$0xf] %vm4191, %v4015
        %4273 = vst.msk [vmem:[%s282 + $0x144] sm:$0xf] %vm4191, %v4016
        %4274 = vst.msk [vmem:[%s282 + $0x148] sm:$0xf] %vm4191, %v4017
        %4275 = vst.msk [vmem:[%s282 + $0x14c] sm:$0xf] %vm4191, %v4018
        %4276 = vst.msk [vmem:[%s282 + $0x150] sm:$0xf] %vm4191, %v4019
        %4277 = vst.msk [vmem:[%s282 + $0x154] sm:$0xf] %vm4191, %v4020
        %4278 = vst.msk [vmem:[%s282 + $0x158] sm:$0xf] %vm4191, %v4021
        %4279 = vst.msk [vmem:[%s282 + $0x15c] sm:$0xf] %vm4191, %v4022
        %4280 = vst.msk [vmem:[%s282 + $0x160] sm:$0xf] %vm4191, %v4023
        %4281 = vst.msk [vmem:[%s282 + $0x164] sm:$0xf] %vm4191, %v4024
        %4282 = vst.msk [vmem:[%s282 + $0x168] sm:$0xf] %vm4191, %v4025
        %4283 = vst.msk [vmem:[%s282 + $0x16c] sm:$0xf] %vm4191, %v4026
        %4284 = vst.msk [vmem:[%s282 + $0x170] sm:$0xf] %vm4191, %v4027
        %4285 = vst.msk [vmem:[%s282 + $0x174] sm:$0xf] %vm4191, %v4028
        %4286 = vst.msk [vmem:[%s282 + $0x178] sm:$0xf] %vm4191, %v4029
        %4287 = vst.msk [vmem:[%s282 + $0x17c] sm:$0xf] %vm4191, %v4030
        %4288 = vst.msk [vmem:[%s282 + $0x180] sm:$0xf] %vm4191, %v4031
        %4289 = vst.msk [vmem:[%s282 + $0x184] sm:$0xf] %vm4191, %v4032
        %4290 = vst.msk [vmem:[%s282 + $0x188] sm:$0xf] %vm4191, %v4033
        %4291 = vst.msk [vmem:[%s282 + $0x18c] sm:$0xf] %vm4191, %v4034
        %4292 = vst.msk [vmem:[%s282 + $0x190] sm:$0xf] %vm4191, %v4035
        %4293 = vst.msk [vmem:[%s282 + $0x194] sm:$0xf] %vm4191, %v4036
        %4294 = vst.msk [vmem:[%s282 + $0x198] sm:$0xf] %vm4191, %v4037
        %4295 = vst.msk [vmem:[%s282 + $0x19c] sm:$0xf] %vm4191, %v4038
        %4296 = vst.msk [vmem:[%s282 + $0x1a0] sm:$0xf] %vm4191, %v4039
        %4297 = vst.msk [vmem:[%s282 + $0x1a4] sm:$0xf] %vm4191, %v4040
        %4298 = vst.msk [vmem:[%s282 + $0x1a8] sm:$0xf] %vm4191, %v4041
        %4299 = vst.msk [vmem:[%s282 + $0x1ac] sm:$0xf] %vm4191, %v4042
        %4300 = vst.msk [vmem:[%s282 + $0x1b0] sm:$0xf] %vm4191, %v4043
        %4301 = vst.msk [vmem:[%s282 + $0x1b4] sm:$0xf] %vm4191, %v4044
        %4302 = vst.msk [vmem:[%s282 + $0x1b8] sm:$0xf] %vm4191, %v4045
        %4303 = vst.msk [vmem:[%s282 + $0x1bc] sm:$0xf] %vm4191, %v4046
        %4304 = vst.msk [vmem:[%s282 + $0x1c0] sm:$0xf] %vm4191, %v4047
        %4305 = vst.msk [vmem:[%s282 + $0x1c4] sm:$0xf] %vm4191, %v4048
        %4306 = vst.msk [vmem:[%s282 + $0x1c8] sm:$0xf] %vm4191, %v4049
        %4307 = vst.msk [vmem:[%s282 + $0x1cc] sm:$0xf] %vm4191, %v4050
        %4308 = vst.msk [vmem:[%s282 + $0x1d0] sm:$0xf] %vm4191, %v4051
        %4309 = vst.msk [vmem:[%s282 + $0x1d4] sm:$0xf] %vm4191, %v4052
        %4310 = vst.msk [vmem:[%s282 + $0x1d8] sm:$0xf] %vm4191, %v4053
        %4311 = vst.msk [vmem:[%s282 + $0x1dc] sm:$0xf] %vm4191, %v4054
        %4312 = vst.msk [vmem:[%s282 + $0x1e0] sm:$0xf] %vm4191, %v4055
        %4313 = vst.msk [vmem:[%s282 + $0x1e4] sm:$0xf] %vm4191, %v4056
        %4314 = vst.msk [vmem:[%s282 + $0x1e8] sm:$0xf] %vm4191, %v4057
        %4315 = vst.msk [vmem:[%s282 + $0x1ec] sm:$0xf] %vm4191, %v4058
        %4316 = vst.msk [vmem:[%s282 + $0x1f0] sm:$0xf] %vm4191, %v4059
        %4317 = vst.msk [vmem:[%s282 + $0x1f4] sm:$0xf] %vm4191, %v4060
        %4318 = vst.msk [vmem:[%s282 + $0x1f8] sm:$0xf] %vm4191, %v4061
        %4319 = vst.msk [vmem:[%s282 + $0x1fc] sm:$0xf] %vm4191, %v4062
        %p4320 = scmp.lt.s32.totalorder %s22, 1
        %s4321 = scalar_select %p4320, %s22, 1
        %p4322 = scmp.lt.s32.totalorder %s23, 0
        %s4323 = scalar_select %p4322, %s23, 0
        %s4324 = smul.addr %s4321, 128
        %s4325 = sadd.s32 %s4323, %s4324
        %s4326 = smul.addr %s4325, 4
        %s4327 = scalar_lea.vmem %s4, %s4326
        // Predicated region
        $region41: #{tpu_custom_call.1} parent=35 // pred_check
          %p4328 = pneg %p154
        $region42: #{tpu_custom_call.1} parent=35 // pred_check_branch
          %4330 = sbr.rel (%p4328) target = $region44
        $region43: #{tpu_custom_call.1} parent=35 // pred_region
          _
        $region44: #{tpu_custom_call.1} parent=35 // pred_fallthru
          _
      $region36: #{tpu_custom_call.1} parent=5 // pred_fallthru
        _
      %p4331 = scmp.le.s32.totalorder 2, %s13
      // Predicated region
      $region45: #{tpu_custom_call.1} parent=5 // pred_check
        %p4332 = pneg %p4331
      $region46: #{tpu_custom_call.1} parent=5 // pred_check_branch
        %4334 = sbr.rel (%p4332) target = $region48
      $region47: #{tpu_custom_call.1} parent=5 // pred_region
        %s4335 = ssub.s32 %s13, 2
        // Predicated region
        $region49: #{tpu_custom_call.1} parent=47 // pred_check
          %p4336 = pneg %p160
        $region50: #{tpu_custom_call.1} parent=47 // pred_check_branch
          %4338 = sbr.rel (%p4336) target = $region52
        $region51: #{tpu_custom_call.1} parent=47 // pred_region
          %p4339 = scmp.lt.s32.totalorder %s24, 1
          %s4340 = scalar_select %p4339, %s24, 1
          %p4341 = scmp.lt.s32.totalorder %s25, 0
          %s4342 = scalar_select %p4341, %s25, 0
          %s4343 = smul.addr %s4340, 128
          %s4344 = sadd.s32 %s4342, %s4343
          %s4345 = smul.addr %s4344, 4
          %s4346 = scalar_lea.vmem %s4, %s4345
        $region52: #{tpu_custom_call.1} parent=47 // pred_fallthru
          _
      $region48: #{tpu_custom_call.1} parent=5 // pred_fallthru
        _
    $region6: #{tpu_custom_call.1} parent=1 // loop_footer
      %s17 = sadd.s32 1, %s13
    $region7: #{tpu_custom_call.1} parent=1 // loop_footer_branch
      %12 = sbr.rel target = $region3
    $region8: #{tpu_custom_call.1} parent=1 // loop_exit
      _
    %4347 = vsyncpa [#allocation3], 1
    %s4348 = scalar_lea.sflag [#allocation3], 1
    %4349 = vsyncpa %s4348, 1

</llo_original>
